<compile_context>
chip_gen: v6e
topology: v6e:2x2x1
jax: 0.10.0
libtpu: 0.0.40
codegen_flags: <defaults>
</compile_context>

<pallas_src>
import jax
import jax.numpy as jnp
from jax.experimental import pallas as pl
from jax.experimental.pallas import tpu as pltpu

# ----- small RoBERTa-like config (stand-in for D_in=768, 12 layers, 12 heads) -----
B, S = 2, 8              # batch, sequence length
H, NH, HD = 128, 4, 32   # hidden (lane-dense: multiple of 128), num heads, head dim
FF = 512                 # intermediate (4 * H)
NLAYERS = 2
VOCAB = 100
MAX_POS = S + 2          # RoBERTa positions start at padding_idx+1 = 2
EPS = 1e-5


# ----------------------------- in-kernel math helpers -----------------------------
def _layer_norm(x, g, b):
    mu = jnp.mean(x, axis=-1, keepdims=True)
    var = jnp.mean((x - mu) ** 2, axis=-1, keepdims=True)
    return (x - mu) * jax.lax.rsqrt(var + EPS) * g + b


def _gelu_tanh(x):
    c = jnp.float32(0.7978845608028654)  # sqrt(2/pi)
    return 0.5 * x * (1.0 + jnp.tanh(c * (x + 0.044715 * x * x * x)))


# --------------------------------- fused Pallas kernel ----------------------------------
def fused_forward_kernel(emb_ref, mask_ref,
                         eg_ref, eb_ref,
                         wqkv_ref, bqkv_ref,
                         wo_ref, bo_ref, g1_ref, b1_ref,
                         wi_ref, bi_ref, w2_ref, b2_ref, g2_ref, b2n_ref,
                         wp_ref, bp_ref, wr_ref, br_ref,
                         out_ref):
    """Full forward for ONE batch element (grid over batch, 'parallel' => megacore on v7x)."""
    # Embeddings LayerNorm
    x = _layer_norm(emb_ref[...], eg_ref[...], eb_ref[...])            # (S, H) f32

    # Additive attention mask (broadcast over heads and query positions)
    amask = mask_ref[...]                                              # (1, S) f32 in {0, 1}
    neg = ((1.0 - amask) * jnp.float32(-1e9))[None, :, :]              # (1, 1, S)
    scale = jnp.float32(1.0 / (HD ** 0.5))

    # Encoder layers: weights are stacked over layers and VMEM-resident; static unroll.
    for l in range(NLAYERS):
        xb = x.astype(jnp.bfloat16)
        xh = jnp.broadcast_to(xb, (3 * NH, S, H))                      # Q/K/V heads as batch dim

        # Single fused QKV projection: (3NH,S,H) @ (3NH,H,HD) -> (3NH,S,HD), f32 accumulation.
        qkv = jnp.einsum('nsh,nhd->nsd', xh, wqkv_ref[l],
                         preferred_element_type=jnp.float32) + bqkv_ref[l]
        q = qkv[:NH]                                                   # (NH, S, HD)
        k = qkv[NH:2 * NH]
        v = qkv[2 * NH:]

        # Scaled dot-product attention, all heads batched on the MXU.
        scores = jnp.einsum('nqd,nkd->nqk',
                            q.astype(jnp.bfloat16), k.astype(jnp.bfloat16),
                            preferred_element_type=jnp.float32) * scale + neg
        m = jnp.max(scores, axis=-1, keepdims=True)
        e = jnp.exp(scores - m)                                        # EUP
        p = e * pl.reciprocal(jnp.sum(e, axis=-1, keepdims=True), approx=True)

        ctx = jnp.einsum('nqk,nkd->nqd',
                         p.astype(jnp.bfloat16), v.astype(jnp.bfloat16),
                         preferred_element_type=jnp.float32)           # (NH, S, HD)

        # Per-head output projection summed over heads == concat(ctx_h) @ Wo.
        attn = jnp.sum(
            jnp.einsum('nqd,ndh->nqh', ctx.astype(jnp.bfloat16), wo_ref[l],
                       preferred_element_type=jnp.float32),
            axis=0) + bo_ref[l]                                        # (S, H)

        h1 = _layer_norm(x + attn, g1_ref[l], b1_ref[l])

        # Feed-forward (full-width (S,H)@(H,FF) and (S,FF)@(FF,H) matmuls).
        ff = jnp.dot(h1.astype(jnp.bfloat16), wi_ref[l],
                     preferred_element_type=jnp.float32) + bi_ref[l]
        ff = _gelu_tanh(ff)
        ff = jnp.dot(ff.astype(jnp.bfloat16), w2_ref[l],
                     preferred_element_type=jnp.float32) + b2_ref[l]
        x = _layer_norm(h1 + ff, g2_ref[l], b2n_ref[l])

    # Pooler: tanh(dense(CLS token)).
    cls = x[0:1, :]                                                    # (1, H)
    pooled = jnp.tanh(jnp.dot(cls.astype(jnp.bfloat16), wp_ref[...],
                              preferred_element_type=jnp.float32) + bp_ref[...])

    # Linear(H, 1) as VPU multiply + lane reduce (avoids a width-1 MXU matmul / store).
    out_ref[...] = jnp.sum(pooled * wr_ref[...], axis=-1, keepdims=True) + br_ref[...]


# ----------------------------------- wrapper ---------------------------------------
def fused_forward(emb, mask3, p):
    Bdim, Sdim, Hdim = emb.shape
    xmap = lambda b: (b, 0, 0)

    weight_args = [p['emb_g'], p['emb_b'],
                   p['wqkv'], p['bqkv'],
                   p['wo'], p['bo'], p['g1'], p['b1'],
                   p['wi'], p['bi'], p['w2'], p['b2'], p['g2'], p['b2n'],
                   p['wp'], p['bp'], p['wr'], p['br']]

    in_specs = ([pl.BlockSpec((pl.Squeezed(), Sdim, Hdim), xmap),      # (S, H) per batch elem
                 pl.BlockSpec((pl.Squeezed(), 1, Sdim), xmap)]         # (1, S) mask
                # whole-array, grid-invariant weight blocks (fetched once, stay in VMEM)
                + [pl.BlockSpec(w.shape, lambda b, nd=w.ndim: (0,) * nd)
                   for w in weight_args])

    out = pl.pallas_call(
        fused_forward_kernel,
        out_shape=jax.ShapeDtypeStruct((Bdim, 1, 1), jnp.float32),
        grid=(Bdim,),
        in_specs=in_specs,
        out_specs=pl.BlockSpec((pl.Squeezed(), 1, 1), xmap),
        compiler_params=pltpu.CompilerParams(
            dimension_semantics=("parallel",)),   # independent batch elems -> megacore on v7x
    )(emb, mask3, *weight_args)
    return out[:, 0, :]                           # (B, 1)


# -------------------------------- parameters / forward -------------------------------
def init_params(key):
    keys = iter(jax.random.split(key, 64))

    def nrm(shape, scale=0.02):
        return (scale * jax.random.normal(next(keys), shape)).astype(jnp.float32)

    # Generate in standard (in,out) layout, then split heads for the batched-head kernel layout.
    wq = nrm((NLAYERS, H, H)); wk = nrm((NLAYERS, H, H))
    wv = nrm((NLAYERS, H, H)); wo = nrm((NLAYERS, H, H))

    def split_heads(w):   # (L, H, H) -> (L, NH, H, HD)
        return w.reshape(NLAYERS, H, NH, HD).transpose(0, 2, 1, 3)

    # Fused QKV weights: (L, 3*NH, H, HD), heads of Q then K then V.
    wqkv = jnp.concatenate(
        [split_heads(wq), split_heads(wk), split_heads(wv)], axis=1)

    p = {
        'word_emb': nrm((VOCAB, H)),
        'pos_emb': nrm((MAX_POS, H)),
        'type_emb': nrm((1, H)),
        'emb_g': jnp.ones((1, H), jnp.float32),
        'emb_b': jnp.zeros((1, H), jnp.float32),
        # encoder weights: bf16 for MXU throughput, head-split, stacked over layers
        'wqkv': wqkv.astype(jnp.bfloat16),
        'bqkv': jnp.zeros((NLAYERS, 3 * NH, 1, HD), jnp.float32),
        'wo': wo.reshape(NLAYERS, NH, HD, H).astype(jnp.bfloat16),
        'bo': jnp.zeros((NLAYERS, 1, H), jnp.float32),
        'g1': jnp.ones((NLAYERS, 1, H), jnp.float32),
        'b1': jnp.zeros((NLAYERS, 1, H), jnp.float32),
        'wi': nrm((NLAYERS, H, FF)).astype(jnp.bfloat16),
        'bi': jnp.zeros((NLAYERS, 1, FF), jnp.float32),
        'w2': nrm((NLAYERS, FF, H)).astype(jnp.bfloat16),
        'b2': jnp.zeros((NLAYERS, 1, H), jnp.float32),
        'g2': jnp.ones((NLAYERS, 1, H), jnp.float32),
        'b2n': jnp.zeros((NLAYERS, 1, H), jnp.float32),
        # pooler + regression head
        'wp': nrm((H, H)).astype(jnp.bfloat16),
        'bp': jnp.zeros((1, H), jnp.float32),
        'wr': nrm((1, H)),                         # Linear(H,1) weight as a row (VPU reduce)
        'br': jnp.zeros((1, 1), jnp.float32),
    }
    return p


@jax.jit
def roberta_regressor_forward(params, input_ids, attention_masks):
    # Embedding gathers are data-dependent glue (plain JAX); everything else is one fused kernel.
    # RoBERTa position ids: padding tokens keep padding_idx=1, real tokens count from 2.
    mask_i = attention_masks.astype(jnp.int32)
    pos_ids = jnp.cumsum(mask_i, axis=1) * mask_i + 1                 # (B, S)
    emb = (params['word_emb'][input_ids]
           + params['pos_emb'][pos_ids]
           + params['type_emb'][0][None, None, :]).astype(jnp.float32)
    mask3 = attention_masks.astype(jnp.float32)[:, None, :]           # (B, 1, S)
    return fused_forward(emb, mask3, params)


if __name__ == "__main__":
    key = jax.random.PRNGKey(0)
    pkey, ikey = jax.random.split(key)
    params = init_params(pkey)

    input_ids = jax.random.randint(ikey, (B, S), 0, VOCAB, dtype=jnp.int32)
    attention_masks = jnp.ones((B, S), jnp.int32)

    out = roberta_regressor_forward(params, input_ids, attention_masks)
    out = jax.block_until_ready(out)
    assert out.shape == (B, 1) and bool(jnp.all(jnp.isfinite(out)))
    print("KERNEL_OK")
</pallas_src>

<mosaic_0001>
module attributes {stable_mosaic.version = 11 : i64} {
  func.func @fused_forward_kernel(%arg0: i32, %arg1: memref<1x8x128xf32, #tpu.memory_space<vmem>>, %arg2: memref<1x1x8xf32, #tpu.memory_space<vmem>>, %arg3: memref<1x128xf32, #tpu.memory_space<vmem>>, %arg4: memref<1x128xf32, #tpu.memory_space<vmem>>, %arg5: memref<2x12x128x32xbf16, #tpu.memory_space<vmem>>, %arg6: memref<2x12x1x32xf32, #tpu.memory_space<vmem>>, %arg7: memref<2x4x32x128xbf16, #tpu.memory_space<vmem>>, %arg8: memref<2x1x128xf32, #tpu.memory_space<vmem>>, %arg9: memref<2x1x128xf32, #tpu.memory_space<vmem>>, %arg10: memref<2x1x128xf32, #tpu.memory_space<vmem>>, %arg11: memref<2x128x512xbf16, #tpu.memory_space<vmem>>, %arg12: memref<2x1x512xf32, #tpu.memory_space<vmem>>, %arg13: memref<2x512x128xbf16, #tpu.memory_space<vmem>>, %arg14: memref<2x1x128xf32, #tpu.memory_space<vmem>>, %arg15: memref<2x1x128xf32, #tpu.memory_space<vmem>>, %arg16: memref<2x1x128xf32, #tpu.memory_space<vmem>>, %arg17: memref<128x128xbf16, #tpu.memory_space<vmem>>, %arg18: memref<1x128xf32, #tpu.memory_space<vmem>>, %arg19: memref<1x128xf32, #tpu.memory_space<vmem>>, %arg20: memref<1x1xf32, #tpu.memory_space<vmem>>, %arg21: memref<1x1x1xf32, #tpu.memory_space<vmem>>) attributes {dimension_semantics = [#tpu.dimension_semantics<parallel>], iteration_bounds = array<i64: 2>, scalar_prefetch = 0 : i64, scratch_operands = 0 : i64, tpu.core_type = #tpu.core_type<tc>, window_params = [{transform_indices = @transform_0, window_bounds = array<i64: 1, 8, 128>}, {transform_indices = @transform_1, window_bounds = array<i64: 1, 1, 8>}, {pipeline_mode = #tpu.pipeline_mode<synchronous>, transform_indices = @transform_2, window_bounds = array<i64: 1, 128>}, {pipeline_mode = #tpu.pipeline_mode<synchronous>, transform_indices = @transform_3, window_bounds = array<i64: 1, 128>}, {pipeline_mode = #tpu.pipeline_mode<synchronous>, transform_indices = @transform_4, window_bounds = array<i64: 2, 12, 128, 32>}, {pipeline_mode = #tpu.pipeline_mode<synchronous>, transform_indices = @transform_5, window_bounds = array<i64: 2, 12, 1, 32>}, {pipeline_mode = #tpu.pipeline_mode<synchronous>, transform_indices = @transform_6, window_bounds = array<i64: 2, 4, 32, 128>}, {pipeline_mode = #tpu.pipeline_mode<synchronous>, transform_indices = @transform_7, window_bounds = array<i64: 2, 1, 128>}, {pipeline_mode = #tpu.pipeline_mode<synchronous>, transform_indices = @transform_8, window_bounds = array<i64: 2, 1, 128>}, {pipeline_mode = #tpu.pipeline_mode<synchronous>, transform_indices = @transform_9, window_bounds = array<i64: 2, 1, 128>}, {pipeline_mode = #tpu.pipeline_mode<synchronous>, transform_indices = @transform_10, window_bounds = array<i64: 2, 128, 512>}, {pipeline_mode = #tpu.pipeline_mode<synchronous>, transform_indices = @transform_11, window_bounds = array<i64: 2, 1, 512>}, {pipeline_mode = #tpu.pipeline_mode<synchronous>, transform_indices = @transform_12, window_bounds = array<i64: 2, 512, 128>}, {pipeline_mode = #tpu.pipeline_mode<synchronous>, transform_indices = @transform_13, window_bounds = array<i64: 2, 1, 128>}, {pipeline_mode = #tpu.pipeline_mode<synchronous>, transform_indices = @transform_14, window_bounds = array<i64: 2, 1, 128>}, {pipeline_mode = #tpu.pipeline_mode<synchronous>, transform_indices = @transform_15, window_bounds = array<i64: 2, 1, 128>}, {pipeline_mode = #tpu.pipeline_mode<synchronous>, transform_indices = @transform_16, window_bounds = array<i64: 128, 128>}, {pipeline_mode = #tpu.pipeline_mode<synchronous>, transform_indices = @transform_17, window_bounds = array<i64: 1, 128>}, {pipeline_mode = #tpu.pipeline_mode<synchronous>, transform_indices = @transform_18, window_bounds = array<i64: 1, 128>}, {pipeline_mode = #tpu.pipeline_mode<synchronous>, transform_indices = @transform_19, window_bounds = array<i64: 1, 1>}, {transform_indices = @transform_20, window_bounds = array<i64: 1, 1, 1>}]} {
    %c0 = arith.constant 0 : index
    %c0_0 = arith.constant 0 : index
    %c0_1 = arith.constant 0 : index
    %0 = vector.load %arg1[%c0, %c0_0, %c0_1] : memref<1x8x128xf32, #tpu.memory_space<vmem>>, vector<1x8x128xf32>
    %1 = vector.shape_cast %0 : vector<1x8x128xf32> to vector<8x128xf32>
    %c0_2 = arith.constant 0 : index
    %c0_3 = arith.constant 0 : index
    %2 = vector.load %arg3[%c0_2, %c0_3] : memref<1x128xf32, #tpu.memory_space<vmem>>, vector<1x128xf32>
    %c0_4 = arith.constant 0 : index
    %c0_5 = arith.constant 0 : index
    %3 = vector.load %arg4[%c0_4, %c0_5] : memref<1x128xf32, #tpu.memory_space<vmem>>, vector<1x128xf32>
    %cst = arith.constant dense<0.000000e+00> : vector<8xf32>
    %4 = vector.multi_reduction <add>, %1, %cst [1] : vector<8x128xf32> to vector<8xf32>
    %5 = vector.shape_cast %4 : vector<8xf32> to vector<8x1xf32>
    %cst_6 = arith.constant 1.280000e+02 : f32
    %6 = vector.broadcast %cst_6 : f32 to vector<8x1xf32>
    %7 = arith.divf %5, %6 : vector<8x1xf32>
    %8 = vector.broadcast %7 : vector<8x1xf32> to vector<8x128xf32>
    %9 = arith.subf %1, %8 : vector<8x128xf32>
    %10 = arith.mulf %9, %9 : vector<8x128xf32>
    %cst_7 = arith.constant dense<0.000000e+00> : vector<8xf32>
    %11 = vector.multi_reduction <add>, %10, %cst_7 [1] : vector<8x128xf32> to vector<8xf32>
    %12 = vector.shape_cast %11 : vector<8xf32> to vector<8x1xf32>
    %cst_8 = arith.constant 1.280000e+02 : f32
    %13 = vector.broadcast %cst_8 : f32 to vector<8x1xf32>
    %14 = arith.divf %12, %13 : vector<8x1xf32>
    %15 = vector.broadcast %7 : vector<8x1xf32> to vector<8x128xf32>
    %16 = arith.subf %1, %15 : vector<8x128xf32>
    %cst_9 = arith.constant 9.99999974E-6 : f32
    %17 = vector.broadcast %cst_9 : f32 to vector<8x1xf32>
    %18 = arith.addf %14, %17 : vector<8x1xf32>
    %19 = math.rsqrt %18 : vector<8x1xf32>
    %20 = vector.broadcast %19 : vector<8x1xf32> to vector<8x128xf32>
    %21 = arith.mulf %16, %20 : vector<8x128xf32>
    %22 = vector.broadcast %2 : vector<1x128xf32> to vector<8x128xf32>
    %23 = arith.mulf %21, %22 : vector<8x128xf32>
    %24 = vector.broadcast %3 : vector<1x128xf32> to vector<8x128xf32>
    %25 = arith.addf %23, %24 : vector<8x128xf32>
    %c0_10 = arith.constant 0 : index
    %c0_11 = arith.constant 0 : index
    %c0_12 = arith.constant 0 : index
    %26 = vector.load %arg2[%c0_10, %c0_11, %c0_12] : memref<1x1x8xf32, #tpu.memory_space<vmem>>, vector<1x1x8xf32>
    %27 = vector.shape_cast %26 : vector<1x1x8xf32> to vector<1x8xf32>
    %cst_13 = arith.constant 1.000000e+00 : f32
    %28 = vector.broadcast %cst_13 : f32 to vector<1x8xf32>
    %29 = arith.subf %28, %27 : vector<1x8xf32>
    %cst_14 = arith.constant -1.000000e+09 : f32
    %30 = vector.broadcast %cst_14 : f32 to vector<1x8xf32>
    %31 = arith.mulf %29, %30 : vector<1x8xf32>
    %32 = vector.shape_cast %31 : vector<1x8xf32> to vector<1x1x8xf32>
    %33 = arith.truncf %25 : vector<8x128xf32> to vector<8x128xbf16>
    %34 = vector.shape_cast %33 : vector<8x128xbf16> to vector<1x8x128xbf16>
    %35 = vector.broadcast %34 : vector<1x8x128xbf16> to vector<12x8x128xbf16>
    %c0_15 = arith.constant 0 : index
    %c0_16 = arith.constant 0 : index
    %c0_17 = arith.constant 0 : index
    %c0_18 = arith.constant 0 : index
    %36 = vector.load %arg5[%c0_15, %c0_16, %c0_17, %c0_18] : memref<2x12x128x32xbf16, #tpu.memory_space<vmem>>, vector<1x12x128x32xbf16>
    %37 = vector.shape_cast %36 : vector<1x12x128x32xbf16> to vector<12x128x32xbf16>
    "tpu.trace_start"() <{level = 10 : i32, message = "nsh,nhd->nsd"}> : () -> ()
    %cst_19 = arith.constant dense<0.000000e+00> : vector<12x8x32xf32>
    %38 = tpu.matmul %35, %37, %cst_19 {dimension_numbers = #tpu.dot_dimension_numbers<[2], [1], [1], [2], [0, 0, 0, 1, 1, 2], [0], [0]>} : vector<12x8x128xbf16>, vector<12x128x32xbf16>, vector<12x8x32xf32> -> vector<12x8x32xf32>
    "tpu.trace_stop"() : () -> ()
    %c0_20 = arith.constant 0 : index
    %c0_21 = arith.constant 0 : index
    %c0_22 = arith.constant 0 : index
    %c0_23 = arith.constant 0 : index
    %39 = vector.load %arg6[%c0_20, %c0_21, %c0_22, %c0_23] : memref<2x12x1x32xf32, #tpu.memory_space<vmem>>, vector<1x12x1x32xf32>
    %40 = vector.shape_cast %39 : vector<1x12x1x32xf32> to vector<12x1x32xf32>
    %41 = vector.broadcast %40 : vector<12x1x32xf32> to vector<12x8x32xf32>
    %42 = arith.addf %38, %41 : vector<12x8x32xf32>
    %43 = vector.extract_strided_slice %42 {offsets = [0, 0, 0], sizes = [4, 8, 32], strides = [1, 1, 1]} : vector<12x8x32xf32> to vector<4x8x32xf32>
    %44 = vector.extract_strided_slice %42 {offsets = [4, 0, 0], sizes = [4, 8, 32], strides = [1, 1, 1]} : vector<12x8x32xf32> to vector<4x8x32xf32>
    %45 = vector.extract_strided_slice %42 {offsets = [8, 0, 0], sizes = [4, 8, 32], strides = [1, 1, 1]} : vector<12x8x32xf32> to vector<4x8x32xf32>
    %46 = arith.truncf %43 : vector<4x8x32xf32> to vector<4x8x32xbf16>
    %47 = arith.truncf %44 : vector<4x8x32xf32> to vector<4x8x32xbf16>
    "tpu.trace_start"() <{level = 10 : i32, message = "nqd,nkd->nqk"}> : () -> ()
    %cst_24 = arith.constant dense<0.000000e+00> : vector<4x8x8xf32>
    %48 = tpu.matmul %46, %47, %cst_24 {dimension_numbers = #tpu.dot_dimension_numbers<[2], [2], [1], [1], [0, 0, 0, 1, 1, 1], [0], [0]>} : vector<4x8x32xbf16>, vector<4x8x32xbf16>, vector<4x8x8xf32> -> vector<4x8x8xf32>
    "tpu.trace_stop"() : () -> ()
    %cst_25 = arith.constant 0.176776692 : f32
    %49 = vector.broadcast %cst_25 : f32 to vector<4x8x8xf32>
    %50 = arith.mulf %48, %49 : vector<4x8x8xf32>
    %51 = vector.broadcast %32 : vector<1x1x8xf32> to vector<4x8x8xf32>
    %52 = arith.addf %50, %51 : vector<4x8x8xf32>
    %cst_26 = arith.constant dense<0xFF800000> : vector<4x8xf32>
    %53 = vector.multi_reduction <maximumf>, %52, %cst_26 [2] : vector<4x8x8xf32> to vector<4x8xf32>
    %54 = vector.shape_cast %53 : vector<4x8xf32> to vector<4x8x1xf32>
    %55 = vector.broadcast %54 : vector<4x8x1xf32> to vector<4x8x8xf32>
    %56 = arith.subf %52, %55 : vector<4x8x8xf32>
    %57 = math.exp %56 : vector<4x8x8xf32>
    %cst_27 = arith.constant dense<0.000000e+00> : vector<4x8xf32>
    %58 = vector.multi_reduction <add>, %57, %cst_27 [2] : vector<4x8x8xf32> to vector<4x8xf32>
    %59 = vector.shape_cast %58 : vector<4x8xf32> to vector<4x8x1xf32>
    %60 = tpu.reciprocal %59 {approx = true} : vector<4x8x1xf32> -> vector<4x8x1xf32>
    %61 = vector.broadcast %60 : vector<4x8x1xf32> to vector<4x8x8xf32>
    %62 = arith.mulf %57, %61 : vector<4x8x8xf32>
    %63 = arith.truncf %62 : vector<4x8x8xf32> to vector<4x8x8xbf16>
    %64 = arith.truncf %45 : vector<4x8x32xf32> to vector<4x8x32xbf16>
    "tpu.trace_start"() <{level = 10 : i32, message = "nqk,nkd->nqd"}> : () -> ()
    %cst_28 = arith.constant dense<0.000000e+00> : vector<4x8x32xf32>
    %65 = tpu.matmul %63, %64, %cst_28 {dimension_numbers = #tpu.dot_dimension_numbers<[2], [1], [1], [2], [0, 0, 0, 1, 1, 2], [0], [0]>} : vector<4x8x8xbf16>, vector<4x8x32xbf16>, vector<4x8x32xf32> -> vector<4x8x32xf32>
    "tpu.trace_stop"() : () -> ()
    %66 = arith.truncf %65 : vector<4x8x32xf32> to vector<4x8x32xbf16>
    %c0_29 = arith.constant 0 : index
    %c0_30 = arith.constant 0 : index
    %c0_31 = arith.constant 0 : index
    %c0_32 = arith.constant 0 : index
    %67 = vector.load %arg7[%c0_29, %c0_30, %c0_31, %c0_32] : memref<2x4x32x128xbf16, #tpu.memory_space<vmem>>, vector<1x4x32x128xbf16>
    %68 = vector.shape_cast %67 : vector<1x4x32x128xbf16> to vector<4x32x128xbf16>
    "tpu.trace_start"() <{level = 10 : i32, message = "nqd,ndh->nqh"}> : () -> ()
    %cst_33 = arith.constant dense<0.000000e+00> : vector<4x8x128xf32>
    %69 = tpu.matmul %66, %68, %cst_33 {dimension_numbers = #tpu.dot_dimension_numbers<[2], [1], [1], [2], [0, 0, 0, 1, 1, 2], [0], [0]>} : vector<4x8x32xbf16>, vector<4x32x128xbf16>, vector<4x8x128xf32> -> vector<4x8x128xf32>
    "tpu.trace_stop"() : () -> ()
    %cst_34 = arith.constant dense<0.000000e+00> : vector<8x128xf32>
    %70 = vector.multi_reduction <add>, %69, %cst_34 [0] : vector<4x8x128xf32> to vector<8x128xf32>
    %c0_35 = arith.constant 0 : index
    %c0_36 = arith.constant 0 : index
    %c0_37 = arith.constant 0 : index
    %71 = vector.load %arg8[%c0_35, %c0_36, %c0_37] : memref<2x1x128xf32, #tpu.memory_space<vmem>>, vector<1x1x128xf32>
    %72 = vector.shape_cast %71 : vector<1x1x128xf32> to vector<1x128xf32>
    %73 = vector.broadcast %72 : vector<1x128xf32> to vector<8x128xf32>
    %74 = arith.addf %70, %73 : vector<8x128xf32>
    %75 = arith.addf %25, %74 : vector<8x128xf32>
    %c0_38 = arith.constant 0 : index
    %c0_39 = arith.constant 0 : index
    %c0_40 = arith.constant 0 : index
    %76 = vector.load %arg9[%c0_38, %c0_39, %c0_40] : memref<2x1x128xf32, #tpu.memory_space<vmem>>, vector<1x1x128xf32>
    %77 = vector.shape_cast %76 : vector<1x1x128xf32> to vector<1x128xf32>
    %c0_41 = arith.constant 0 : index
    %c0_42 = arith.constant 0 : index
    %c0_43 = arith.constant 0 : index
    %78 = vector.load %arg10[%c0_41, %c0_42, %c0_43] : memref<2x1x128xf32, #tpu.memory_space<vmem>>, vector<1x1x128xf32>
    %79 = vector.shape_cast %78 : vector<1x1x128xf32> to vector<1x128xf32>
    %cst_44 = arith.constant dense<0.000000e+00> : vector<8xf32>
    %80 = vector.multi_reduction <add>, %75, %cst_44 [1] : vector<8x128xf32> to vector<8xf32>
    %81 = vector.shape_cast %80 : vector<8xf32> to vector<8x1xf32>
    %cst_45 = arith.constant 1.280000e+02 : f32
    %82 = vector.broadcast %cst_45 : f32 to vector<8x1xf32>
    %83 = arith.divf %81, %82 : vector<8x1xf32>
    %84 = vector.broadcast %83 : vector<8x1xf32> to vector<8x128xf32>
    %85 = arith.subf %75, %84 : vector<8x128xf32>
    %86 = arith.mulf %85, %85 : vector<8x128xf32>
    %cst_46 = arith.constant dense<0.000000e+00> : vector<8xf32>
    %87 = vector.multi_reduction <add>, %86, %cst_46 [1] : vector<8x128xf32> to vector<8xf32>
    %88 = vector.shape_cast %87 : vector<8xf32> to vector<8x1xf32>
    %cst_47 = arith.constant 1.280000e+02 : f32
    %89 = vector.broadcast %cst_47 : f32 to vector<8x1xf32>
    %90 = arith.divf %88, %89 : vector<8x1xf32>
    %91 = vector.broadcast %83 : vector<8x1xf32> to vector<8x128xf32>
    %92 = arith.subf %75, %91 : vector<8x128xf32>
    %cst_48 = arith.constant 9.99999974E-6 : f32
    %93 = vector.broadcast %cst_48 : f32 to vector<8x1xf32>
    %94 = arith.addf %90, %93 : vector<8x1xf32>
    %95 = math.rsqrt %94 : vector<8x1xf32>
    %96 = vector.broadcast %95 : vector<8x1xf32> to vector<8x128xf32>
    %97 = arith.mulf %92, %96 : vector<8x128xf32>
    %98 = vector.broadcast %77 : vector<1x128xf32> to vector<8x128xf32>
    %99 = arith.mulf %97, %98 : vector<8x128xf32>
    %100 = vector.broadcast %79 : vector<1x128xf32> to vector<8x128xf32>
    %101 = arith.addf %99, %100 : vector<8x128xf32>
    %102 = arith.truncf %101 : vector<8x128xf32> to vector<8x128xbf16>
    %c0_49 = arith.constant 0 : index
    %c0_50 = arith.constant 0 : index
    %c0_51 = arith.constant 0 : index
    %103 = vector.load %arg11[%c0_49, %c0_50, %c0_51] : memref<2x128x512xbf16, #tpu.memory_space<vmem>>, vector<1x128x512xbf16>
    %104 = vector.shape_cast %103 : vector<1x128x512xbf16> to vector<128x512xbf16>
    %cst_52 = arith.constant dense<0.000000e+00> : vector<8x512xf32>
    %105 = tpu.matmul %102, %104, %cst_52 {dimension_numbers = #tpu.dot_dimension_numbers<[1], [0], [0], [1], [0, 0, 1, 1], [], []>} : vector<8x128xbf16>, vector<128x512xbf16>, vector<8x512xf32> -> vector<8x512xf32>
    %c0_53 = arith.constant 0 : index
    %c0_54 = arith.constant 0 : index
    %c0_55 = arith.constant 0 : index
    %106 = vector.load %arg12[%c0_53, %c0_54, %c0_55] : memref<2x1x512xf32, #tpu.memory_space<vmem>>, vector<1x1x512xf32>
    %107 = vector.shape_cast %106 : vector<1x1x512xf32> to vector<1x512xf32>
    %108 = vector.broadcast %107 : vector<1x512xf32> to vector<8x512xf32>
    %109 = arith.addf %105, %108 : vector<8x512xf32>
    %cst_56 = arith.constant 5.000000e-01 : f32
    %110 = vector.broadcast %cst_56 : f32 to vector<8x512xf32>
    %111 = arith.mulf %110, %109 : vector<8x512xf32>
    %cst_57 = arith.constant 4.471500e-02 : f32
    %112 = vector.broadcast %cst_57 : f32 to vector<8x512xf32>
    %113 = arith.mulf %112, %109 : vector<8x512xf32>
    %114 = arith.mulf %113, %109 : vector<8x512xf32>
    %115 = arith.mulf %114, %109 : vector<8x512xf32>
    %116 = arith.addf %109, %115 : vector<8x512xf32>
    %cst_58 = arith.constant 0.797884583 : f32
    %117 = vector.broadcast %cst_58 : f32 to vector<8x512xf32>
    %118 = arith.mulf %117, %116 : vector<8x512xf32>
    %119 = math.tanh %118 : vector<8x512xf32>
    %cst_59 = arith.constant 1.000000e+00 : f32
    %120 = vector.broadcast %cst_59 : f32 to vector<8x512xf32>
    %121 = arith.addf %120, %119 : vector<8x512xf32>
    %122 = arith.mulf %111, %121 : vector<8x512xf32>
    %123 = arith.truncf %122 : vector<8x512xf32> to vector<8x512xbf16>
    %c0_60 = arith.constant 0 : index
    %c0_61 = arith.constant 0 : index
    %c0_62 = arith.constant 0 : index
    %124 = vector.load %arg13[%c0_60, %c0_61, %c0_62] : memref<2x512x128xbf16, #tpu.memory_space<vmem>>, vector<1x512x128xbf16>
    %125 = vector.shape_cast %124 : vector<1x512x128xbf16> to vector<512x128xbf16>
    %cst_63 = arith.constant dense<0.000000e+00> : vector<8x128xf32>
    %126 = tpu.matmul %123, %125, %cst_63 {dimension_numbers = #tpu.dot_dimension_numbers<[1], [0], [0], [1], [0, 0, 1, 1], [], []>} : vector<8x512xbf16>, vector<512x128xbf16>, vector<8x128xf32> -> vector<8x128xf32>
    %c0_64 = arith.constant 0 : index
    %c0_65 = arith.constant 0 : index
    %c0_66 = arith.constant 0 : index
    %127 = vector.load %arg14[%c0_64, %c0_65, %c0_66] : memref<2x1x128xf32, #tpu.memory_space<vmem>>, vector<1x1x128xf32>
    %128 = vector.shape_cast %127 : vector<1x1x128xf32> to vector<1x128xf32>
    %129 = vector.broadcast %128 : vector<1x128xf32> to vector<8x128xf32>
    %130 = arith.addf %126, %129 : vector<8x128xf32>
    %131 = arith.addf %101, %130 : vector<8x128xf32>
    %c0_67 = arith.constant 0 : index
    %c0_68 = arith.constant 0 : index
    %c0_69 = arith.constant 0 : index
    %132 = vector.load %arg15[%c0_67, %c0_68, %c0_69] : memref<2x1x128xf32, #tpu.memory_space<vmem>>, vector<1x1x128xf32>
    %133 = vector.shape_cast %132 : vector<1x1x128xf32> to vector<1x128xf32>
    %c0_70 = arith.constant 0 : index
    %c0_71 = arith.constant 0 : index
    %c0_72 = arith.constant 0 : index
    %134 = vector.load %arg16[%c0_70, %c0_71, %c0_72] : memref<2x1x128xf32, #tpu.memory_space<vmem>>, vector<1x1x128xf32>
    %135 = vector.shape_cast %134 : vector<1x1x128xf32> to vector<1x128xf32>
    %cst_73 = arith.constant dense<0.000000e+00> : vector<8xf32>
    %136 = vector.multi_reduction <add>, %131, %cst_73 [1] : vector<8x128xf32> to vector<8xf32>
    %137 = vector.shape_cast %136 : vector<8xf32> to vector<8x1xf32>
    %cst_74 = arith.constant 1.280000e+02 : f32
    %138 = vector.broadcast %cst_74 : f32 to vector<8x1xf32>
    %139 = arith.divf %137, %138 : vector<8x1xf32>
    %140 = vector.broadcast %139 : vector<8x1xf32> to vector<8x128xf32>
    %141 = arith.subf %131, %140 : vector<8x128xf32>
    %142 = arith.mulf %141, %141 : vector<8x128xf32>
    %cst_75 = arith.constant dense<0.000000e+00> : vector<8xf32>
    %143 = vector.multi_reduction <add>, %142, %cst_75 [1] : vector<8x128xf32> to vector<8xf32>
    %144 = vector.shape_cast %143 : vector<8xf32> to vector<8x1xf32>
    %cst_76 = arith.constant 1.280000e+02 : f32
    %145 = vector.broadcast %cst_76 : f32 to vector<8x1xf32>
    %146 = arith.divf %144, %145 : vector<8x1xf32>
    %147 = vector.broadcast %139 : vector<8x1xf32> to vector<8x128xf32>
    %148 = arith.subf %131, %147 : vector<8x128xf32>
    %cst_77 = arith.constant 9.99999974E-6 : f32
    %149 = vector.broadcast %cst_77 : f32 to vector<8x1xf32>
    %150 = arith.addf %146, %149 : vector<8x1xf32>
    %151 = math.rsqrt %150 : vector<8x1xf32>
    %152 = vector.broadcast %151 : vector<8x1xf32> to vector<8x128xf32>
    %153 = arith.mulf %148, %152 : vector<8x128xf32>
    %154 = vector.broadcast %133 : vector<1x128xf32> to vector<8x128xf32>
    %155 = arith.mulf %153, %154 : vector<8x128xf32>
    %156 = vector.broadcast %135 : vector<1x128xf32> to vector<8x128xf32>
    %157 = arith.addf %155, %156 : vector<8x128xf32>
    %158 = arith.truncf %157 : vector<8x128xf32> to vector<8x128xbf16>
    %159 = vector.shape_cast %158 : vector<8x128xbf16> to vector<1x8x128xbf16>
    %160 = vector.broadcast %159 : vector<1x8x128xbf16> to vector<12x8x128xbf16>
    %c1 = arith.constant 1 : index
    %c0_78 = arith.constant 0 : index
    %c0_79 = arith.constant 0 : index
    %c0_80 = arith.constant 0 : index
    %161 = vector.load %arg5[%c1, %c0_78, %c0_79, %c0_80] : memref<2x12x128x32xbf16, #tpu.memory_space<vmem>>, vector<1x12x128x32xbf16>
    %162 = vector.shape_cast %161 : vector<1x12x128x32xbf16> to vector<12x128x32xbf16>
    "tpu.trace_start"() <{level = 10 : i32, message = "nsh,nhd->nsd"}> : () -> ()
    %cst_81 = arith.constant dense<0.000000e+00> : vector<12x8x32xf32>
    %163 = tpu.matmul %160, %162, %cst_81 {dimension_numbers = #tpu.dot_dimension_numbers<[2], [1], [1], [2], [0, 0, 0, 1, 1, 2], [0], [0]>} : vector<12x8x128xbf16>, vector<12x128x32xbf16>, vector<12x8x32xf32> -> vector<12x8x32xf32>
    "tpu.trace_stop"() : () -> ()
    %c1_82 = arith.constant 1 : index
    %c0_83 = arith.constant 0 : index
    %c0_84 = arith.constant 0 : index
    %c0_85 = arith.constant 0 : index
    %164 = vector.load %arg6[%c1_82, %c0_83, %c0_84, %c0_85] : memref<2x12x1x32xf32, #tpu.memory_space<vmem>>, vector<1x12x1x32xf32>
    %165 = vector.shape_cast %164 : vector<1x12x1x32xf32> to vector<12x1x32xf32>
    %166 = vector.broadcast %165 : vector<12x1x32xf32> to vector<12x8x32xf32>
    %167 = arith.addf %163, %166 : vector<12x8x32xf32>
    %168 = vector.extract_strided_slice %167 {offsets = [0, 0, 0], sizes = [4, 8, 32], strides = [1, 1, 1]} : vector<12x8x32xf32> to vector<4x8x32xf32>
    %169 = vector.extract_strided_slice %167 {offsets = [4, 0, 0], sizes = [4, 8, 32], strides = [1, 1, 1]} : vector<12x8x32xf32> to vector<4x8x32xf32>
    %170 = vector.extract_strided_slice %167 {offsets = [8, 0, 0], sizes = [4, 8, 32], strides = [1, 1, 1]} : vector<12x8x32xf32> to vector<4x8x32xf32>
    %171 = arith.truncf %168 : vector<4x8x32xf32> to vector<4x8x32xbf16>
    %172 = arith.truncf %169 : vector<4x8x32xf32> to vector<4x8x32xbf16>
    "tpu.trace_start"() <{level = 10 : i32, message = "nqd,nkd->nqk"}> : () -> ()
    %cst_86 = arith.constant dense<0.000000e+00> : vector<4x8x8xf32>
    %173 = tpu.matmul %171, %172, %cst_86 {dimension_numbers = #tpu.dot_dimension_numbers<[2], [2], [1], [1], [0, 0, 0, 1, 1, 1], [0], [0]>} : vector<4x8x32xbf16>, vector<4x8x32xbf16>, vector<4x8x8xf32> -> vector<4x8x8xf32>
    "tpu.trace_stop"() : () -> ()
    %cst_87 = arith.constant 0.176776692 : f32
    %174 = vector.broadcast %cst_87 : f32 to vector<4x8x8xf32>
    %175 = arith.mulf %173, %174 : vector<4x8x8xf32>
    %176 = vector.broadcast %32 : vector<1x1x8xf32> to vector<4x8x8xf32>
    %177 = arith.addf %175, %176 : vector<4x8x8xf32>
    %cst_88 = arith.constant dense<0xFF800000> : vector<4x8xf32>
    %178 = vector.multi_reduction <maximumf>, %177, %cst_88 [2] : vector<4x8x8xf32> to vector<4x8xf32>
    %179 = vector.shape_cast %178 : vector<4x8xf32> to vector<4x8x1xf32>
    %180 = vector.broadcast %179 : vector<4x8x1xf32> to vector<4x8x8xf32>
    %181 = arith.subf %177, %180 : vector<4x8x8xf32>
    %182 = math.exp %181 : vector<4x8x8xf32>
    %cst_89 = arith.constant dense<0.000000e+00> : vector<4x8xf32>
    %183 = vector.multi_reduction <add>, %182, %cst_89 [2] : vector<4x8x8xf32> to vector<4x8xf32>
    %184 = vector.shape_cast %183 : vector<4x8xf32> to vector<4x8x1xf32>
    %185 = tpu.reciprocal %184 {approx = true} : vector<4x8x1xf32> -> vector<4x8x1xf32>
    %186 = vector.broadcast %185 : vector<4x8x1xf32> to vector<4x8x8xf32>
    %187 = arith.mulf %182, %186 : vector<4x8x8xf32>
    %188 = arith.truncf %187 : vector<4x8x8xf32> to vector<4x8x8xbf16>
    %189 = arith.truncf %170 : vector<4x8x32xf32> to vector<4x8x32xbf16>
    "tpu.trace_start"() <{level = 10 : i32, message = "nqk,nkd->nqd"}> : () -> ()
    %cst_90 = arith.constant dense<0.000000e+00> : vector<4x8x32xf32>
    %190 = tpu.matmul %188, %189, %cst_90 {dimension_numbers = #tpu.dot_dimension_numbers<[2], [1], [1], [2], [0, 0, 0, 1, 1, 2], [0], [0]>} : vector<4x8x8xbf16>, vector<4x8x32xbf16>, vector<4x8x32xf32> -> vector<4x8x32xf32>
    "tpu.trace_stop"() : () -> ()
    %191 = arith.truncf %190 : vector<4x8x32xf32> to vector<4x8x32xbf16>
    %c1_91 = arith.constant 1 : index
    %c0_92 = arith.constant 0 : index
    %c0_93 = arith.constant 0 : index
    %c0_94 = arith.constant 0 : index
    %192 = vector.load %arg7[%c1_91, %c0_92, %c0_93, %c0_94] : memref<2x4x32x128xbf16, #tpu.memory_space<vmem>>, vector<1x4x32x128xbf16>
    %193 = vector.shape_cast %192 : vector<1x4x32x128xbf16> to vector<4x32x128xbf16>
    "tpu.trace_start"() <{level = 10 : i32, message = "nqd,ndh->nqh"}> : () -> ()
    %cst_95 = arith.constant dense<0.000000e+00> : vector<4x8x128xf32>
    %194 = tpu.matmul %191, %193, %cst_95 {dimension_numbers = #tpu.dot_dimension_numbers<[2], [1], [1], [2], [0, 0, 0, 1, 1, 2], [0], [0]>} : vector<4x8x32xbf16>, vector<4x32x128xbf16>, vector<4x8x128xf32> -> vector<4x8x128xf32>
    "tpu.trace_stop"() : () -> ()
    %cst_96 = arith.constant dense<0.000000e+00> : vector<8x128xf32>
    %195 = vector.multi_reduction <add>, %194, %cst_96 [0] : vector<4x8x128xf32> to vector<8x128xf32>
    %c1_97 = arith.constant 1 : index
    %c0_98 = arith.constant 0 : index
    %c0_99 = arith.constant 0 : index
    %196 = vector.load %arg8[%c1_97, %c0_98, %c0_99] : memref<2x1x128xf32, #tpu.memory_space<vmem>>, vector<1x1x128xf32>
    %197 = vector.shape_cast %196 : vector<1x1x128xf32> to vector<1x128xf32>
    %198 = vector.broadcast %197 : vector<1x128xf32> to vector<8x128xf32>
    %199 = arith.addf %195, %198 : vector<8x128xf32>
    %200 = arith.addf %157, %199 : vector<8x128xf32>
    %c1_100 = arith.constant 1 : index
    %c0_101 = arith.constant 0 : index
    %c0_102 = arith.constant 0 : index
    %201 = vector.load %arg9[%c1_100, %c0_101, %c0_102] : memref<2x1x128xf32, #tpu.memory_space<vmem>>, vector<1x1x128xf32>
    %202 = vector.shape_cast %201 : vector<1x1x128xf32> to vector<1x128xf32>
    %c1_103 = arith.constant 1 : index
    %c0_104 = arith.constant 0 : index
    %c0_105 = arith.constant 0 : index
    %203 = vector.load %arg10[%c1_103, %c0_104, %c0_105] : memref<2x1x128xf32, #tpu.memory_space<vmem>>, vector<1x1x128xf32>
    %204 = vector.shape_cast %203 : vector<1x1x128xf32> to vector<1x128xf32>
    %cst_106 = arith.constant dense<0.000000e+00> : vector<8xf32>
    %205 = vector.multi_reduction <add>, %200, %cst_106 [1] : vector<8x128xf32> to vector<8xf32>
    %206 = vector.shape_cast %205 : vector<8xf32> to vector<8x1xf32>
    %cst_107 = arith.constant 1.280000e+02 : f32
    %207 = vector.broadcast %cst_107 : f32 to vector<8x1xf32>
    %208 = arith.divf %206, %207 : vector<8x1xf32>
    %209 = vector.broadcast %208 : vector<8x1xf32> to vector<8x128xf32>
    %210 = arith.subf %200, %209 : vector<8x128xf32>
    %211 = arith.mulf %210, %210 : vector<8x128xf32>
    %cst_108 = arith.constant dense<0.000000e+00> : vector<8xf32>
    %212 = vector.multi_reduction <add>, %211, %cst_108 [1] : vector<8x128xf32> to vector<8xf32>
    %213 = vector.shape_cast %212 : vector<8xf32> to vector<8x1xf32>
    %cst_109 = arith.constant 1.280000e+02 : f32
    %214 = vector.broadcast %cst_109 : f32 to vector<8x1xf32>
    %215 = arith.divf %213, %214 : vector<8x1xf32>
    %216 = vector.broadcast %208 : vector<8x1xf32> to vector<8x128xf32>
    %217 = arith.subf %200, %216 : vector<8x128xf32>
    %cst_110 = arith.constant 9.99999974E-6 : f32
    %218 = vector.broadcast %cst_110 : f32 to vector<8x1xf32>
    %219 = arith.addf %215, %218 : vector<8x1xf32>
    %220 = math.rsqrt %219 : vector<8x1xf32>
    %221 = vector.broadcast %220 : vector<8x1xf32> to vector<8x128xf32>
    %222 = arith.mulf %217, %221 : vector<8x128xf32>
    %223 = vector.broadcast %202 : vector<1x128xf32> to vector<8x128xf32>
    %224 = arith.mulf %222, %223 : vector<8x128xf32>
    %225 = vector.broadcast %204 : vector<1x128xf32> to vector<8x128xf32>
    %226 = arith.addf %224, %225 : vector<8x128xf32>
    %227 = arith.truncf %226 : vector<8x128xf32> to vector<8x128xbf16>
    %c1_111 = arith.constant 1 : index
    %c0_112 = arith.constant 0 : index
    %c0_113 = arith.constant 0 : index
    %228 = vector.load %arg11[%c1_111, %c0_112, %c0_113] : memref<2x128x512xbf16, #tpu.memory_space<vmem>>, vector<1x128x512xbf16>
    %229 = vector.shape_cast %228 : vector<1x128x512xbf16> to vector<128x512xbf16>
    %cst_114 = arith.constant dense<0.000000e+00> : vector<8x512xf32>
    %230 = tpu.matmul %227, %229, %cst_114 {dimension_numbers = #tpu.dot_dimension_numbers<[1], [0], [0], [1], [0, 0, 1, 1], [], []>} : vector<8x128xbf16>, vector<128x512xbf16>, vector<8x512xf32> -> vector<8x512xf32>
    %c1_115 = arith.constant 1 : index
    %c0_116 = arith.constant 0 : index
    %c0_117 = arith.constant 0 : index
    %231 = vector.load %arg12[%c1_115, %c0_116, %c0_117] : memref<2x1x512xf32, #tpu.memory_space<vmem>>, vector<1x1x512xf32>
    %232 = vector.shape_cast %231 : vector<1x1x512xf32> to vector<1x512xf32>
    %233 = vector.broadcast %232 : vector<1x512xf32> to vector<8x512xf32>
    %234 = arith.addf %230, %233 : vector<8x512xf32>
    %cst_118 = arith.constant 5.000000e-01 : f32
    %235 = vector.broadcast %cst_118 : f32 to vector<8x512xf32>
    %236 = arith.mulf %235, %234 : vector<8x512xf32>
    %cst_119 = arith.constant 4.471500e-02 : f32
    %237 = vector.broadcast %cst_119 : f32 to vector<8x512xf32>
    %238 = arith.mulf %237, %234 : vector<8x512xf32>
    %239 = arith.mulf %238, %234 : vector<8x512xf32>
    %240 = arith.mulf %239, %234 : vector<8x512xf32>
    %241 = arith.addf %234, %240 : vector<8x512xf32>
    %cst_120 = arith.constant 0.797884583 : f32
    %242 = vector.broadcast %cst_120 : f32 to vector<8x512xf32>
    %243 = arith.mulf %242, %241 : vector<8x512xf32>
    %244 = math.tanh %243 : vector<8x512xf32>
    %cst_121 = arith.constant 1.000000e+00 : f32
    %245 = vector.broadcast %cst_121 : f32 to vector<8x512xf32>
    %246 = arith.addf %245, %244 : vector<8x512xf32>
    %247 = arith.mulf %236, %246 : vector<8x512xf32>
    %248 = arith.truncf %247 : vector<8x512xf32> to vector<8x512xbf16>
    %c1_122 = arith.constant 1 : index
    %c0_123 = arith.constant 0 : index
    %c0_124 = arith.constant 0 : index
    %249 = vector.load %arg13[%c1_122, %c0_123, %c0_124] : memref<2x512x128xbf16, #tpu.memory_space<vmem>>, vector<1x512x128xbf16>
    %250 = vector.shape_cast %249 : vector<1x512x128xbf16> to vector<512x128xbf16>
    %cst_125 = arith.constant dense<0.000000e+00> : vector<8x128xf32>
    %251 = tpu.matmul %248, %250, %cst_125 {dimension_numbers = #tpu.dot_dimension_numbers<[1], [0], [0], [1], [0, 0, 1, 1], [], []>} : vector<8x512xbf16>, vector<512x128xbf16>, vector<8x128xf32> -> vector<8x128xf32>
    %c1_126 = arith.constant 1 : index
    %c0_127 = arith.constant 0 : index
    %c0_128 = arith.constant 0 : index
    %252 = vector.load %arg14[%c1_126, %c0_127, %c0_128] : memref<2x1x128xf32, #tpu.memory_space<vmem>>, vector<1x1x128xf32>
    %253 = vector.shape_cast %252 : vector<1x1x128xf32> to vector<1x128xf32>
    %254 = vector.broadcast %253 : vector<1x128xf32> to vector<8x128xf32>
    %255 = arith.addf %251, %254 : vector<8x128xf32>
    %256 = arith.addf %226, %255 : vector<8x128xf32>
    %c1_129 = arith.constant 1 : index
    %c0_130 = arith.constant 0 : index
    %c0_131 = arith.constant 0 : index
    %257 = vector.load %arg15[%c1_129, %c0_130, %c0_131] : memref<2x1x128xf32, #tpu.memory_space<vmem>>, vector<1x1x128xf32>
    %258 = vector.shape_cast %257 : vector<1x1x128xf32> to vector<1x128xf32>
    %c1_132 = arith.constant 1 : index
    %c0_133 = arith.constant 0 : index
    %c0_134 = arith.constant 0 : index
    %259 = vector.load %arg16[%c1_132, %c0_133, %c0_134] : memref<2x1x128xf32, #tpu.memory_space<vmem>>, vector<1x1x128xf32>
    %260 = vector.shape_cast %259 : vector<1x1x128xf32> to vector<1x128xf32>
    %cst_135 = arith.constant dense<0.000000e+00> : vector<8xf32>
    %261 = vector.multi_reduction <add>, %256, %cst_135 [1] : vector<8x128xf32> to vector<8xf32>
    %262 = vector.shape_cast %261 : vector<8xf32> to vector<8x1xf32>
    %cst_136 = arith.constant 1.280000e+02 : f32
    %263 = vector.broadcast %cst_136 : f32 to vector<8x1xf32>
    %264 = arith.divf %262, %263 : vector<8x1xf32>
    %265 = vector.broadcast %264 : vector<8x1xf32> to vector<8x128xf32>
    %266 = arith.subf %256, %265 : vector<8x128xf32>
    %267 = arith.mulf %266, %266 : vector<8x128xf32>
    %cst_137 = arith.constant dense<0.000000e+00> : vector<8xf32>
    %268 = vector.multi_reduction <add>, %267, %cst_137 [1] : vector<8x128xf32> to vector<8xf32>
    %269 = vector.shape_cast %268 : vector<8xf32> to vector<8x1xf32>
    %cst_138 = arith.constant 1.280000e+02 : f32
    %270 = vector.broadcast %cst_138 : f32 to vector<8x1xf32>
    %271 = arith.divf %269, %270 : vector<8x1xf32>
    %272 = vector.broadcast %264 : vector<8x1xf32> to vector<8x128xf32>
    %273 = arith.subf %256, %272 : vector<8x128xf32>
    %cst_139 = arith.constant 9.99999974E-6 : f32
    %274 = vector.broadcast %cst_139 : f32 to vector<8x1xf32>
    %275 = arith.addf %271, %274 : vector<8x1xf32>
    %276 = math.rsqrt %275 : vector<8x1xf32>
    %277 = vector.broadcast %276 : vector<8x1xf32> to vector<8x128xf32>
    %278 = arith.mulf %273, %277 : vector<8x128xf32>
    %279 = vector.broadcast %258 : vector<1x128xf32> to vector<8x128xf32>
    %280 = arith.mulf %278, %279 : vector<8x128xf32>
    %281 = vector.broadcast %260 : vector<1x128xf32> to vector<8x128xf32>
    %282 = arith.addf %280, %281 : vector<8x128xf32>
    %283 = vector.extract_strided_slice %282 {offsets = [0, 0], sizes = [1, 128], strides = [1, 1]} : vector<8x128xf32> to vector<1x128xf32>
    %284 = arith.truncf %283 : vector<1x128xf32> to vector<1x128xbf16>
    %c0_140 = arith.constant 0 : index
    %c0_141 = arith.constant 0 : index
    %285 = vector.load %arg17[%c0_140, %c0_141] : memref<128x128xbf16, #tpu.memory_space<vmem>>, vector<128x128xbf16>
    %cst_142 = arith.constant dense<0.000000e+00> : vector<1x128xf32>
    %286 = tpu.matmul %284, %285, %cst_142 {dimension_numbers = #tpu.dot_dimension_numbers<[1], [0], [0], [1], [0, 0, 1, 1], [], []>} : vector<1x128xbf16>, vector<128x128xbf16>, vector<1x128xf32> -> vector<1x128xf32>
    %c0_143 = arith.constant 0 : index
    %c0_144 = arith.constant 0 : index
    %287 = vector.load %arg18[%c0_143, %c0_144] : memref<1x128xf32, #tpu.memory_space<vmem>>, vector<1x128xf32>
    %288 = arith.addf %286, %287 : vector<1x128xf32>
    %289 = math.tanh %288 : vector<1x128xf32>
    %c0_145 = arith.constant 0 : index
    %c0_146 = arith.constant 0 : index
    %290 = vector.load %arg19[%c0_145, %c0_146] : memref<1x128xf32, #tpu.memory_space<vmem>>, vector<1x128xf32>
    %291 = arith.mulf %289, %290 : vector<1x128xf32>
    %cst_147 = arith.constant dense<0.000000e+00> : vector<1xf32>
    %292 = vector.multi_reduction <add>, %291, %cst_147 [1] : vector<1x128xf32> to vector<1xf32>
    %293 = vector.shape_cast %292 : vector<1xf32> to vector<1x1xf32>
    %c0_148 = arith.constant 0 : index
    %c0_149 = arith.constant 0 : index
    %294 = vector.load %arg20[%c0_148, %c0_149] : memref<1x1xf32, #tpu.memory_space<vmem>>, vector<1x1xf32>
    %295 = arith.addf %293, %294 : vector<1x1xf32>
    %c0_150 = arith.constant 0 : index
    %c0_151 = arith.constant 0 : index
    %c0_152 = arith.constant 0 : index
    %296 = vector.load %arg21[%c0_150, %c0_151, %c0_152] : memref<1x1x1xf32, #tpu.memory_space<vmem>>, vector<1x1x1xf32>
    %297 = vector.shape_cast %296 : vector<1x1x1xf32> to vector<1x1xf32>
    %298 = vector.shape_cast %295 : vector<1x1xf32> to vector<1x1x1xf32>
    tpu.vector_store %arg21[%c0_150, %c0_151, %c0_152], %298 {strides = array<i32>} : memref<1x1x1xf32, #tpu.memory_space<vmem>>, vector<1x1x1xf32>,
    return
  }
  func.func @transform_0(%arg0: i32) -> (i32, i32, i32) {
    %c0_i32 = arith.constant 0 : i32
    %c0_i32_0 = arith.constant 0 : i32
    %c0_i32_1 = arith.constant 0 : i32
    return %arg0, %c0_i32, %c0_i32_0 : i32, i32, i32
  }
  func.func @transform_1(%arg0: i32) -> (i32, i32, i32) {
    %c0_i32 = arith.constant 0 : i32
    %c0_i32_0 = arith.constant 0 : i32
    %c0_i32_1 = arith.constant 0 : i32
    return %arg0, %c0_i32, %c0_i32_0 : i32, i32, i32
  }
  func.func @transform_2(%arg0: i32) -> (i32, i32) {
    %c0_i32 = arith.constant 0 : i32
    %c0_i32_0 = arith.constant 0 : i32
    %c0_i32_1 = arith.constant 0 : i32
    return %c0_i32, %c0_i32_0 : i32, i32
  }
  func.func @transform_3(%arg0: i32) -> (i32, i32) {
    %c0_i32 = arith.constant 0 : i32
    %c0_i32_0 = arith.constant 0 : i32
    %c0_i32_1 = arith.constant 0 : i32
    return %c0_i32, %c0_i32_0 : i32, i32
  }
  func.func @transform_4(%arg0: i32) -> (i32, i32, i32, i32) {
    %c0_i32 = arith.constant 0 : i32
    %c0_i32_0 = arith.constant 0 : i32
    %c0_i32_1 = arith.constant 0 : i32
    %c0_i32_2 = arith.constant 0 : i32
    %c0_i32_3 = arith.constant 0 : i32
    return %c0_i32, %c0_i32_0, %c0_i32_1, %c0_i32_2 : i32, i32, i32, i32
  }
  func.func @transform_5(%arg0: i32) -> (i32, i32, i32, i32) {
    %c0_i32 = arith.constant 0 : i32
    %c0_i32_0 = arith.constant 0 : i32
    %c0_i32_1 = arith.constant 0 : i32
    %c0_i32_2 = arith.constant 0 : i32
    %c0_i32_3 = arith.constant 0 : i32
    return %c0_i32, %c0_i32_0, %c0_i32_1, %c0_i32_2 : i32, i32, i32, i32
  }
  func.func @transform_6(%arg0: i32) -> (i32, i32, i32, i32) {
    %c0_i32 = arith.constant 0 : i32
    %c0_i32_0 = arith.constant 0 : i32
    %c0_i32_1 = arith.constant 0 : i32
    %c0_i32_2 = arith.constant 0 : i32
    %c0_i32_3 = arith.constant 0 : i32
    return %c0_i32, %c0_i32_0, %c0_i32_1, %c0_i32_2 : i32, i32, i32, i32
  }
  func.func @transform_7(%arg0: i32) -> (i32, i32, i32) {
    %c0_i32 = arith.constant 0 : i32
    %c0_i32_0 = arith.constant 0 : i32
    %c0_i32_1 = arith.constant 0 : i32
    %c0_i32_2 = arith.constant 0 : i32
    return %c0_i32, %c0_i32_0, %c0_i32_1 : i32, i32, i32
  }
  func.func @transform_8(%arg0: i32) -> (i32, i32, i32) {
    %c0_i32 = arith.constant 0 : i32
    %c0_i32_0 = arith.constant 0 : i32
    %c0_i32_1 = arith.constant 0 : i32
    %c0_i32_2 = arith.constant 0 : i32
    return %c0_i32, %c0_i32_0, %c0_i32_1 : i32, i32, i32
  }
  func.func @transform_9(%arg0: i32) -> (i32, i32, i32) {
    %c0_i32 = arith.constant 0 : i32
    %c0_i32_0 = arith.constant 0 : i32
    %c0_i32_1 = arith.constant 0 : i32
    %c0_i32_2 = arith.constant 0 : i32
    return %c0_i32, %c0_i32_0, %c0_i32_1 : i32, i32, i32
  }
  func.func @transform_10(%arg0: i32) -> (i32, i32, i32) {
    %c0_i32 = arith.constant 0 : i32
    %c0_i32_0 = arith.constant 0 : i32
    %c0_i32_1 = arith.constant 0 : i32
    %c0_i32_2 = arith.constant 0 : i32
    return %c0_i32, %c0_i32_0, %c0_i32_1 : i32, i32, i32
  }
  func.func @transform_11(%arg0: i32) -> (i32, i32, i32) {
    %c0_i32 = arith.constant 0 : i32
    %c0_i32_0 = arith.constant 0 : i32
    %c0_i32_1 = arith.constant 0 : i32
    %c0_i32_2 = arith.constant 0 : i32
    return %c0_i32, %c0_i32_0, %c0_i32_1 : i32, i32, i32
  }
  func.func @transform_12(%arg0: i32) -> (i32, i32, i32) {
    %c0_i32 = arith.constant 0 : i32
    %c0_i32_0 = arith.constant 0 : i32
    %c0_i32_1 = arith.constant 0 : i32
    %c0_i32_2 = arith.constant 0 : i32
    return %c0_i32, %c0_i32_0, %c0_i32_1 : i32, i32, i32
  }
  func.func @transform_13(%arg0: i32) -> (i32, i32, i32) {
    %c0_i32 = arith.constant 0 : i32
    %c0_i32_0 = arith.constant 0 : i32
    %c0_i32_1 = arith.constant 0 : i32
    %c0_i32_2 = arith.constant 0 : i32
    return %c0_i32, %c0_i32_0, %c0_i32_1 : i32, i32, i32
  }
  func.func @transform_14(%arg0: i32) -> (i32, i32, i32) {
    %c0_i32 = arith.constant 0 : i32
    %c0_i32_0 = arith.constant 0 : i32
    %c0_i32_1 = arith.constant 0 : i32
    %c0_i32_2 = arith.constant 0 : i32
    return %c0_i32, %c0_i32_0, %c0_i32_1 : i32, i32, i32
  }
  func.func @transform_15(%arg0: i32) -> (i32, i32, i32) {
    %c0_i32 = arith.constant 0 : i32
    %c0_i32_0 = arith.constant 0 : i32
    %c0_i32_1 = arith.constant 0 : i32
    %c0_i32_2 = arith.constant 0 : i32
    return %c0_i32, %c0_i32_0, %c0_i32_1 : i32, i32, i32
  }
  func.func @transform_16(%arg0: i32) -> (i32, i32) {
    %c0_i32 = arith.constant 0 : i32
    %c0_i32_0 = arith.constant 0 : i32
    %c0_i32_1 = arith.constant 0 : i32
    return %c0_i32, %c0_i32_0 : i32, i32
  }
  func.func @transform_17(%arg0: i32) -> (i32, i32) {
    %c0_i32 = arith.constant 0 : i32
    %c0_i32_0 = arith.constant 0 : i32
    %c0_i32_1 = arith.constant 0 : i32
    return %c0_i32, %c0_i32_0 : i32, i32
  }
  func.func @transform_18(%arg0: i32) -> (i32, i32) {
    %c0_i32 = arith.constant 0 : i32
    %c0_i32_0 = arith.constant 0 : i32
    %c0_i32_1 = arith.constant 0 : i32
    return %c0_i32, %c0_i32_0 : i32, i32
  }
  func.func @transform_19(%arg0: i32) -> (i32, i32) {
    %c0_i32 = arith.constant 0 : i32
    %c0_i32_0 = arith.constant 0 : i32
    %c0_i32_1 = arith.constant 0 : i32
    return %c0_i32, %c0_i32_0 : i32, i32
  }
  func.func @transform_20(%arg0: i32) -> (i32, i32, i32) {
    %c0_i32 = arith.constant 0 : i32
    %c0_i32_0 = arith.constant 0 : i32
    %c0_i32_1 = arith.constant 0 : i32
    return %arg0, %c0_i32, %c0_i32_0 : i32, i32, i32
  }
}

</mosaic_0001>

<llo_original>
// kernel: roberta_regressor_forward.1
$region0: #{roberta_regressor_forward.1}
  #allocation0 [shape = 'u32[]', space=smem, size = 0x4, offset = 0x4, fixed_abs, tag = 'smem constant byte address 0x4 - core index']
  #allocation1 [shape = 'u32[144,128]{1,0:T(1,128)}', space=vmem, size = 0x12000, scoped, tag = 'internal scratch']
  #allocation2 [shape = 'f32[1,1]{1,0:T(1,128)S(1)}', space=vmem, size = 0x200, scoped, tag = 'scoped memory for roberta_regressor_forward.1']
  %s0 = inlined_call_operand.vmem [shape: f32[2,8,128], index: 0, kind: input, shape index: {}]
  %s1 = inlined_call_operand.vmem [shape: f32[2,1,8], index: 1, kind: input, shape index: {}]
  %s2 = inlined_call_operand.vmem [shape: f32[1,128], index: 2, kind: input, shape index: {}]
  %s3 = inlined_call_operand.vmem [shape: f32[1,128], index: 3, kind: input, shape index: {}]
  %s4 = inlined_call_operand.vmem [shape: bf16[2,12,128,32], index: 4, kind: input, shape index: {}]
  %s5 = inlined_call_operand.vmem [shape: f32[2,12,1,32], index: 5, kind: input, shape index: {}]
  %s6 = inlined_call_operand.vmem [shape: bf16[2,4,32,128], index: 6, kind: input, shape index: {}]
  %s7 = inlined_call_operand.vmem [shape: f32[2,1,128], index: 7, kind: input, shape index: {}]
  %s8 = inlined_call_operand.vmem [shape: f32[2,1,128], index: 8, kind: input, shape index: {}]
  %s9 = inlined_call_operand.vmem [shape: f32[2,1,128], index: 9, kind: input, shape index: {}]
  %s10 = inlined_call_operand.vmem [shape: bf16[2,128,512], index: 10, kind: input, shape index: {}]
  %s11 = inlined_call_operand.vmem [shape: f32[2,1,512], index: 11, kind: input, shape index: {}]
  %s12 = inlined_call_operand.vmem [shape: bf16[2,512,128], index: 12, kind: input, shape index: {}]
  %s13 = inlined_call_operand.vmem [shape: f32[2,1,128], index: 13, kind: input, shape index: {}]
  %s14 = inlined_call_operand.vmem [shape: f32[2,1,128], index: 14, kind: input, shape index: {}]
  %s15 = inlined_call_operand.vmem [shape: f32[2,1,128], index: 15, kind: input, shape index: {}]
  %s16 = inlined_call_operand.vmem [shape: bf16[128,128], index: 16, kind: input, shape index: {}]
  %s17 = inlined_call_operand.vmem [shape: f32[1,128], index: 17, kind: input, shape index: {}]
  %s18 = inlined_call_operand.vmem [shape: f32[1,128], index: 18, kind: input, shape index: {}]
  %s19 = inlined_call_operand.<no memory space> [shape: f32[1,1], index: 19, kind: input, shape index: {}]
  %s20 = inlined_call_operand.vmem [shape: f32[2,1,1], index: 20, kind: output, shape index: {}]
  %s21 = sld [smem:[#allocation0]]
  $region113: #{roberta_regressor_forward.1} parent=0
    _
  %s23 = ssub.s32 1, %s21
  %s24 = scalar_select 0, %s23, %s21
  %v25 = vstv %s19
  %26 = vst [vmem:[#allocation2] sm:$0x1] %v25
  loop: start=0, step=1, limit=4
  $region2: #{roberta_regressor_forward.1} parent=0 // loop_pre_header
    _
  $region3: #{roberta_regressor_forward.1} parent=0 // loop_header
    %s28 = sphi 0, %s32
    %p29 = scmp.ge.s32.totalorder %s28, 4
    %s38 = sphi 0, %s40
    %s41 = sphi 0, %s38
    %s42 = sphi 0, %s41
    %s58 = sphi 0, %s42
    %s64 = sphi 0, %s66
    %s67 = sphi 0, %s64
    %s68 = sphi 0, %s67
    %s84 = sphi 0, %s68
    %s88 = sphi 0, %s88
    %s90 = sphi 0, %s88
    %s91 = sphi 0, %s90
    %s105 = sphi 0, %s91
    %s109 = sphi 0, %s109
    %s111 = sphi 0, %s109
    %s112 = sphi 0, %s111
    %s126 = sphi 0, %s112
    %s130 = sphi 0, %s130
    %s132 = sphi 0, %s130
    %s133 = sphi 0, %s132
    %s147 = sphi 0, %s133
    %s151 = sphi 0, %s151
    %s153 = sphi 0, %s151
    %s154 = sphi 0, %s153
    %s168 = sphi 0, %s154
    %s172 = sphi 0, %s172
    %s174 = sphi 0, %s172
    %s175 = sphi 0, %s174
    %s189 = sphi 0, %s175
    %s193 = sphi 0, %s193
    %s195 = sphi 0, %s193
    %s196 = sphi 0, %s195
    %s210 = sphi 0, %s196
    %s214 = sphi 0, %s214
    %s216 = sphi 0, %s214
    %s217 = sphi 0, %s216
    %s231 = sphi 0, %s217
    %s235 = sphi 0, %s235
    %s237 = sphi 0, %s235
    %s238 = sphi 0, %s237
    %s252 = sphi 0, %s238
    %s256 = sphi 0, %s256
    %s258 = sphi 0, %s256
    %s259 = sphi 0, %s258
    %s273 = sphi 0, %s259
    %s277 = sphi 0, %s277
    %s279 = sphi 0, %s277
    %s280 = sphi 0, %s279
    %s294 = sphi 0, %s280
    %s298 = sphi 0, %s298
    %s300 = sphi 0, %s298
    %s301 = sphi 0, %s300
    %s315 = sphi 0, %s301
    %s319 = sphi 0, %s319
    %s321 = sphi 0, %s319
    %s322 = sphi 0, %s321
    %s336 = sphi 0, %s322
    %s340 = sphi 0, %s340
    %s342 = sphi 0, %s340
    %s343 = sphi 0, %s342
    %s357 = sphi 0, %s343
    %s361 = sphi 0, %s361
    %s363 = sphi 0, %s361
    %s364 = sphi 0, %s363
    %s378 = sphi 0, %s364
    %s382 = sphi 0, %s382
    %s384 = sphi 0, %s382
    %s385 = sphi 0, %s384
    %s399 = sphi 0, %s385
    %s403 = sphi 0, %s403
    %s405 = sphi 0, %s403
    %s406 = sphi 0, %s405
    %s420 = sphi 0, %s406
    %s424 = sphi 0, %s424
    %s426 = sphi 0, %s424
    %s427 = sphi 0, %s426
    %s441 = sphi 0, %s427
    %s445 = sphi 0, %s445
    %s447 = sphi 0, %s445
    %s448 = sphi 0, %s447
    %s462 = sphi 0, %s448
    %s468 = sphi 0, %s470
    %s471 = sphi 0, %s468
    %s472 = sphi 0, %s471
    %s488 = sphi 0, %s472
  $region4: #{roberta_regressor_forward.1} parent=0 // loop_header_branch
    %31 = sbr.rel (%p29) target = $region8
  $region5: #{roberta_regressor_forward.1} parent=0 // loop_body
    %s33 = ssub.s32 %s28, 1
    %s34 = ssub.s32 %s28, 2
    %s35 = sadd.s32 %s28, 1
    %s36 = ssub.s32 %s28, %s35
    %p37 = scmp.eq.s32.totalorder %s36, 0
    %s39 = sadd.s32 %s38, 1
    %s40 = scalar_select %p37, %s38, %s39
    %p43 = pneg %p37
    %p44 = scmp.eq.s32.totalorder %s28, 1
    %p45 = por %p43, %p44
    %p46 = scmp.ne.s32.totalorder %s38, %s41
    %p47 = scmp.eq.s32.totalorder %s28, 0
    %p48 = por %p46, %p47
    %p49 = scmp.ne.s32.totalorder %s38, %s41
    %p50 = scmp.eq.s32.totalorder %s33, 1
    %p51 = por %p49, %p50
    %p52 = scmp.ne.s32.totalorder %s41, %s42
    %p53 = scmp.eq.s32.totalorder %s33, 0
    %p54 = por %p52, %p53
    %p55 = scmp.ne.s32.totalorder %s41, %s42
    %p56 = scmp.eq.s32.totalorder %s34, 1
    %p57 = por %p55, %p56
    %p59 = scmp.ne.s32.totalorder %s42, %s58
    %p60 = scmp.eq.s32.totalorder %s34, 0
    %p61 = por %p59, %p60
    %s62 = ssub.s32 %s28, %s35
    %p63 = scmp.eq.s32.totalorder %s62, 0
    %s65 = sadd.s32 %s64, 1
    %s66 = scalar_select %p63, %s64, %s65
    %p69 = pneg %p63
    %p70 = scmp.eq.s32.totalorder %s28, 1
    %p71 = por %p69, %p70
    %p72 = scmp.ne.s32.totalorder %s64, %s67
    %p73 = scmp.eq.s32.totalorder %s28, 0
    %p74 = por %p72, %p73
    %p75 = scmp.ne.s32.totalorder %s64, %s67
    %p76 = scmp.eq.s32.totalorder %s33, 1
    %p77 = por %p75, %p76
    %p78 = scmp.ne.s32.totalorder %s67, %s68
    %p79 = scmp.eq.s32.totalorder %s33, 0
    %p80 = por %p78, %p79
    %p81 = scmp.ne.s32.totalorder %s67, %s68
    %p82 = scmp.eq.s32.totalorder %s34, 1
    %p83 = por %p81, %p82
    %p85 = scmp.ne.s32.totalorder %s68, %s84
    %p86 = scmp.eq.s32.totalorder %s34, 0
    %p87 = por %p85, %p86
    %s89 = sadd.s32 %s88, 1
    %p92 = scmp.eq.s32.totalorder %s28, 1
    %p93 = scmp.ne.s32.totalorder %s88, %s90
    %p94 = scmp.eq.s32.totalorder %s28, 0
    %p95 = por %p93, %p94
    %p96 = scmp.ne.s32.totalorder %s88, %s90
    %p97 = scmp.eq.s32.totalorder %s33, 1
    %p98 = por %p96, %p97
    %p99 = scmp.ne.s32.totalorder %s90, %s91
    %p100 = scmp.eq.s32.totalorder %s33, 0
    %p101 = por %p99, %p100
    %p102 = scmp.ne.s32.totalorder %s90, %s91
    %p103 = scmp.eq.s32.totalorder %s34, 1
    %p104 = por %p102, %p103
    %p106 = scmp.ne.s32.totalorder %s91, %s105
    %p107 = scmp.eq.s32.totalorder %s34, 0
    %p108 = por %p106, %p107
    %s110 = sadd.s32 %s109, 1
    %p113 = scmp.eq.s32.totalorder %s28, 1
    %p114 = scmp.ne.s32.totalorder %s109, %s111
    %p115 = scmp.eq.s32.totalorder %s28, 0
    %p116 = por %p114, %p115
    %p117 = scmp.ne.s32.totalorder %s109, %s111
    %p118 = scmp.eq.s32.totalorder %s33, 1
    %p119 = por %p117, %p118
    %p120 = scmp.ne.s32.totalorder %s111, %s112
    %p121 = scmp.eq.s32.totalorder %s33, 0
    %p122 = por %p120, %p121
    %p123 = scmp.ne.s32.totalorder %s111, %s112
    %p124 = scmp.eq.s32.totalorder %s34, 1
    %p125 = por %p123, %p124
    %p127 = scmp.ne.s32.totalorder %s112, %s126
    %p128 = scmp.eq.s32.totalorder %s34, 0
    %p129 = por %p127, %p128
    %s131 = sadd.s32 %s130, 1
    %p134 = scmp.eq.s32.totalorder %s28, 1
    %p135 = scmp.ne.s32.totalorder %s130, %s132
    %p136 = scmp.eq.s32.totalorder %s28, 0
    %p137 = por %p135, %p136
    %p138 = scmp.ne.s32.totalorder %s130, %s132
    %p139 = scmp.eq.s32.totalorder %s33, 1
    %p140 = por %p138, %p139
    %p141 = scmp.ne.s32.totalorder %s132, %s133
    %p142 = scmp.eq.s32.totalorder %s33, 0
    %p143 = por %p141, %p142
    %p144 = scmp.ne.s32.totalorder %s132, %s133
    %p145 = scmp.eq.s32.totalorder %s34, 1
    %p146 = por %p144, %p145
    %p148 = scmp.ne.s32.totalorder %s133, %s147
    %p149 = scmp.eq.s32.totalorder %s34, 0
    %p150 = por %p148, %p149
    %s152 = sadd.s32 %s151, 1
    %p155 = scmp.eq.s32.totalorder %s28, 1
    %p156 = scmp.ne.s32.totalorder %s151, %s153
    %p157 = scmp.eq.s32.totalorder %s28, 0
    %p158 = por %p156, %p157
    %p159 = scmp.ne.s32.totalorder %s151, %s153
    %p160 = scmp.eq.s32.totalorder %s33, 1
    %p161 = por %p159, %p160
    %p162 = scmp.ne.s32.totalorder %s153, %s154
    %p163 = scmp.eq.s32.totalorder %s33, 0
    %p164 = por %p162, %p163
    %p165 = scmp.ne.s32.totalorder %s153, %s154
    %p166 = scmp.eq.s32.totalorder %s34, 1
    %p167 = por %p165, %p166
    %p169 = scmp.ne.s32.totalorder %s154, %s168
    %p170 = scmp.eq.s32.totalorder %s34, 0
    %p171 = por %p169, %p170
    %s173 = sadd.s32 %s172, 1
    %p176 = scmp.eq.s32.totalorder %s28, 1
    %p177 = scmp.ne.s32.totalorder %s172, %s174
    %p178 = scmp.eq.s32.totalorder %s28, 0
    %p179 = por %p177, %p178
    %p180 = scmp.ne.s32.totalorder %s172, %s174
    %p181 = scmp.eq.s32.totalorder %s33, 1
    %p182 = por %p180, %p181
    %p183 = scmp.ne.s32.totalorder %s174, %s175
    %p184 = scmp.eq.s32.totalorder %s33, 0
    %p185 = por %p183, %p184
    %p186 = scmp.ne.s32.totalorder %s174, %s175
    %p187 = scmp.eq.s32.totalorder %s34, 1
    %p188 = por %p186, %p187
    %p190 = scmp.ne.s32.totalorder %s175, %s189
    %p191 = scmp.eq.s32.totalorder %s34, 0
    %p192 = por %p190, %p191
    %s194 = sadd.s32 %s193, 1
    %p197 = scmp.eq.s32.totalorder %s28, 1
    %p198 = scmp.ne.s32.totalorder %s193, %s195
    %p199 = scmp.eq.s32.totalorder %s28, 0
    %p200 = por %p198, %p199
    %p201 = scmp.ne.s32.totalorder %s193, %s195
    %p202 = scmp.eq.s32.totalorder %s33, 1
    %p203 = por %p201, %p202
    %p204 = scmp.ne.s32.totalorder %s195, %s196
    %p205 = scmp.eq.s32.totalorder %s33, 0
    %p206 = por %p204, %p205
    %p207 = scmp.ne.s32.totalorder %s195, %s196
    %p208 = scmp.eq.s32.totalorder %s34, 1
    %p209 = por %p207, %p208
    %p211 = scmp.ne.s32.totalorder %s196, %s210
    %p212 = scmp.eq.s32.totalorder %s34, 0
    %p213 = por %p211, %p212
    %s215 = sadd.s32 %s214, 1
    %p218 = scmp.eq.s32.totalorder %s28, 1
    %p219 = scmp.ne.s32.totalorder %s214, %s216
    %p220 = scmp.eq.s32.totalorder %s28, 0
    %p221 = por %p219, %p220
    %p222 = scmp.ne.s32.totalorder %s214, %s216
    %p223 = scmp.eq.s32.totalorder %s33, 1
    %p224 = por %p222, %p223
    %p225 = scmp.ne.s32.totalorder %s216, %s217
    %p226 = scmp.eq.s32.totalorder %s33, 0
    %p227 = por %p225, %p226
    %p228 = scmp.ne.s32.totalorder %s216, %s217
    %p229 = scmp.eq.s32.totalorder %s34, 1
    %p230 = por %p228, %p229
    %p232 = scmp.ne.s32.totalorder %s217, %s231
    %p233 = scmp.eq.s32.totalorder %s34, 0
    %p234 = por %p232, %p233
    %s236 = sadd.s32 %s235, 1
    %p239 = scmp.eq.s32.totalorder %s28, 1
    %p240 = scmp.ne.s32.totalorder %s235, %s237
    %p241 = scmp.eq.s32.totalorder %s28, 0
    %p242 = por %p240, %p241
    %p243 = scmp.ne.s32.totalorder %s235, %s237
    %p244 = scmp.eq.s32.totalorder %s33, 1
    %p245 = por %p243, %p244
    %p246 = scmp.ne.s32.totalorder %s237, %s238
    %p247 = scmp.eq.s32.totalorder %s33, 0
    %p248 = por %p246, %p247
    %p249 = scmp.ne.s32.totalorder %s237, %s238
    %p250 = scmp.eq.s32.totalorder %s34, 1
    %p251 = por %p249, %p250
    %p253 = scmp.ne.s32.totalorder %s238, %s252
    %p254 = scmp.eq.s32.totalorder %s34, 0
    %p255 = por %p253, %p254
    %s257 = sadd.s32 %s256, 1
    %p260 = scmp.eq.s32.totalorder %s28, 1
    %p261 = scmp.ne.s32.totalorder %s256, %s258
    %p262 = scmp.eq.s32.totalorder %s28, 0
    %p263 = por %p261, %p262
    %p264 = scmp.ne.s32.totalorder %s256, %s258
    %p265 = scmp.eq.s32.totalorder %s33, 1
    %p266 = por %p264, %p265
    %p267 = scmp.ne.s32.totalorder %s258, %s259
    %p268 = scmp.eq.s32.totalorder %s33, 0
    %p269 = por %p267, %p268
    %p270 = scmp.ne.s32.totalorder %s258, %s259
    %p271 = scmp.eq.s32.totalorder %s34, 1
    %p272 = por %p270, %p271
    %p274 = scmp.ne.s32.totalorder %s259, %s273
    %p275 = scmp.eq.s32.totalorder %s34, 0
    %p276 = por %p274, %p275
    %s278 = sadd.s32 %s277, 1
    %p281 = scmp.eq.s32.totalorder %s28, 1
    %p282 = scmp.ne.s32.totalorder %s277, %s279
    %p283 = scmp.eq.s32.totalorder %s28, 0
    %p284 = por %p282, %p283
    %p285 = scmp.ne.s32.totalorder %s277, %s279
    %p286 = scmp.eq.s32.totalorder %s33, 1
    %p287 = por %p285, %p286
    %p288 = scmp.ne.s32.totalorder %s279, %s280
    %p289 = scmp.eq.s32.totalorder %s33, 0
    %p290 = por %p288, %p289
    %p291 = scmp.ne.s32.totalorder %s279, %s280
    %p292 = scmp.eq.s32.totalorder %s34, 1
    %p293 = por %p291, %p292
    %p295 = scmp.ne.s32.totalorder %s280, %s294
    %p296 = scmp.eq.s32.totalorder %s34, 0
    %p297 = por %p295, %p296
    %s299 = sadd.s32 %s298, 1
    %p302 = scmp.eq.s32.totalorder %s28, 1
    %p303 = scmp.ne.s32.totalorder %s298, %s300
    %p304 = scmp.eq.s32.totalorder %s28, 0
    %p305 = por %p303, %p304
    %p306 = scmp.ne.s32.totalorder %s298, %s300
    %p307 = scmp.eq.s32.totalorder %s33, 1
    %p308 = por %p306, %p307
    %p309 = scmp.ne.s32.totalorder %s300, %s301
    %p310 = scmp.eq.s32.totalorder %s33, 0
    %p311 = por %p309, %p310
    %p312 = scmp.ne.s32.totalorder %s300, %s301
    %p313 = scmp.eq.s32.totalorder %s34, 1
    %p314 = por %p312, %p313
    %p316 = scmp.ne.s32.totalorder %s301, %s315
    %p317 = scmp.eq.s32.totalorder %s34, 0
    %p318 = por %p316, %p317
    %s320 = sadd.s32 %s319, 1
    %p323 = scmp.eq.s32.totalorder %s28, 1
    %p324 = scmp.ne.s32.totalorder %s319, %s321
    %p325 = scmp.eq.s32.totalorder %s28, 0
    %p326 = por %p324, %p325
    %p327 = scmp.ne.s32.totalorder %s319, %s321
    %p328 = scmp.eq.s32.totalorder %s33, 1
    %p329 = por %p327, %p328
    %p330 = scmp.ne.s32.totalorder %s321, %s322
    %p331 = scmp.eq.s32.totalorder %s33, 0
    %p332 = por %p330, %p331
    %p333 = scmp.ne.s32.totalorder %s321, %s322
    %p334 = scmp.eq.s32.totalorder %s34, 1
    %p335 = por %p333, %p334
    %p337 = scmp.ne.s32.totalorder %s322, %s336
    %p338 = scmp.eq.s32.totalorder %s34, 0
    %p339 = por %p337, %p338
    %s341 = sadd.s32 %s340, 1
    %p344 = scmp.eq.s32.totalorder %s28, 1
    %p345 = scmp.ne.s32.totalorder %s340, %s342
    %p346 = scmp.eq.s32.totalorder %s28, 0
    %p347 = por %p345, %p346
    %p348 = scmp.ne.s32.totalorder %s340, %s342
    %p349 = scmp.eq.s32.totalorder %s33, 1
    %p350 = por %p348, %p349
    %p351 = scmp.ne.s32.totalorder %s342, %s343
    %p352 = scmp.eq.s32.totalorder %s33, 0
    %p353 = por %p351, %p352
    %p354 = scmp.ne.s32.totalorder %s342, %s343
    %p355 = scmp.eq.s32.totalorder %s34, 1
    %p356 = por %p354, %p355
    %p358 = scmp.ne.s32.totalorder %s343, %s357
    %p359 = scmp.eq.s32.totalorder %s34, 0
    %p360 = por %p358, %p359
    %s362 = sadd.s32 %s361, 1
    %p365 = scmp.eq.s32.totalorder %s28, 1
    %p366 = scmp.ne.s32.totalorder %s361, %s363
    %p367 = scmp.eq.s32.totalorder %s28, 0
    %p368 = por %p366, %p367
    %p369 = scmp.ne.s32.totalorder %s361, %s363
    %p370 = scmp.eq.s32.totalorder %s33, 1
    %p371 = por %p369, %p370
    %p372 = scmp.ne.s32.totalorder %s363, %s364
    %p373 = scmp.eq.s32.totalorder %s33, 0
    %p374 = por %p372, %p373
    %p375 = scmp.ne.s32.totalorder %s363, %s364
    %p376 = scmp.eq.s32.totalorder %s34, 1
    %p377 = por %p375, %p376
    %p379 = scmp.ne.s32.totalorder %s364, %s378
    %p380 = scmp.eq.s32.totalorder %s34, 0
    %p381 = por %p379, %p380
    %s383 = sadd.s32 %s382, 1
    %p386 = scmp.eq.s32.totalorder %s28, 1
    %p387 = scmp.ne.s32.totalorder %s382, %s384
    %p388 = scmp.eq.s32.totalorder %s28, 0
    %p389 = por %p387, %p388
    %p390 = scmp.ne.s32.totalorder %s382, %s384
    %p391 = scmp.eq.s32.totalorder %s33, 1
    %p392 = por %p390, %p391
    %p393 = scmp.ne.s32.totalorder %s384, %s385
    %p394 = scmp.eq.s32.totalorder %s33, 0
    %p395 = por %p393, %p394
    %p396 = scmp.ne.s32.totalorder %s384, %s385
    %p397 = scmp.eq.s32.totalorder %s34, 1
    %p398 = por %p396, %p397
    %p400 = scmp.ne.s32.totalorder %s385, %s399
    %p401 = scmp.eq.s32.totalorder %s34, 0
    %p402 = por %p400, %p401
    %s404 = sadd.s32 %s403, 1
    %p407 = scmp.eq.s32.totalorder %s28, 1
    %p408 = scmp.ne.s32.totalorder %s403, %s405
    %p409 = scmp.eq.s32.totalorder %s28, 0
    %p410 = por %p408, %p409
    %p411 = scmp.ne.s32.totalorder %s403, %s405
    %p412 = scmp.eq.s32.totalorder %s33, 1
    %p413 = por %p411, %p412
    %p414 = scmp.ne.s32.totalorder %s405, %s406
    %p415 = scmp.eq.s32.totalorder %s33, 0
    %p416 = por %p414, %p415
    %p417 = scmp.ne.s32.totalorder %s405, %s406
    %p418 = scmp.eq.s32.totalorder %s34, 1
    %p419 = por %p417, %p418
    %p421 = scmp.ne.s32.totalorder %s406, %s420
    %p422 = scmp.eq.s32.totalorder %s34, 0
    %p423 = por %p421, %p422
    %s425 = sadd.s32 %s424, 1
    %p428 = scmp.eq.s32.totalorder %s28, 1
    %p429 = scmp.ne.s32.totalorder %s424, %s426
    %p430 = scmp.eq.s32.totalorder %s28, 0
    %p431 = por %p429, %p430
    %p432 = scmp.ne.s32.totalorder %s424, %s426
    %p433 = scmp.eq.s32.totalorder %s33, 1
    %p434 = por %p432, %p433
    %p435 = scmp.ne.s32.totalorder %s426, %s427
    %p436 = scmp.eq.s32.totalorder %s33, 0
    %p437 = por %p435, %p436
    %p438 = scmp.ne.s32.totalorder %s426, %s427
    %p439 = scmp.eq.s32.totalorder %s34, 1
    %p440 = por %p438, %p439
    %p442 = scmp.ne.s32.totalorder %s427, %s441
    %p443 = scmp.eq.s32.totalorder %s34, 0
    %p444 = por %p442, %p443
    %s446 = sadd.s32 %s445, 1
    %p449 = scmp.eq.s32.totalorder %s28, 1
    %p450 = scmp.ne.s32.totalorder %s445, %s447
    %p451 = scmp.eq.s32.totalorder %s28, 0
    %p452 = por %p450, %p451
    %p453 = scmp.ne.s32.totalorder %s445, %s447
    %p454 = scmp.eq.s32.totalorder %s33, 1
    %p455 = por %p453, %p454
    %p456 = scmp.ne.s32.totalorder %s447, %s448
    %p457 = scmp.eq.s32.totalorder %s33, 0
    %p458 = por %p456, %p457
    %p459 = scmp.ne.s32.totalorder %s447, %s448
    %p460 = scmp.eq.s32.totalorder %s34, 1
    %p461 = por %p459, %p460
    %p463 = scmp.ne.s32.totalorder %s448, %s462
    %p464 = scmp.eq.s32.totalorder %s34, 0
    %p465 = por %p463, %p464
    %s466 = ssub.s32 %s28, %s35
    %p467 = scmp.eq.s32.totalorder %s466, 0
    %s469 = sadd.s32 %s468, 1
    %s470 = scalar_select %p467, %s468, %s469
    %p473 = pneg %p467
    %p474 = scmp.eq.s32.totalorder %s28, 1
    %p475 = por %p473, %p474
    %p476 = scmp.ne.s32.totalorder %s468, %s471
    %p477 = scmp.eq.s32.totalorder %s28, 0
    %p478 = por %p476, %p477
    %p479 = scmp.ne.s32.totalorder %s468, %s471
    %p480 = scmp.eq.s32.totalorder %s33, 1
    %p481 = por %p479, %p480
    %p482 = scmp.ne.s32.totalorder %s471, %s472
    %p483 = scmp.eq.s32.totalorder %s33, 0
    %p484 = por %p482, %p483
    %p485 = scmp.ne.s32.totalorder %s471, %s472
    %p486 = scmp.eq.s32.totalorder %s34, 1
    %p487 = por %p485, %p486
    %p489 = scmp.ne.s32.totalorder %s472, %s488
    %p490 = scmp.eq.s32.totalorder %s34, 0
    %p491 = por %p489, %p490
    %p492 = scmp.le.s32.totalorder 1, %s28
    %p493 = scmp.lt.s32.totalorder %s28, 3
    %p494 = pnand %p492, %p493
    %p495 = pneg %p494
    // Predicated region
    $region9: #{roberta_regressor_forward.1} parent=5 // pred_check
      _
    $region10: #{roberta_regressor_forward.1} parent=5 // pred_check_branch
      %497 = sbr.rel (%p494) target = $region12
    $region11: #{roberta_regressor_forward.1} parent=5 // pred_region
      %s498 = ssub.s32 %s28, 1
      // Predicated region
      $region13: #{roberta_regressor_forward.1} parent=11 // pred_check
        %p499 = pneg %p101
      $region14: #{roberta_regressor_forward.1} parent=11 // pred_check_branch
        %501 = sbr.rel (%p499) target = $region16
      $region15: #{roberta_regressor_forward.1} parent=11 // pred_region
        _
      $region16: #{roberta_regressor_forward.1} parent=11 // pred_fallthru
        _
      // Predicated region
      $region17: #{roberta_regressor_forward.1} parent=11 // pred_check
        %p502 = pneg %p122
      $region18: #{roberta_regressor_forward.1} parent=11 // pred_check_branch
        %504 = sbr.rel (%p502) target = $region20
      $region19: #{roberta_regressor_forward.1} parent=11 // pred_region
        _
      $region20: #{roberta_regressor_forward.1} parent=11 // pred_fallthru
        _
      // Predicated region
      $region21: #{roberta_regressor_forward.1} parent=11 // pred_check
        %p505 = pneg %p143
      $region22: #{roberta_regressor_forward.1} parent=11 // pred_check_branch
        %507 = sbr.rel (%p505) target = $region24
      $region23: #{roberta_regressor_forward.1} parent=11 // pred_region
        _
      $region24: #{roberta_regressor_forward.1} parent=11 // pred_fallthru
        _
      // Predicated region
      $region25: #{roberta_regressor_forward.1} parent=11 // pred_check
        %p508 = pneg %p164
      $region26: #{roberta_regressor_forward.1} parent=11 // pred_check_branch
        %510 = sbr.rel (%p508) target = $region28
      $region27: #{roberta_regressor_forward.1} parent=11 // pred_region
        _
      $region28: #{roberta_regressor_forward.1} parent=11 // pred_fallthru
        _
      // Predicated region
      $region29: #{roberta_regressor_forward.1} parent=11 // pred_check
        %p511 = pneg %p185
      $region30: #{roberta_regressor_forward.1} parent=11 // pred_check_branch
        %513 = sbr.rel (%p511) target = $region32
      $region31: #{roberta_regressor_forward.1} parent=11 // pred_region
        _
      $region32: #{roberta_regressor_forward.1} parent=11 // pred_fallthru
        _
      // Predicated region
      $region33: #{roberta_regressor_forward.1} parent=11 // pred_check
        %p514 = pneg %p206
      $region34: #{roberta_regressor_forward.1} parent=11 // pred_check_branch
        %516 = sbr.rel (%p514) target = $region36
      $region35: #{roberta_regressor_forward.1} parent=11 // pred_region
        _
      $region36: #{roberta_regressor_forward.1} parent=11 // pred_fallthru
        _
      // Predicated region
      $region37: #{roberta_regressor_forward.1} parent=11 // pred_check
        %p517 = pneg %p227
      $region38: #{roberta_regressor_forward.1} parent=11 // pred_check_branch
        %519 = sbr.rel (%p517) target = $region40
      $region39: #{roberta_regressor_forward.1} parent=11 // pred_region
        _
      $region40: #{roberta_regressor_forward.1} parent=11 // pred_fallthru
        _
      // Predicated region
      $region41: #{roberta_regressor_forward.1} parent=11 // pred_check
        %p520 = pneg %p248
      $region42: #{roberta_regressor_forward.1} parent=11 // pred_check_branch
        %522 = sbr.rel (%p520) target = $region44
      $region43: #{roberta_regressor_forward.1} parent=11 // pred_region
        _
      $region44: #{roberta_regressor_forward.1} parent=11 // pred_fallthru
        _
      // Predicated region
      $region45: #{roberta_regressor_forward.1} parent=11 // pred_check
        %p523 = pneg %p269
      $region46: #{roberta_regressor_forward.1} parent=11 // pred_check_branch
        %525 = sbr.rel (%p523) target = $region48
      $region47: #{roberta_regressor_forward.1} parent=11 // pred_region
        _
      $region48: #{roberta_regressor_forward.1} parent=11 // pred_fallthru
        _
      // Predicated region
      $region49: #{roberta_regressor_forward.1} parent=11 // pred_check
        %p526 = pneg %p290
      $region50: #{roberta_regressor_forward.1} parent=11 // pred_check_branch
        %528 = sbr.rel (%p526) target = $region52
      $region51: #{roberta_regressor_forward.1} parent=11 // pred_region
        _
      $region52: #{roberta_regressor_forward.1} parent=11 // pred_fallthru
        _
      // Predicated region
      $region53: #{roberta_regressor_forward.1} parent=11 // pred_check
        %p529 = pneg %p311
      $region54: #{roberta_regressor_forward.1} parent=11 // pred_check_branch
        %531 = sbr.rel (%p529) target = $region56
      $region55: #{roberta_regressor_forward.1} parent=11 // pred_region
        _
      $region56: #{roberta_regressor_forward.1} parent=11 // pred_fallthru
        _
      // Predicated region
      $region57: #{roberta_regressor_forward.1} parent=11 // pred_check
        %p532 = pneg %p332
      $region58: #{roberta_regressor_forward.1} parent=11 // pred_check_branch
        %534 = sbr.rel (%p532) target = $region60
      $region59: #{roberta_regressor_forward.1} parent=11 // pred_region
        _
      $region60: #{roberta_regressor_forward.1} parent=11 // pred_fallthru
        _
      // Predicated region
      $region61: #{roberta_regressor_forward.1} parent=11 // pred_check
        %p535 = pneg %p353
      $region62: #{roberta_regressor_forward.1} parent=11 // pred_check_branch
        %537 = sbr.rel (%p535) target = $region64
      $region63: #{roberta_regressor_forward.1} parent=11 // pred_region
        _
      $region64: #{roberta_regressor_forward.1} parent=11 // pred_fallthru
        _
      // Predicated region
      $region65: #{roberta_regressor_forward.1} parent=11 // pred_check
        %p538 = pneg %p374
      $region66: #{roberta_regressor_forward.1} parent=11 // pred_check_branch
        %540 = sbr.rel (%p538) target = $region68
      $region67: #{roberta_regressor_forward.1} parent=11 // pred_region
        _
      $region68: #{roberta_regressor_forward.1} parent=11 // pred_fallthru
        _
      // Predicated region
      $region69: #{roberta_regressor_forward.1} parent=11 // pred_check
        %p541 = pneg %p395
      $region70: #{roberta_regressor_forward.1} parent=11 // pred_check_branch
        %543 = sbr.rel (%p541) target = $region72
      $region71: #{roberta_regressor_forward.1} parent=11 // pred_region
        _
      $region72: #{roberta_regressor_forward.1} parent=11 // pred_fallthru
        _
      // Predicated region
      $region73: #{roberta_regressor_forward.1} parent=11 // pred_check
        %p544 = pneg %p416
      $region74: #{roberta_regressor_forward.1} parent=11 // pred_check_branch
        %546 = sbr.rel (%p544) target = $region76
      $region75: #{roberta_regressor_forward.1} parent=11 // pred_region
        _
      $region76: #{roberta_regressor_forward.1} parent=11 // pred_fallthru
        _
      // Predicated region
      $region77: #{roberta_regressor_forward.1} parent=11 // pred_check
        %p547 = pneg %p437
      $region78: #{roberta_regressor_forward.1} parent=11 // pred_check_branch
        %549 = sbr.rel (%p547) target = $region80
      $region79: #{roberta_regressor_forward.1} parent=11 // pred_region
        _
      $region80: #{roberta_regressor_forward.1} parent=11 // pred_fallthru
        _
      // Predicated region
      $region81: #{roberta_regressor_forward.1} parent=11 // pred_check
        %p550 = pneg %p458
      $region82: #{roberta_regressor_forward.1} parent=11 // pred_check_branch
        %552 = sbr.rel (%p550) target = $region84
      $region83: #{roberta_regressor_forward.1} parent=11 // pred_region
        _
      $region84: #{roberta_regressor_forward.1} parent=11 // pred_fallthru
        _
    $region12: #{roberta_regressor_forward.1} parent=5 // pred_fallthru
      _
    %p553 = scmp.lt.s32.totalorder %s28, 2
    // Predicated region
    $region85: #{roberta_regressor_forward.1} parent=5 // pred_check
      %p554 = pneg %p553
    $region86: #{roberta_regressor_forward.1} parent=5 // pred_check_branch
      %556 = sbr.rel (%p554) target = $region88
    $region87: #{roberta_regressor_forward.1} parent=5 // pred_region
      // Predicated region
      $region89: #{roberta_regressor_forward.1} parent=87 // pred_check
        %p557 = pneg %p48
      $region90: #{roberta_regressor_forward.1} parent=87 // pred_check_branch
        %559 = sbr.rel (%p557) target = $region92
      $region91: #{roberta_regressor_forward.1} parent=87 // pred_region
        %p560 = scmp.lt.s32.totalorder %s28, 1
        %s561 = scalar_select %p560, %s28, 1
        %s562 = smul.addr %s561, 8
        %s563 = scalar_lea.vmem %s0, %s562
      $region92: #{roberta_regressor_forward.1} parent=87 // pred_fallthru
        _
      // Predicated region
      $region93: #{roberta_regressor_forward.1} parent=87 // pred_check
        %p564 = pneg %p74
      $region94: #{roberta_regressor_forward.1} parent=87 // pred_check_branch
        %566 = sbr.rel (%p564) target = $region96
      $region95: #{roberta_regressor_forward.1} parent=87 // pred_region
        %p567 = scmp.lt.s32.totalorder %s28, 1
        %s568 = scalar_select %p567, %s28, 1
        %s569 = scalar_lea.vmem %s1, %s568
      $region96: #{roberta_regressor_forward.1} parent=87 // pred_fallthru
        _
    $region88: #{roberta_regressor_forward.1} parent=5 // pred_fallthru
      _
    %p570 = scmp.le.s32.totalorder 1, %s28
    %p571 = scmp.lt.s32.totalorder %s28, 3
    %p572 = pnand %p570, %p571
    %p573 = pneg %p572
    // Predicated region
    $region97: #{roberta_regressor_forward.1} parent=5 // pred_check
      _
    $region98: #{roberta_regressor_forward.1} parent=5 // pred_check_branch
      %575 = sbr.rel (%p572) target = $region100
    $region99: #{roberta_regressor_forward.1} parent=5 // pred_region
      %s576 = ssub.s32 %s28, 1
      %p577 = scmp.lt.s32.totalorder %s33, 1
      %s578 = scalar_select %p577, %s33, 1
      %s579 = smul.addr %s578, 8
      %s580 = scalar_lea.vmem %s0, %s579
      %p581 = pneg %p54
      %p582 = pneg %p51
      %p583 = scmp.lt.s32.totalorder %s33, 1
      %s584 = scalar_select %p583, %s33, 1
      %s585 = scalar_lea.vmem %s1, %s584
      %p586 = pneg %p80
      %p587 = pneg %p77
      %p588 = pneg %p101
      %p589 = pneg %p98
      %p590 = pneg %p122
      %p591 = pneg %p119
      %p592 = pneg %p143
      %p593 = pneg %p140
      %p594 = pneg %p164
      %p595 = pneg %p161
      %p596 = pneg %p185
      %p597 = pneg %p182
      %p598 = pneg %p206
      %p599 = pneg %p203
      %p600 = pneg %p227
      %p601 = pneg %p224
      %p602 = pneg %p248
      %p603 = pneg %p245
      %p604 = pneg %p269
      %p605 = pneg %p266
      %p606 = pneg %p290
      %p607 = pneg %p287
      %p608 = pneg %p311
      %p609 = pneg %p308
      %p610 = pneg %p332
      %p611 = pneg %p329
      %p612 = pneg %p353
      %p613 = pneg %p350
      %p614 = pneg %p374
      %p615 = pneg %p371
      %p616 = pneg %p395
      %p617 = pneg %p392
      %p618 = pneg %p416
      %p619 = pneg %p413
      %p620 = pneg %p437
      %p621 = pneg %p434
      %p622 = pneg %p458
      %p623 = pneg %p455
      %p624 = pneg %p484
      %p625 = pneg %p481
      %p626 = scmp.lt.s32.totalorder %s33, 1
      %s627 = scalar_select %p626, %s33, 1
      %s628 = scalar_lea.vmem %s20, %s627
      %p629 = scmp.lt.s32.totalorder %s33, 1
      %s630 = scalar_select %p629, %s33, 1
      %s631 = smul.addr %s630, 8
      %s632 = scalar_lea.vmem %s0, %s631
      %p633 = scmp.lt.s32.totalorder %s33, 1
      %s634 = scalar_select %p633, %s33, 1
      %s635 = scalar_lea.vmem %s1, %s634
      %p636 = scmp.lt.s32.totalorder %s33, 1
      %s637 = scalar_select %p636, %s33, 1
      %s638 = scalar_lea.vmem %s20, %s637
      %v640 = vld [vmem:[%s632] sm:$0xff]
      %v641 = vld [vmem:[%s2] sm:$0x1]
      %v642 = vld [vmem:[%s3] sm:$0x1]
      %643 = vadd.xlane.f32.xlu0 %v640
      %v644 = vpop.xlane.xlu0 %643
      %v645 = vrcp.pop 128.0
      %v646 = vmul.f32 %v644, %v645
      %v647 = vsub.f32 %v640, %v646
      %v648 = vmul.f32 %v647, %v647
      %649 = vadd.xlane.f32.xlu0 %v648
      %v650 = vpop.xlane.xlu0 %649
      %v651 = vmul.f32 %v650, %v645
      %v652 = vadd.f32 %v651, 1e-05
      %v653 = vrsqrt.pop %v652
      %v654 = vmul.f32 %v647, %v653
      %v656 = vlaneseq
      %v657 = vshrl.u32 %v656, 7
      %v658 = vsub.s32 0, %v657
      %v659 = vrot.slane %v641, %v658
      %v661 = vmul.f32 %v654, %v659
      %v663 = vlaneseq
      %v664 = vshrl.u32 %v663, 7
      %v665 = vsub.s32 0, %v664
      %v666 = vrot.slane %v642, %v665
      %v668 = vadd.f32 %v661, %v666
      %v669 = vld [vmem:[%s635] sm:$0x1]
      %v670 = vsub.f32 1.0, %v669
      %v671 = vmul.f32 %v670, -1e+09
      %v672 = vpack.c.bf16 %v668, %v668
      %v673 = vld [vmem:[%s4] sm:$0xf]
      %v674 = vld [vmem:[%s4 + $0x4] sm:$0xf]
      %v675 = vld [vmem:[%s4 + $0x8] sm:$0xf]
      %v676 = vld [vmem:[%s4 + $0xc] sm:$0xf]
      %v677 = vld [vmem:[%s4 + $0x10] sm:$0xf]
      %v678 = vld [vmem:[%s4 + $0x14] sm:$0xf]
      %v679 = vld [vmem:[%s4 + $0x18] sm:$0xf]
      %v680 = vld [vmem:[%s4 + $0x1c] sm:$0xf]
      %v681 = vld [vmem:[%s4 + $0x20] sm:$0xf]
      %v682 = vld [vmem:[%s4 + $0x24] sm:$0xf]
      %v683 = vld [vmem:[%s4 + $0x28] sm:$0xf]
      %v684 = vld [vmem:[%s4 + $0x2c] sm:$0xf]
      %v685 = vld [vmem:[%s4 + $0x30] sm:$0xf]
      %v686 = vld [vmem:[%s4 + $0x34] sm:$0xf]
      %v687 = vld [vmem:[%s4 + $0x38] sm:$0xf]
      %v688 = vld [vmem:[%s4 + $0x3c] sm:$0xf]
      %v689 = vld [vmem:[%s4 + $0x40] sm:$0xf]
      %v690 = vld [vmem:[%s4 + $0x44] sm:$0xf]
      %v691 = vld [vmem:[%s4 + $0x48] sm:$0xf]
      %v692 = vld [vmem:[%s4 + $0x4c] sm:$0xf]
      %v693 = vld [vmem:[%s4 + $0x50] sm:$0xf]
      %v694 = vld [vmem:[%s4 + $0x54] sm:$0xf]
      %v695 = vld [vmem:[%s4 + $0x58] sm:$0xf]
      %v696 = vld [vmem:[%s4 + $0x5c] sm:$0xf]
      %v697 = vld [vmem:[%s4 + $0x60] sm:$0xf]
      %v698 = vld [vmem:[%s4 + $0x64] sm:$0xf]
      %v699 = vld [vmem:[%s4 + $0x68] sm:$0xf]
      %v700 = vld [vmem:[%s4 + $0x6c] sm:$0xf]
      %v701 = vld [vmem:[%s4 + $0x70] sm:$0xf]
      %v702 = vld [vmem:[%s4 + $0x74] sm:$0xf]
      %v703 = vld [vmem:[%s4 + $0x78] sm:$0xf]
      %v704 = vld [vmem:[%s4 + $0x7c] sm:$0xf]
      %v705 = vld [vmem:[%s4 + $0x80] sm:$0xf]
      %v706 = vld [vmem:[%s4 + $0x84] sm:$0xf]
      %v707 = vld [vmem:[%s4 + $0x88] sm:$0xf]
      %v708 = vld [vmem:[%s4 + $0x8c] sm:$0xf]
      %v709 = vld [vmem:[%s4 + $0x90] sm:$0xf]
      %v710 = vld [vmem:[%s4 + $0x94] sm:$0xf]
      %v711 = vld [vmem:[%s4 + $0x98] sm:$0xf]
      %v712 = vld [vmem:[%s4 + $0x9c] sm:$0xf]
      %v713 = vld [vmem:[%s4 + $0xa0] sm:$0xf]
      %v714 = vld [vmem:[%s4 + $0xa4] sm:$0xf]
      %v715 = vld [vmem:[%s4 + $0xa8] sm:$0xf]
      %v716 = vld [vmem:[%s4 + $0xac] sm:$0xf]
      %v717 = vld [vmem:[%s4 + $0xb0] sm:$0xf]
      %v718 = vld [vmem:[%s4 + $0xb4] sm:$0xf]
      %v719 = vld [vmem:[%s4 + $0xb8] sm:$0xf]
      %v720 = vld [vmem:[%s4 + $0xbc] sm:$0xf]
      %v721 = vld [vmem:[%s4 + $0xc0] sm:$0xf]
      %v722 = vld [vmem:[%s4 + $0xc4] sm:$0xf]
      %v723 = vld [vmem:[%s4 + $0xc8] sm:$0xf]
      %v724 = vld [vmem:[%s4 + $0xcc] sm:$0xf]
      %v725 = vld [vmem:[%s4 + $0xd0] sm:$0xf]
      %v726 = vld [vmem:[%s4 + $0xd4] sm:$0xf]
      %v727 = vld [vmem:[%s4 + $0xd8] sm:$0xf]
      %v728 = vld [vmem:[%s4 + $0xdc] sm:$0xf]
      %v729 = vld [vmem:[%s4 + $0xe0] sm:$0xf]
      %v730 = vld [vmem:[%s4 + $0xe4] sm:$0xf]
      %v731 = vld [vmem:[%s4 + $0xe8] sm:$0xf]
      %v732 = vld [vmem:[%s4 + $0xec] sm:$0xf]
      %v733 = vld [vmem:[%s4 + $0xf0] sm:$0xf]
      %v734 = vld [vmem:[%s4 + $0xf4] sm:$0xf]
      %v735 = vld [vmem:[%s4 + $0xf8] sm:$0xf]
      %v736 = vld [vmem:[%s4 + $0xfc] sm:$0xf]
      %v737 = vld [vmem:[%s4 + $0x100] sm:$0xf]
      %v738 = vld [vmem:[%s4 + $0x104] sm:$0xf]
      %v739 = vld [vmem:[%s4 + $0x108] sm:$0xf]
      %v740 = vld [vmem:[%s4 + $0x10c] sm:$0xf]
      %v741 = vld [vmem:[%s4 + $0x110] sm:$0xf]
      %v742 = vld [vmem:[%s4 + $0x114] sm:$0xf]
      %v743 = vld [vmem:[%s4 + $0x118] sm:$0xf]
      %v744 = vld [vmem:[%s4 + $0x11c] sm:$0xf]
      %v745 = vld [vmem:[%s4 + $0x120] sm:$0xf]
      %v746 = vld [vmem:[%s4 + $0x124] sm:$0xf]
      %v747 = vld [vmem:[%s4 + $0x128] sm:$0xf]
      %v748 = vld [vmem:[%s4 + $0x12c] sm:$0xf]
      %v749 = vld [vmem:[%s4 + $0x130] sm:$0xf]
      %v750 = vld [vmem:[%s4 + $0x134] sm:$0xf]
      %v751 = vld [vmem:[%s4 + $0x138] sm:$0xf]
      %v752 = vld [vmem:[%s4 + $0x13c] sm:$0xf]
      %v753 = vld [vmem:[%s4 + $0x140] sm:$0xf]
      %v754 = vld [vmem:[%s4 + $0x144] sm:$0xf]
      %v755 = vld [vmem:[%s4 + $0x148] sm:$0xf]
      %v756 = vld [vmem:[%s4 + $0x14c] sm:$0xf]
      %v757 = vld [vmem:[%s4 + $0x150] sm:$0xf]
      %v758 = vld [vmem:[%s4 + $0x154] sm:$0xf]
      %v759 = vld [vmem:[%s4 + $0x158] sm:$0xf]
      %v760 = vld [vmem:[%s4 + $0x15c] sm:$0xf]
      %v761 = vld [vmem:[%s4 + $0x160] sm:$0xf]
      %v762 = vld [vmem:[%s4 + $0x164] sm:$0xf]
      %v763 = vld [vmem:[%s4 + $0x168] sm:$0xf]
      %v764 = vld [vmem:[%s4 + $0x16c] sm:$0xf]
      %v765 = vld [vmem:[%s4 + $0x170] sm:$0xf]
      %v766 = vld [vmem:[%s4 + $0x174] sm:$0xf]
      %v767 = vld [vmem:[%s4 + $0x178] sm:$0xf]
      %v768 = vld [vmem:[%s4 + $0x17c] sm:$0xf]
      %v769 = vld [vmem:[%s4 + $0x180] sm:$0xf]
      %v770 = vld [vmem:[%s4 + $0x184] sm:$0xf]
      %v771 = vld [vmem:[%s4 + $0x188] sm:$0xf]
      %v772 = vld [vmem:[%s4 + $0x18c] sm:$0xf]
      %v773 = vld [vmem:[%s4 + $0x190] sm:$0xf]
      %v774 = vld [vmem:[%s4 + $0x194] sm:$0xf]
      %v775 = vld [vmem:[%s4 + $0x198] sm:$0xf]
      %v776 = vld [vmem:[%s4 + $0x19c] sm:$0xf]
      %v777 = vld [vmem:[%s4 + $0x1a0] sm:$0xf]
      %v778 = vld [vmem:[%s4 + $0x1a4] sm:$0xf]
      %v779 = vld [vmem:[%s4 + $0x1a8] sm:$0xf]
      %v780 = vld [vmem:[%s4 + $0x1ac] sm:$0xf]
      %v781 = vld [vmem:[%s4 + $0x1b0] sm:$0xf]
      %v782 = vld [vmem:[%s4 + $0x1b4] sm:$0xf]
      %v783 = vld [vmem:[%s4 + $0x1b8] sm:$0xf]
      %v784 = vld [vmem:[%s4 + $0x1bc] sm:$0xf]
      %v785 = vld [vmem:[%s4 + $0x1c0] sm:$0xf]
      %v786 = vld [vmem:[%s4 + $0x1c4] sm:$0xf]
      %v787 = vld [vmem:[%s4 + $0x1c8] sm:$0xf]
      %v788 = vld [vmem:[%s4 + $0x1cc] sm:$0xf]
      %v789 = vld [vmem:[%s4 + $0x1d0] sm:$0xf]
      %v790 = vld [vmem:[%s4 + $0x1d4] sm:$0xf]
      %v791 = vld [vmem:[%s4 + $0x1d8] sm:$0xf]
      %v792 = vld [vmem:[%s4 + $0x1dc] sm:$0xf]
      %v793 = vld [vmem:[%s4 + $0x1e0] sm:$0xf]
      %v794 = vld [vmem:[%s4 + $0x1e4] sm:$0xf]
      %v795 = vld [vmem:[%s4 + $0x1e8] sm:$0xf]
      %v796 = vld [vmem:[%s4 + $0x1ec] sm:$0xf]
      %v797 = vld [vmem:[%s4 + $0x1f0] sm:$0xf]
      %v798 = vld [vmem:[%s4 + $0x1f4] sm:$0xf]
      %v799 = vld [vmem:[%s4 + $0x1f8] sm:$0xf]
      %v800 = vld [vmem:[%s4 + $0x1fc] sm:$0xf]
      %v801 = vld [vmem:[%s4 + $0x200] sm:$0xf]
      %v802 = vld [vmem:[%s4 + $0x204] sm:$0xf]
      %v803 = vld [vmem:[%s4 + $0x208] sm:$0xf]
      %v804 = vld [vmem:[%s4 + $0x20c] sm:$0xf]
      %v805 = vld [vmem:[%s4 + $0x210] sm:$0xf]
      %v806 = vld [vmem:[%s4 + $0x214] sm:$0xf]
      %v807 = vld [vmem:[%s4 + $0x218] sm:$0xf]
      %v808 = vld [vmem:[%s4 + $0x21c] sm:$0xf]
      %v809 = vld [vmem:[%s4 + $0x220] sm:$0xf]
      %v810 = vld [vmem:[%s4 + $0x224] sm:$0xf]
      %v811 = vld [vmem:[%s4 + $0x228] sm:$0xf]
      %v812 = vld [vmem:[%s4 + $0x22c] sm:$0xf]
      %v813 = vld [vmem:[%s4 + $0x230] sm:$0xf]
      %v814 = vld [vmem:[%s4 + $0x234] sm:$0xf]
      %v815 = vld [vmem:[%s4 + $0x238] sm:$0xf]
      %v816 = vld [vmem:[%s4 + $0x23c] sm:$0xf]
      %v817 = vld [vmem:[%s4 + $0x240] sm:$0xf]
      %v818 = vld [vmem:[%s4 + $0x244] sm:$0xf]
      %v819 = vld [vmem:[%s4 + $0x248] sm:$0xf]
      %v820 = vld [vmem:[%s4 + $0x24c] sm:$0xf]
      %v821 = vld [vmem:[%s4 + $0x250] sm:$0xf]
      %v822 = vld [vmem:[%s4 + $0x254] sm:$0xf]
      %v823 = vld [vmem:[%s4 + $0x258] sm:$0xf]
      %v824 = vld [vmem:[%s4 + $0x25c] sm:$0xf]
      %v825 = vld [vmem:[%s4 + $0x260] sm:$0xf]
      %v826 = vld [vmem:[%s4 + $0x264] sm:$0xf]
      %v827 = vld [vmem:[%s4 + $0x268] sm:$0xf]
      %v828 = vld [vmem:[%s4 + $0x26c] sm:$0xf]
      %v829 = vld [vmem:[%s4 + $0x270] sm:$0xf]
      %v830 = vld [vmem:[%s4 + $0x274] sm:$0xf]
      %v831 = vld [vmem:[%s4 + $0x278] sm:$0xf]
      %v832 = vld [vmem:[%s4 + $0x27c] sm:$0xf]
      %v833 = vld [vmem:[%s4 + $0x280] sm:$0xf]
      %v834 = vld [vmem:[%s4 + $0x284] sm:$0xf]
      %v835 = vld [vmem:[%s4 + $0x288] sm:$0xf]
      %v836 = vld [vmem:[%s4 + $0x28c] sm:$0xf]
      %v837 = vld [vmem:[%s4 + $0x290] sm:$0xf]
      %v838 = vld [vmem:[%s4 + $0x294] sm:$0xf]
      %v839 = vld [vmem:[%s4 + $0x298] sm:$0xf]
      %v840 = vld [vmem:[%s4 + $0x29c] sm:$0xf]
      %v841 = vld [vmem:[%s4 + $0x2a0] sm:$0xf]
      %v842 = vld [vmem:[%s4 + $0x2a4] sm:$0xf]
      %v843 = vld [vmem:[%s4 + $0x2a8] sm:$0xf]
      %v844 = vld [vmem:[%s4 + $0x2ac] sm:$0xf]
      %v845 = vld [vmem:[%s4 + $0x2b0] sm:$0xf]
      %v846 = vld [vmem:[%s4 + $0x2b4] sm:$0xf]
      %v847 = vld [vmem:[%s4 + $0x2b8] sm:$0xf]
      %v848 = vld [vmem:[%s4 + $0x2bc] sm:$0xf]
      %v849 = vld [vmem:[%s4 + $0x2c0] sm:$0xf]
      %v850 = vld [vmem:[%s4 + $0x2c4] sm:$0xf]
      %v851 = vld [vmem:[%s4 + $0x2c8] sm:$0xf]
      %v852 = vld [vmem:[%s4 + $0x2cc] sm:$0xf]
      %v853 = vld [vmem:[%s4 + $0x2d0] sm:$0xf]
      %v854 = vld [vmem:[%s4 + $0x2d4] sm:$0xf]
      %v855 = vld [vmem:[%s4 + $0x2d8] sm:$0xf]
      %v856 = vld [vmem:[%s4 + $0x2dc] sm:$0xf]
      %v857 = vld [vmem:[%s4 + $0x2e0] sm:$0xf]
      %v858 = vld [vmem:[%s4 + $0x2e4] sm:$0xf]
      %v859 = vld [vmem:[%s4 + $0x2e8] sm:$0xf]
      %v860 = vld [vmem:[%s4 + $0x2ec] sm:$0xf]
      %v861 = vld [vmem:[%s4 + $0x2f0] sm:$0xf]
      %v862 = vld [vmem:[%s4 + $0x2f4] sm:$0xf]
      %v863 = vld [vmem:[%s4 + $0x2f8] sm:$0xf]
      %v864 = vld [vmem:[%s4 + $0x2fc] sm:$0xf]
      %v865 = vld [vmem:[%s5] sm:$0x1]
      %v866 = vld [vmem:[%s5 + $0x1] sm:$0x1]
      %v867 = vld [vmem:[%s5 + $0x2] sm:$0x1]
      %v868 = vld [vmem:[%s5 + $0x3] sm:$0x1]
      %v869 = vld [vmem:[%s5 + $0x4] sm:$0x1]
      %v870 = vld [vmem:[%s5 + $0x5] sm:$0x1]
      %v871 = vld [vmem:[%s5 + $0x6] sm:$0x1]
      %v872 = vld [vmem:[%s5 + $0x7] sm:$0x1]
      %v873 = vld [vmem:[%s5 + $0x8] sm:$0x1]
      %v874 = vld [vmem:[%s5 + $0x9] sm:$0x1]
      %v875 = vld [vmem:[%s5 + $0xa] sm:$0x1]
      %v876 = vld [vmem:[%s5 + $0xb] sm:$0x1]
      %v889 = vlaneseq
      %v890 = vshrl.u32 %v889, 7
      %v891 = vsub.s32 0, %v890
      %v892 = vrot.slane %v865, %v891
      %v893 = vlaneseq
      %v894 = vshrl.u32 %v893, 7
      %v895 = vsub.s32 0, %v894
      %v896 = vrot.slane %v866, %v895
      %v897 = vlaneseq
      %v898 = vshrl.u32 %v897, 7
      %v899 = vsub.s32 0, %v898
      %v900 = vrot.slane %v867, %v899
      %v901 = vlaneseq
      %v902 = vshrl.u32 %v901, 7
      %v903 = vsub.s32 0, %v902
      %v904 = vrot.slane %v868, %v903
      %v905 = vlaneseq
      %v906 = vshrl.u32 %v905, 7
      %v907 = vsub.s32 0, %v906
      %v908 = vrot.slane %v869, %v907
      %v909 = vlaneseq
      %v910 = vshrl.u32 %v909, 7
      %v911 = vsub.s32 0, %v910
      %v912 = vrot.slane %v870, %v911
      %v913 = vlaneseq
      %v914 = vshrl.u32 %v913, 7
      %v915 = vsub.s32 0, %v914
      %v916 = vrot.slane %v871, %v915
      %v917 = vlaneseq
      %v918 = vshrl.u32 %v917, 7
      %v919 = vsub.s32 0, %v918
      %v920 = vrot.slane %v872, %v919
      %v921 = vlaneseq
      %v922 = vshrl.u32 %v921, 7
      %v923 = vsub.s32 0, %v922
      %v924 = vrot.slane %v873, %v923
      %v925 = vlaneseq
      %v926 = vshrl.u32 %v925, 7
      %v927 = vsub.s32 0, %v926
      %v928 = vrot.slane %v874, %v927
      %v929 = vlaneseq
      %v930 = vshrl.u32 %v929, 7
      %v931 = vsub.s32 0, %v930
      %v932 = vrot.slane %v875, %v931
      %v933 = vlaneseq
      %v934 = vshrl.u32 %v933, 7
      %v935 = vsub.s32 0, %v934
      %v936 = vrot.slane %v876, %v935
      %v965 = vunpack.c.l.b16 %v673
      %v966 = vunpack.c.l.b16 %v674
      %v967 = vunpack.c.l.b16 %v675
      %v968 = vunpack.c.l.b16 %v676
      %v969 = vunpack.c.l.b16 %v677
      %v970 = vunpack.c.l.b16 %v678
      %v971 = vunpack.c.l.b16 %v679
      %v972 = vunpack.c.l.b16 %v680
      %v973 = vunpack.c.l.b16 %v681
      %v974 = vunpack.c.l.b16 %v682
      %v975 = vunpack.c.l.b16 %v683
      %v976 = vunpack.c.l.b16 %v684
      %v977 = vunpack.c.l.b16 %v685
      %v978 = vunpack.c.l.b16 %v686
      %v979 = vunpack.c.l.b16 %v687
      %v980 = vunpack.c.l.b16 %v688
      %v981 = vpack.c.b16 %v966, %v965
      %v982 = vpack.c.b16 %v968, %v967
      %v983 = vpack.c.b16 %v970, %v969
      %v984 = vpack.c.b16 %v972, %v971
      %v985 = vpack.c.b16 %v974, %v973
      %v986 = vpack.c.b16 %v976, %v975
      %v987 = vpack.c.b16 %v978, %v977
      %v988 = vpack.c.b16 %v980, %v979
      %997 = vmatprep.subr.bf16.mxu0 0
      %998 = vmatpush1.bf16.msra.mxu0 %v988
      %999 = vmatprep.subr.bf16.mxu0 0
      %1000 = vmatpush1.bf16.msra.mxu0 %v987
      %1001 = vmatprep.subr.bf16.mxu0 0
      %1002 = vmatpush1.bf16.msra.mxu0 %v986
      %1003 = vmatprep.subr.bf16.mxu0 0
      %1004 = vmatpush1.bf16.msra.mxu0 %v985
      %1005 = vmatprep.subr.bf16.mxu0 0
      %1006 = vmatpush1.bf16.msra.mxu0 %v984
      %1007 = vmatprep.subr.bf16.mxu0 0
      %1008 = vmatpush1.bf16.msra.mxu0 %v983
      %1009 = vmatprep.subr.bf16.mxu0 0
      %1010 = vmatpush1.bf16.msra.mxu0 %v982
      %1011 = vmatprep.subr.bf16.mxu0 0
      %1012 = vmatpush1.bf16.msra.mxu0 %v981
      %1013 = vmatprep.subr.bf16.mxu0 0
      %1014 = vmatpush2.bf16.msra.mxu0 0
      %1015 = vmatprep.subr.bf16.mxu0 0
      %1016 = vmatpush2.bf16.msra.mxu0 0
      %1017 = vmatprep.subr.bf16.mxu0 0
      %1018 = vmatpush2.bf16.msra.mxu0 0
      %1019 = vmatprep.subr.bf16.mxu0 0
      %1020 = vmatpush2.bf16.msra.mxu0 0
      %1021 = vmatprep.subr.bf16.mxu0 0
      %1022 = vmatpush2.bf16.msra.mxu0 0
      %1023 = vmatprep.subr.bf16.mxu0 0
      %1024 = vmatpush2.bf16.msra.mxu0 0
      %1025 = vmatprep.subr.bf16.mxu0 0
      %1026 = vmatpush2.bf16.msra.mxu0 0
      %1027 = vmatprep.subr.bf16.mxu0 0
      %1028 = vmatpush2.bf16.msra.mxu0 0
      %1029 = vmatprep.mubr.bf16.mxu0 0
      %1030 = vmatmul.mubr.bf16.gmra.mxu0 %v672
      %v1031 = vpop.f32.mrf.mxu0
      %v1032 = vadd.f32 %v892, %v1031
      %v1033 = vpop.f32.mrf.mxu0
      %v1034 = vpop.f32.mrf.mxu0
      %v1035 = vpop.f32.mrf.mxu0
      %1036 = vdwg.mxu0
      %v1053 = vunpack.c.l.b16 %v689
      %v1054 = vunpack.c.l.b16 %v690
      %v1055 = vunpack.c.l.b16 %v691
      %v1056 = vunpack.c.l.b16 %v692
      %v1057 = vunpack.c.l.b16 %v693
      %v1058 = vunpack.c.l.b16 %v694
      %v1059 = vunpack.c.l.b16 %v695
      %v1060 = vunpack.c.l.b16 %v696
      %v1061 = vunpack.c.l.b16 %v697
      %v1062 = vunpack.c.l.b16 %v698
      %v1063 = vunpack.c.l.b16 %v699
      %v1064 = vunpack.c.l.b16 %v700
      %v1065 = vunpack.c.l.b16 %v701
      %v1066 = vunpack.c.l.b16 %v702
      %v1067 = vunpack.c.l.b16 %v703
      %v1068 = vunpack.c.l.b16 %v704
      %v1069 = vpack.c.b16 %v1054, %v1053
      %v1070 = vpack.c.b16 %v1056, %v1055
      %v1071 = vpack.c.b16 %v1058, %v1057
      %v1072 = vpack.c.b16 %v1060, %v1059
      %v1073 = vpack.c.b16 %v1062, %v1061
      %v1074 = vpack.c.b16 %v1064, %v1063
      %v1075 = vpack.c.b16 %v1066, %v1065
      %v1076 = vpack.c.b16 %v1068, %v1067
      %1085 = vmatprep.subr.bf16.mxu0 0
      %1086 = vmatpush1.bf16.msra.mxu0 %v1076
      %1087 = vmatprep.subr.bf16.mxu0 0
      %1088 = vmatpush1.bf16.msra.mxu0 %v1075
      %1089 = vmatprep.subr.bf16.mxu0 0
      %1090 = vmatpush1.bf16.msra.mxu0 %v1074
      %1091 = vmatprep.subr.bf16.mxu0 0
      %1092 = vmatpush1.bf16.msra.mxu0 %v1073
      %1093 = vmatprep.subr.bf16.mxu0 0
      %1094 = vmatpush1.bf16.msra.mxu0 %v1072
      %1095 = vmatprep.subr.bf16.mxu0 0
      %1096 = vmatpush1.bf16.msra.mxu0 %v1071
      %1097 = vmatprep.subr.bf16.mxu0 0
      %1098 = vmatpush1.bf16.msra.mxu0 %v1070
      %1099 = vmatprep.subr.bf16.mxu0 0
      %1100 = vmatpush1.bf16.msra.mxu0 %v1069
      %1101 = vmatprep.subr.bf16.mxu0 0
      %1102 = vmatpush2.bf16.msra.mxu0 0
      %1103 = vmatprep.subr.bf16.mxu0 0
      %1104 = vmatpush2.bf16.msra.mxu0 0
      %1105 = vmatprep.subr.bf16.mxu0 0
      %1106 = vmatpush2.bf16.msra.mxu0 0
      %1107 = vmatprep.subr.bf16.mxu0 0
      %1108 = vmatpush2.bf16.msra.mxu0 0
      %1109 = vmatprep.subr.bf16.mxu0 0
      %1110 = vmatpush2.bf16.msra.mxu0 0
      %1111 = vmatprep.subr.bf16.mxu0 0
      %1112 = vmatpush2.bf16.msra.mxu0 0
      %1113 = vmatprep.subr.bf16.mxu0 0
      %1114 = vmatpush2.bf16.msra.mxu0 0
      %1115 = vmatprep.subr.bf16.mxu0 0
      %1116 = vmatpush2.bf16.msra.mxu0 0
      %1117 = vmatprep.mubr.bf16.mxu0 0
      %1118 = vmatmul.mubr.bf16.gmra.mxu0 %v672
      %v1119 = vpop.f32.mrf.mxu0
      %v1120 = vadd.f32 %v896, %v1119
      %v1121 = vpop.f32.mrf.mxu0
      %v1122 = vpop.f32.mrf.mxu0
      %v1123 = vpop.f32.mrf.mxu0
      %1124 = vdwg.mxu0
      %v1141 = vunpack.c.l.b16 %v705
      %v1142 = vunpack.c.l.b16 %v706
      %v1143 = vunpack.c.l.b16 %v707
      %v1144 = vunpack.c.l.b16 %v708
      %v1145 = vunpack.c.l.b16 %v709
      %v1146 = vunpack.c.l.b16 %v710
      %v1147 = vunpack.c.l.b16 %v711
      %v1148 = vunpack.c.l.b16 %v712
      %v1149 = vunpack.c.l.b16 %v713
      %v1150 = vunpack.c.l.b16 %v714
      %v1151 = vunpack.c.l.b16 %v715
      %v1152 = vunpack.c.l.b16 %v716
      %v1153 = vunpack.c.l.b16 %v717
      %v1154 = vunpack.c.l.b16 %v718
      %v1155 = vunpack.c.l.b16 %v719
      %v1156 = vunpack.c.l.b16 %v720
      %v1157 = vpack.c.b16 %v1142, %v1141
      %v1158 = vpack.c.b16 %v1144, %v1143
      %v1159 = vpack.c.b16 %v1146, %v1145
      %v1160 = vpack.c.b16 %v1148, %v1147
      %v1161 = vpack.c.b16 %v1150, %v1149
      %v1162 = vpack.c.b16 %v1152, %v1151
      %v1163 = vpack.c.b16 %v1154, %v1153
      %v1164 = vpack.c.b16 %v1156, %v1155
      %1173 = vmatprep.subr.bf16.mxu0 0
      %1174 = vmatpush1.bf16.msra.mxu0 %v1164
      %1175 = vmatprep.subr.bf16.mxu0 0
      %1176 = vmatpush1.bf16.msra.mxu0 %v1163
      %1177 = vmatprep.subr.bf16.mxu0 0
      %1178 = vmatpush1.bf16.msra.mxu0 %v1162
      %1179 = vmatprep.subr.bf16.mxu0 0
      %1180 = vmatpush1.bf16.msra.mxu0 %v1161
      %1181 = vmatprep.subr.bf16.mxu0 0
      %1182 = vmatpush1.bf16.msra.mxu0 %v1160
      %1183 = vmatprep.subr.bf16.mxu0 0
      %1184 = vmatpush1.bf16.msra.mxu0 %v1159
      %1185 = vmatprep.subr.bf16.mxu0 0
      %1186 = vmatpush1.bf16.msra.mxu0 %v1158
      %1187 = vmatprep.subr.bf16.mxu0 0
      %1188 = vmatpush1.bf16.msra.mxu0 %v1157
      %1189 = vmatprep.subr.bf16.mxu0 0
      %1190 = vmatpush2.bf16.msra.mxu0 0
      %1191 = vmatprep.subr.bf16.mxu0 0
      %1192 = vmatpush2.bf16.msra.mxu0 0
      %1193 = vmatprep.subr.bf16.mxu0 0
      %1194 = vmatpush2.bf16.msra.mxu0 0
      %1195 = vmatprep.subr.bf16.mxu0 0
      %1196 = vmatpush2.bf16.msra.mxu0 0
      %1197 = vmatprep.subr.bf16.mxu0 0
      %1198 = vmatpush2.bf16.msra.mxu0 0
      %1199 = vmatprep.subr.bf16.mxu0 0
      %1200 = vmatpush2.bf16.msra.mxu0 0
      %1201 = vmatprep.subr.bf16.mxu0 0
      %1202 = vmatpush2.bf16.msra.mxu0 0
      %1203 = vmatprep.subr.bf16.mxu0 0
      %1204 = vmatpush2.bf16.msra.mxu0 0
      %1205 = vmatprep.mubr.bf16.mxu0 0
      %1206 = vmatmul.mubr.bf16.gmra.mxu0 %v672
      %v1207 = vpop.f32.mrf.mxu0
      %v1208 = vadd.f32 %v900, %v1207
      %v1209 = vpop.f32.mrf.mxu0
      %v1210 = vpop.f32.mrf.mxu0
      %v1211 = vpop.f32.mrf.mxu0
      %1212 = vdwg.mxu0
      %v1229 = vunpack.c.l.b16 %v721
      %v1230 = vunpack.c.l.b16 %v722
      %v1231 = vunpack.c.l.b16 %v723
      %v1232 = vunpack.c.l.b16 %v724
      %v1233 = vunpack.c.l.b16 %v725
      %v1234 = vunpack.c.l.b16 %v726
      %v1235 = vunpack.c.l.b16 %v727
      %v1236 = vunpack.c.l.b16 %v728
      %v1237 = vunpack.c.l.b16 %v729
      %v1238 = vunpack.c.l.b16 %v730
      %v1239 = vunpack.c.l.b16 %v731
      %v1240 = vunpack.c.l.b16 %v732
      %v1241 = vunpack.c.l.b16 %v733
      %v1242 = vunpack.c.l.b16 %v734
      %v1243 = vunpack.c.l.b16 %v735
      %v1244 = vunpack.c.l.b16 %v736
      %v1245 = vpack.c.b16 %v1230, %v1229
      %v1246 = vpack.c.b16 %v1232, %v1231
      %v1247 = vpack.c.b16 %v1234, %v1233
      %v1248 = vpack.c.b16 %v1236, %v1235
      %v1249 = vpack.c.b16 %v1238, %v1237
      %v1250 = vpack.c.b16 %v1240, %v1239
      %v1251 = vpack.c.b16 %v1242, %v1241
      %v1252 = vpack.c.b16 %v1244, %v1243
      %1261 = vmatprep.subr.bf16.mxu0 0
      %1262 = vmatpush1.bf16.msra.mxu0 %v1252
      %1263 = vmatprep.subr.bf16.mxu0 0
      %1264 = vmatpush1.bf16.msra.mxu0 %v1251
      %1265 = vmatprep.subr.bf16.mxu0 0
      %1266 = vmatpush1.bf16.msra.mxu0 %v1250
      %1267 = vmatprep.subr.bf16.mxu0 0
      %1268 = vmatpush1.bf16.msra.mxu0 %v1249
      %1269 = vmatprep.subr.bf16.mxu0 0
      %1270 = vmatpush1.bf16.msra.mxu0 %v1248
      %1271 = vmatprep.subr.bf16.mxu0 0
      %1272 = vmatpush1.bf16.msra.mxu0 %v1247
      %1273 = vmatprep.subr.bf16.mxu0 0
      %1274 = vmatpush1.bf16.msra.mxu0 %v1246
      %1275 = vmatprep.subr.bf16.mxu0 0
      %1276 = vmatpush1.bf16.msra.mxu0 %v1245
      %1277 = vmatprep.subr.bf16.mxu0 0
      %1278 = vmatpush2.bf16.msra.mxu0 0
      %1279 = vmatprep.subr.bf16.mxu0 0
      %1280 = vmatpush2.bf16.msra.mxu0 0
      %1281 = vmatprep.subr.bf16.mxu0 0
      %1282 = vmatpush2.bf16.msra.mxu0 0
      %1283 = vmatprep.subr.bf16.mxu0 0
      %1284 = vmatpush2.bf16.msra.mxu0 0
      %1285 = vmatprep.subr.bf16.mxu0 0
      %1286 = vmatpush2.bf16.msra.mxu0 0
      %1287 = vmatprep.subr.bf16.mxu0 0
      %1288 = vmatpush2.bf16.msra.mxu0 0
      %1289 = vmatprep.subr.bf16.mxu0 0
      %1290 = vmatpush2.bf16.msra.mxu0 0
      %1291 = vmatprep.subr.bf16.mxu0 0
      %1292 = vmatpush2.bf16.msra.mxu0 0
      %1293 = vmatprep.mubr.bf16.mxu0 0
      %1294 = vmatmul.mubr.bf16.gmra.mxu0 %v672
      %v1295 = vpop.f32.mrf.mxu0
      %v1296 = vadd.f32 %v904, %v1295
      %v1297 = vpop.f32.mrf.mxu0
      %v1298 = vpop.f32.mrf.mxu0
      %v1299 = vpop.f32.mrf.mxu0
      %1300 = vdwg.mxu0
      %v1317 = vunpack.c.l.b16 %v737
      %v1318 = vunpack.c.l.b16 %v738
      %v1319 = vunpack.c.l.b16 %v739
      %v1320 = vunpack.c.l.b16 %v740
      %v1321 = vunpack.c.l.b16 %v741
      %v1322 = vunpack.c.l.b16 %v742
      %v1323 = vunpack.c.l.b16 %v743
      %v1324 = vunpack.c.l.b16 %v744
      %v1325 = vunpack.c.l.b16 %v745
      %v1326 = vunpack.c.l.b16 %v746
      %v1327 = vunpack.c.l.b16 %v747
      %v1328 = vunpack.c.l.b16 %v748
      %v1329 = vunpack.c.l.b16 %v749
      %v1330 = vunpack.c.l.b16 %v750
      %v1331 = vunpack.c.l.b16 %v751
      %v1332 = vunpack.c.l.b16 %v752
      %v1333 = vpack.c.b16 %v1318, %v1317
      %v1334 = vpack.c.b16 %v1320, %v1319
      %v1335 = vpack.c.b16 %v1322, %v1321
      %v1336 = vpack.c.b16 %v1324, %v1323
      %v1337 = vpack.c.b16 %v1326, %v1325
      %v1338 = vpack.c.b16 %v1328, %v1327
      %v1339 = vpack.c.b16 %v1330, %v1329
      %v1340 = vpack.c.b16 %v1332, %v1331
      %1349 = vmatprep.subr.bf16.mxu0 0
      %1350 = vmatpush1.bf16.msra.mxu0 %v1340
      %1351 = vmatprep.subr.bf16.mxu0 0
      %1352 = vmatpush1.bf16.msra.mxu0 %v1339
      %1353 = vmatprep.subr.bf16.mxu0 0
      %1354 = vmatpush1.bf16.msra.mxu0 %v1338
      %1355 = vmatprep.subr.bf16.mxu0 0
      %1356 = vmatpush1.bf16.msra.mxu0 %v1337
      %1357 = vmatprep.subr.bf16.mxu0 0
      %1358 = vmatpush1.bf16.msra.mxu0 %v1336
      %1359 = vmatprep.subr.bf16.mxu0 0
      %1360 = vmatpush1.bf16.msra.mxu0 %v1335
      %1361 = vmatprep.subr.bf16.mxu0 0
      %1362 = vmatpush1.bf16.msra.mxu0 %v1334
      %1363 = vmatprep.subr.bf16.mxu0 0
      %1364 = vmatpush1.bf16.msra.mxu0 %v1333
      %1365 = vmatprep.subr.bf16.mxu0 0
      %1366 = vmatpush2.bf16.msra.mxu0 0
      %1367 = vmatprep.subr.bf16.mxu0 0
      %1368 = vmatpush2.bf16.msra.mxu0 0
      %1369 = vmatprep.subr.bf16.mxu0 0
      %1370 = vmatpush2.bf16.msra.mxu0 0
      %1371 = vmatprep.subr.bf16.mxu0 0
      %1372 = vmatpush2.bf16.msra.mxu0 0
      %1373 = vmatprep.subr.bf16.mxu0 0
      %1374 = vmatpush2.bf16.msra.mxu0 0
      %1375 = vmatprep.subr.bf16.mxu0 0
      %1376 = vmatpush2.bf16.msra.mxu0 0
      %1377 = vmatprep.subr.bf16.mxu0 0
      %1378 = vmatpush2.bf16.msra.mxu0 0
      %1379 = vmatprep.subr.bf16.mxu0 0
      %1380 = vmatpush2.bf16.msra.mxu0 0
      %1381 = vmatprep.mubr.bf16.mxu0 0
      %1382 = vmatmul.mubr.bf16.gmra.mxu0 %v672
      %v1383 = vpop.f32.mrf.mxu0
      %v1384 = vadd.f32 %v908, %v1383
      %v1385 = vpop.f32.mrf.mxu0
      %v1386 = vpop.f32.mrf.mxu0
      %v1387 = vpop.f32.mrf.mxu0
      %1388 = vdwg.mxu0
      %v1405 = vunpack.c.l.b16 %v753
      %v1406 = vunpack.c.l.b16 %v754
      %v1407 = vunpack.c.l.b16 %v755
      %v1408 = vunpack.c.l.b16 %v756
      %v1409 = vunpack.c.l.b16 %v757
      %v1410 = vunpack.c.l.b16 %v758
      %v1411 = vunpack.c.l.b16 %v759
      %v1412 = vunpack.c.l.b16 %v760
      %v1413 = vunpack.c.l.b16 %v761
      %v1414 = vunpack.c.l.b16 %v762
      %v1415 = vunpack.c.l.b16 %v763
      %v1416 = vunpack.c.l.b16 %v764
      %v1417 = vunpack.c.l.b16 %v765
      %v1418 = vunpack.c.l.b16 %v766
      %v1419 = vunpack.c.l.b16 %v767
      %v1420 = vunpack.c.l.b16 %v768
      %v1421 = vpack.c.b16 %v1406, %v1405
      %v1422 = vpack.c.b16 %v1408, %v1407
      %v1423 = vpack.c.b16 %v1410, %v1409
      %v1424 = vpack.c.b16 %v1412, %v1411
      %v1425 = vpack.c.b16 %v1414, %v1413
      %v1426 = vpack.c.b16 %v1416, %v1415
      %v1427 = vpack.c.b16 %v1418, %v1417
      %v1428 = vpack.c.b16 %v1420, %v1419
      %1437 = vmatprep.subr.bf16.mxu0 0
      %1438 = vmatpush1.bf16.msra.mxu0 %v1428
      %1439 = vmatprep.subr.bf16.mxu0 0
      %1440 = vmatpush1.bf16.msra.mxu0 %v1427
      %1441 = vmatprep.subr.bf16.mxu0 0
      %1442 = vmatpush1.bf16.msra.mxu0 %v1426
      %1443 = vmatprep.subr.bf16.mxu0 0
      %1444 = vmatpush1.bf16.msra.mxu0 %v1425
      %1445 = vmatprep.subr.bf16.mxu0 0
      %1446 = vmatpush1.bf16.msra.mxu0 %v1424
      %1447 = vmatprep.subr.bf16.mxu0 0
      %1448 = vmatpush1.bf16.msra.mxu0 %v1423
      %1449 = vmatprep.subr.bf16.mxu0 0
      %1450 = vmatpush1.bf16.msra.mxu0 %v1422
      %1451 = vmatprep.subr.bf16.mxu0 0
      %1452 = vmatpush1.bf16.msra.mxu0 %v1421
      %1453 = vmatprep.subr.bf16.mxu0 0
      %1454 = vmatpush2.bf16.msra.mxu0 0
      %1455 = vmatprep.subr.bf16.mxu0 0
      %1456 = vmatpush2.bf16.msra.mxu0 0
      %1457 = vmatprep.subr.bf16.mxu0 0
      %1458 = vmatpush2.bf16.msra.mxu0 0
      %1459 = vmatprep.subr.bf16.mxu0 0
      %1460 = vmatpush2.bf16.msra.mxu0 0
      %1461 = vmatprep.subr.bf16.mxu0 0
      %1462 = vmatpush2.bf16.msra.mxu0 0
      %1463 = vmatprep.subr.bf16.mxu0 0
      %1464 = vmatpush2.bf16.msra.mxu0 0
      %1465 = vmatprep.subr.bf16.mxu0 0
      %1466 = vmatpush2.bf16.msra.mxu0 0
      %1467 = vmatprep.subr.bf16.mxu0 0
      %1468 = vmatpush2.bf16.msra.mxu0 0
      %1469 = vmatprep.mubr.bf16.mxu0 0
      %1470 = vmatmul.mubr.bf16.gmra.mxu0 %v672
      %v1471 = vpop.f32.mrf.mxu0
      %v1472 = vadd.f32 %v912, %v1471
      %v1473 = vpop.f32.mrf.mxu0
      %v1474 = vpop.f32.mrf.mxu0
      %v1475 = vpop.f32.mrf.mxu0
      %1476 = vdwg.mxu0
      %v1493 = vunpack.c.l.b16 %v769
      %v1494 = vunpack.c.l.b16 %v770
      %v1495 = vunpack.c.l.b16 %v771
      %v1496 = vunpack.c.l.b16 %v772
      %v1497 = vunpack.c.l.b16 %v773
      %v1498 = vunpack.c.l.b16 %v774
      %v1499 = vunpack.c.l.b16 %v775
      %v1500 = vunpack.c.l.b16 %v776
      %v1501 = vunpack.c.l.b16 %v777
      %v1502 = vunpack.c.l.b16 %v778
      %v1503 = vunpack.c.l.b16 %v779
      %v1504 = vunpack.c.l.b16 %v780
      %v1505 = vunpack.c.l.b16 %v781
      %v1506 = vunpack.c.l.b16 %v782
      %v1507 = vunpack.c.l.b16 %v783
      %v1508 = vunpack.c.l.b16 %v784
      %v1509 = vpack.c.b16 %v1494, %v1493
      %v1510 = vpack.c.b16 %v1496, %v1495
      %v1511 = vpack.c.b16 %v1498, %v1497
      %v1512 = vpack.c.b16 %v1500, %v1499
      %v1513 = vpack.c.b16 %v1502, %v1501
      %v1514 = vpack.c.b16 %v1504, %v1503
      %v1515 = vpack.c.b16 %v1506, %v1505
      %v1516 = vpack.c.b16 %v1508, %v1507
      %1525 = vmatprep.subr.bf16.mxu0 0
      %1526 = vmatpush1.bf16.msra.mxu0 %v1516
      %1527 = vmatprep.subr.bf16.mxu0 0
      %1528 = vmatpush1.bf16.msra.mxu0 %v1515
      %1529 = vmatprep.subr.bf16.mxu0 0
      %1530 = vmatpush1.bf16.msra.mxu0 %v1514
      %1531 = vmatprep.subr.bf16.mxu0 0
      %1532 = vmatpush1.bf16.msra.mxu0 %v1513
      %1533 = vmatprep.subr.bf16.mxu0 0
      %1534 = vmatpush1.bf16.msra.mxu0 %v1512
      %1535 = vmatprep.subr.bf16.mxu0 0
      %1536 = vmatpush1.bf16.msra.mxu0 %v1511
      %1537 = vmatprep.subr.bf16.mxu0 0
      %1538 = vmatpush1.bf16.msra.mxu0 %v1510
      %1539 = vmatprep.subr.bf16.mxu0 0
      %1540 = vmatpush1.bf16.msra.mxu0 %v1509
      %1541 = vmatprep.subr.bf16.mxu0 0
      %1542 = vmatpush2.bf16.msra.mxu0 0
      %1543 = vmatprep.subr.bf16.mxu0 0
      %1544 = vmatpush2.bf16.msra.mxu0 0
      %1545 = vmatprep.subr.bf16.mxu0 0
      %1546 = vmatpush2.bf16.msra.mxu0 0
      %1547 = vmatprep.subr.bf16.mxu0 0
      %1548 = vmatpush2.bf16.msra.mxu0 0
      %1549 = vmatprep.subr.bf16.mxu0 0
      %1550 = vmatpush2.bf16.msra.mxu0 0
      %1551 = vmatprep.subr.bf16.mxu0 0
      %1552 = vmatpush2.bf16.msra.mxu0 0
      %1553 = vmatprep.subr.bf16.mxu0 0
      %1554 = vmatpush2.bf16.msra.mxu0 0
      %1555 = vmatprep.subr.bf16.mxu0 0
      %1556 = vmatpush2.bf16.msra.mxu0 0
      %1557 = vmatprep.mubr.bf16.mxu0 0
      %1558 = vmatmul.mubr.bf16.gmra.mxu0 %v672
      %v1559 = vpop.f32.mrf.mxu0
      %v1560 = vadd.f32 %v916, %v1559
      %v1561 = vpop.f32.mrf.mxu0
      %v1562 = vpop.f32.mrf.mxu0
      %v1563 = vpop.f32.mrf.mxu0
      %1564 = vdwg.mxu0
      %v1581 = vunpack.c.l.b16 %v785
      %v1582 = vunpack.c.l.b16 %v786
      %v1583 = vunpack.c.l.b16 %v787
      %v1584 = vunpack.c.l.b16 %v788
      %v1585 = vunpack.c.l.b16 %v789
      %v1586 = vunpack.c.l.b16 %v790
      %v1587 = vunpack.c.l.b16 %v791
      %v1588 = vunpack.c.l.b16 %v792
      %v1589 = vunpack.c.l.b16 %v793
      %v1590 = vunpack.c.l.b16 %v794
      %v1591 = vunpack.c.l.b16 %v795
      %v1592 = vunpack.c.l.b16 %v796
      %v1593 = vunpack.c.l.b16 %v797
      %v1594 = vunpack.c.l.b16 %v798
      %v1595 = vunpack.c.l.b16 %v799
      %v1596 = vunpack.c.l.b16 %v800
      %v1597 = vpack.c.b16 %v1582, %v1581
      %v1598 = vpack.c.b16 %v1584, %v1583
      %v1599 = vpack.c.b16 %v1586, %v1585
      %v1600 = vpack.c.b16 %v1588, %v1587
      %v1601 = vpack.c.b16 %v1590, %v1589
      %v1602 = vpack.c.b16 %v1592, %v1591
      %v1603 = vpack.c.b16 %v1594, %v1593
      %v1604 = vpack.c.b16 %v1596, %v1595
      %1613 = vmatprep.subr.bf16.mxu0 0
      %1614 = vmatpush1.bf16.msra.mxu0 %v1604
      %1615 = vmatprep.subr.bf16.mxu0 0
      %1616 = vmatpush1.bf16.msra.mxu0 %v1603
      %1617 = vmatprep.subr.bf16.mxu0 0
      %1618 = vmatpush1.bf16.msra.mxu0 %v1602
      %1619 = vmatprep.subr.bf16.mxu0 0
      %1620 = vmatpush1.bf16.msra.mxu0 %v1601
      %1621 = vmatprep.subr.bf16.mxu0 0
      %1622 = vmatpush1.bf16.msra.mxu0 %v1600
      %1623 = vmatprep.subr.bf16.mxu0 0
      %1624 = vmatpush1.bf16.msra.mxu0 %v1599
      %1625 = vmatprep.subr.bf16.mxu0 0
      %1626 = vmatpush1.bf16.msra.mxu0 %v1598
      %1627 = vmatprep.subr.bf16.mxu0 0
      %1628 = vmatpush1.bf16.msra.mxu0 %v1597
      %1629 = vmatprep.subr.bf16.mxu0 0
      %1630 = vmatpush2.bf16.msra.mxu0 0
      %1631 = vmatprep.subr.bf16.mxu0 0
      %1632 = vmatpush2.bf16.msra.mxu0 0
      %1633 = vmatprep.subr.bf16.mxu0 0
      %1634 = vmatpush2.bf16.msra.mxu0 0
      %1635 = vmatprep.subr.bf16.mxu0 0
      %1636 = vmatpush2.bf16.msra.mxu0 0
      %1637 = vmatprep.subr.bf16.mxu0 0
      %1638 = vmatpush2.bf16.msra.mxu0 0
      %1639 = vmatprep.subr.bf16.mxu0 0
      %1640 = vmatpush2.bf16.msra.mxu0 0
      %1641 = vmatprep.subr.bf16.mxu0 0
      %1642 = vmatpush2.bf16.msra.mxu0 0
      %1643 = vmatprep.subr.bf16.mxu0 0
      %1644 = vmatpush2.bf16.msra.mxu0 0
      %1645 = vmatprep.mubr.bf16.mxu0 0
      %1646 = vmatmul.mubr.bf16.gmra.mxu0 %v672
      %v1647 = vpop.f32.mrf.mxu0
      %v1648 = vadd.f32 %v920, %v1647
      %v1649 = vpop.f32.mrf.mxu0
      %v1650 = vpop.f32.mrf.mxu0
      %v1651 = vpop.f32.mrf.mxu0
      %1652 = vdwg.mxu0
      %v1669 = vunpack.c.l.b16 %v801
      %v1670 = vunpack.c.l.b16 %v802
      %v1671 = vunpack.c.l.b16 %v803
      %v1672 = vunpack.c.l.b16 %v804
      %v1673 = vunpack.c.l.b16 %v805
      %v1674 = vunpack.c.l.b16 %v806
      %v1675 = vunpack.c.l.b16 %v807
      %v1676 = vunpack.c.l.b16 %v808
      %v1677 = vunpack.c.l.b16 %v809
      %v1678 = vunpack.c.l.b16 %v810
      %v1679 = vunpack.c.l.b16 %v811
      %v1680 = vunpack.c.l.b16 %v812
      %v1681 = vunpack.c.l.b16 %v813
      %v1682 = vunpack.c.l.b16 %v814
      %v1683 = vunpack.c.l.b16 %v815
      %v1684 = vunpack.c.l.b16 %v816
      %v1685 = vpack.c.b16 %v1670, %v1669
      %v1686 = vpack.c.b16 %v1672, %v1671
      %v1687 = vpack.c.b16 %v1674, %v1673
      %v1688 = vpack.c.b16 %v1676, %v1675
      %v1689 = vpack.c.b16 %v1678, %v1677
      %v1690 = vpack.c.b16 %v1680, %v1679
      %v1691 = vpack.c.b16 %v1682, %v1681
      %v1692 = vpack.c.b16 %v1684, %v1683
      %1701 = vmatprep.subr.bf16.mxu0 0
      %1702 = vmatpush1.bf16.msra.mxu0 %v1692
      %1703 = vmatprep.subr.bf16.mxu0 0
      %1704 = vmatpush1.bf16.msra.mxu0 %v1691
      %1705 = vmatprep.subr.bf16.mxu0 0
      %1706 = vmatpush1.bf16.msra.mxu0 %v1690
      %1707 = vmatprep.subr.bf16.mxu0 0
      %1708 = vmatpush1.bf16.msra.mxu0 %v1689
      %1709 = vmatprep.subr.bf16.mxu0 0
      %1710 = vmatpush1.bf16.msra.mxu0 %v1688
      %1711 = vmatprep.subr.bf16.mxu0 0
      %1712 = vmatpush1.bf16.msra.mxu0 %v1687
      %1713 = vmatprep.subr.bf16.mxu0 0
      %1714 = vmatpush1.bf16.msra.mxu0 %v1686
      %1715 = vmatprep.subr.bf16.mxu0 0
      %1716 = vmatpush1.bf16.msra.mxu0 %v1685
      %1717 = vmatprep.subr.bf16.mxu0 0
      %1718 = vmatpush2.bf16.msra.mxu0 0
      %1719 = vmatprep.subr.bf16.mxu0 0
      %1720 = vmatpush2.bf16.msra.mxu0 0
      %1721 = vmatprep.subr.bf16.mxu0 0
      %1722 = vmatpush2.bf16.msra.mxu0 0
      %1723 = vmatprep.subr.bf16.mxu0 0
      %1724 = vmatpush2.bf16.msra.mxu0 0
      %1725 = vmatprep.subr.bf16.mxu0 0
      %1726 = vmatpush2.bf16.msra.mxu0 0
      %1727 = vmatprep.subr.bf16.mxu0 0
      %1728 = vmatpush2.bf16.msra.mxu0 0
      %1729 = vmatprep.subr.bf16.mxu0 0
      %1730 = vmatpush2.bf16.msra.mxu0 0
      %1731 = vmatprep.subr.bf16.mxu0 0
      %1732 = vmatpush2.bf16.msra.mxu0 0
      %1733 = vmatprep.mubr.bf16.mxu0 0
      %1734 = vmatmul.mubr.bf16.gmra.mxu0 %v672
      %v1735 = vpop.f32.mrf.mxu0
      %v1736 = vadd.f32 %v924, %v1735
      %v1737 = vpop.f32.mrf.mxu0
      %v1738 = vpop.f32.mrf.mxu0
      %v1739 = vpop.f32.mrf.mxu0
      %1740 = vdwg.mxu0
      %v1757 = vunpack.c.l.b16 %v817
      %v1758 = vunpack.c.l.b16 %v818
      %v1759 = vunpack.c.l.b16 %v819
      %v1760 = vunpack.c.l.b16 %v820
      %v1761 = vunpack.c.l.b16 %v821
      %v1762 = vunpack.c.l.b16 %v822
      %v1763 = vunpack.c.l.b16 %v823
      %v1764 = vunpack.c.l.b16 %v824
      %v1765 = vunpack.c.l.b16 %v825
      %v1766 = vunpack.c.l.b16 %v826
      %v1767 = vunpack.c.l.b16 %v827
      %v1768 = vunpack.c.l.b16 %v828
      %v1769 = vunpack.c.l.b16 %v829
      %v1770 = vunpack.c.l.b16 %v830
      %v1771 = vunpack.c.l.b16 %v831
      %v1772 = vunpack.c.l.b16 %v832
      %v1773 = vpack.c.b16 %v1758, %v1757
      %v1774 = vpack.c.b16 %v1760, %v1759
      %v1775 = vpack.c.b16 %v1762, %v1761
      %v1776 = vpack.c.b16 %v1764, %v1763
      %v1777 = vpack.c.b16 %v1766, %v1765
      %v1778 = vpack.c.b16 %v1768, %v1767
      %v1779 = vpack.c.b16 %v1770, %v1769
      %v1780 = vpack.c.b16 %v1772, %v1771
      %1789 = vmatprep.subr.bf16.mxu0 0
      %1790 = vmatpush1.bf16.msra.mxu0 %v1780
      %1791 = vmatprep.subr.bf16.mxu0 0
      %1792 = vmatpush1.bf16.msra.mxu0 %v1779
      %1793 = vmatprep.subr.bf16.mxu0 0
      %1794 = vmatpush1.bf16.msra.mxu0 %v1778
      %1795 = vmatprep.subr.bf16.mxu0 0
      %1796 = vmatpush1.bf16.msra.mxu0 %v1777
      %1797 = vmatprep.subr.bf16.mxu0 0
      %1798 = vmatpush1.bf16.msra.mxu0 %v1776
      %1799 = vmatprep.subr.bf16.mxu0 0
      %1800 = vmatpush1.bf16.msra.mxu0 %v1775
      %1801 = vmatprep.subr.bf16.mxu0 0
      %1802 = vmatpush1.bf16.msra.mxu0 %v1774
      %1803 = vmatprep.subr.bf16.mxu0 0
      %1804 = vmatpush1.bf16.msra.mxu0 %v1773
      %1805 = vmatprep.subr.bf16.mxu0 0
      %1806 = vmatpush2.bf16.msra.mxu0 0
      %1807 = vmatprep.subr.bf16.mxu0 0
      %1808 = vmatpush2.bf16.msra.mxu0 0
      %1809 = vmatprep.subr.bf16.mxu0 0
      %1810 = vmatpush2.bf16.msra.mxu0 0
      %1811 = vmatprep.subr.bf16.mxu0 0
      %1812 = vmatpush2.bf16.msra.mxu0 0
      %1813 = vmatprep.subr.bf16.mxu0 0
      %1814 = vmatpush2.bf16.msra.mxu0 0
      %1815 = vmatprep.subr.bf16.mxu0 0
      %1816 = vmatpush2.bf16.msra.mxu0 0
      %1817 = vmatprep.subr.bf16.mxu0 0
      %1818 = vmatpush2.bf16.msra.mxu0 0
      %1819 = vmatprep.subr.bf16.mxu0 0
      %1820 = vmatpush2.bf16.msra.mxu0 0
      %1821 = vmatprep.mubr.bf16.mxu0 0
      %1822 = vmatmul.mubr.bf16.gmra.mxu0 %v672
      %v1823 = vpop.f32.mrf.mxu0
      %v1824 = vadd.f32 %v928, %v1823
      %v1825 = vpop.f32.mrf.mxu0
      %v1826 = vpop.f32.mrf.mxu0
      %v1827 = vpop.f32.mrf.mxu0
      %1828 = vdwg.mxu0
      %v1845 = vunpack.c.l.b16 %v833
      %v1846 = vunpack.c.l.b16 %v834
      %v1847 = vunpack.c.l.b16 %v835
      %v1848 = vunpack.c.l.b16 %v836
      %v1849 = vunpack.c.l.b16 %v837
      %v1850 = vunpack.c.l.b16 %v838
      %v1851 = vunpack.c.l.b16 %v839
      %v1852 = vunpack.c.l.b16 %v840
      %v1853 = vunpack.c.l.b16 %v841
      %v1854 = vunpack.c.l.b16 %v842
      %v1855 = vunpack.c.l.b16 %v843
      %v1856 = vunpack.c.l.b16 %v844
      %v1857 = vunpack.c.l.b16 %v845
      %v1858 = vunpack.c.l.b16 %v846
      %v1859 = vunpack.c.l.b16 %v847
      %v1860 = vunpack.c.l.b16 %v848
      %v1861 = vpack.c.b16 %v1846, %v1845
      %v1862 = vpack.c.b16 %v1848, %v1847
      %v1863 = vpack.c.b16 %v1850, %v1849
      %v1864 = vpack.c.b16 %v1852, %v1851
      %v1865 = vpack.c.b16 %v1854, %v1853
      %v1866 = vpack.c.b16 %v1856, %v1855
      %v1867 = vpack.c.b16 %v1858, %v1857
      %v1868 = vpack.c.b16 %v1860, %v1859
      %1877 = vmatprep.subr.bf16.mxu0 0
      %1878 = vmatpush1.bf16.msra.mxu0 %v1868
      %1879 = vmatprep.subr.bf16.mxu0 0
      %1880 = vmatpush1.bf16.msra.mxu0 %v1867
      %1881 = vmatprep.subr.bf16.mxu0 0
      %1882 = vmatpush1.bf16.msra.mxu0 %v1866
      %1883 = vmatprep.subr.bf16.mxu0 0
      %1884 = vmatpush1.bf16.msra.mxu0 %v1865
      %1885 = vmatprep.subr.bf16.mxu0 0
      %1886 = vmatpush1.bf16.msra.mxu0 %v1864
      %1887 = vmatprep.subr.bf16.mxu0 0
      %1888 = vmatpush1.bf16.msra.mxu0 %v1863
      %1889 = vmatprep.subr.bf16.mxu0 0
      %1890 = vmatpush1.bf16.msra.mxu0 %v1862
      %1891 = vmatprep.subr.bf16.mxu0 0
      %1892 = vmatpush1.bf16.msra.mxu0 %v1861
      %1893 = vmatprep.subr.bf16.mxu0 0
      %1894 = vmatpush2.bf16.msra.mxu0 0
      %1895 = vmatprep.subr.bf16.mxu0 0
      %1896 = vmatpush2.bf16.msra.mxu0 0
      %1897 = vmatprep.subr.bf16.mxu0 0
      %1898 = vmatpush2.bf16.msra.mxu0 0
      %1899 = vmatprep.subr.bf16.mxu0 0
      %1900 = vmatpush2.bf16.msra.mxu0 0
      %1901 = vmatprep.subr.bf16.mxu0 0
      %1902 = vmatpush2.bf16.msra.mxu0 0
      %1903 = vmatprep.subr.bf16.mxu0 0
      %1904 = vmatpush2.bf16.msra.mxu0 0
      %1905 = vmatprep.subr.bf16.mxu0 0
      %1906 = vmatpush2.bf16.msra.mxu0 0
      %1907 = vmatprep.subr.bf16.mxu0 0
      %1908 = vmatpush2.bf16.msra.mxu0 0
      %1909 = vmatprep.mubr.bf16.mxu0 0
      %1910 = vmatmul.mubr.bf16.gmra.mxu0 %v672
      %v1911 = vpop.f32.mrf.mxu0
      %v1912 = vadd.f32 %v932, %v1911
      %v1913 = vpop.f32.mrf.mxu0
      %v1914 = vpop.f32.mrf.mxu0
      %v1915 = vpop.f32.mrf.mxu0
      %1916 = vdwg.mxu0
      %v1933 = vunpack.c.l.b16 %v849
      %v1934 = vunpack.c.l.b16 %v850
      %v1935 = vunpack.c.l.b16 %v851
      %v1936 = vunpack.c.l.b16 %v852
      %v1937 = vunpack.c.l.b16 %v853
      %v1938 = vunpack.c.l.b16 %v854
      %v1939 = vunpack.c.l.b16 %v855
      %v1940 = vunpack.c.l.b16 %v856
      %v1941 = vunpack.c.l.b16 %v857
      %v1942 = vunpack.c.l.b16 %v858
      %v1943 = vunpack.c.l.b16 %v859
      %v1944 = vunpack.c.l.b16 %v860
      %v1945 = vunpack.c.l.b16 %v861
      %v1946 = vunpack.c.l.b16 %v862
      %v1947 = vunpack.c.l.b16 %v863
      %v1948 = vunpack.c.l.b16 %v864
      %v1949 = vpack.c.b16 %v1934, %v1933
      %v1950 = vpack.c.b16 %v1936, %v1935
      %v1951 = vpack.c.b16 %v1938, %v1937
      %v1952 = vpack.c.b16 %v1940, %v1939
      %v1953 = vpack.c.b16 %v1942, %v1941
      %v1954 = vpack.c.b16 %v1944, %v1943
      %v1955 = vpack.c.b16 %v1946, %v1945
      %v1956 = vpack.c.b16 %v1948, %v1947
      %1965 = vmatprep.subr.bf16.mxu0 0
      %1966 = vmatpush1.bf16.msra.mxu0 %v1956
      %1967 = vmatprep.subr.bf16.mxu0 0
      %1968 = vmatpush1.bf16.msra.mxu0 %v1955
      %1969 = vmatprep.subr.bf16.mxu0 0
      %1970 = vmatpush1.bf16.msra.mxu0 %v1954
      %1971 = vmatprep.subr.bf16.mxu0 0
      %1972 = vmatpush1.bf16.msra.mxu0 %v1953
      %1973 = vmatprep.subr.bf16.mxu0 0
      %1974 = vmatpush1.bf16.msra.mxu0 %v1952
      %1975 = vmatprep.subr.bf16.mxu0 0
      %1976 = vmatpush1.bf16.msra.mxu0 %v1951
      %1977 = vmatprep.subr.bf16.mxu0 0
      %1978 = vmatpush1.bf16.msra.mxu0 %v1950
      %1979 = vmatprep.subr.bf16.mxu0 0
      %1980 = vmatpush1.bf16.msra.mxu0 %v1949
      %1981 = vmatprep.subr.bf16.mxu0 0
      %1982 = vmatpush2.bf16.msra.mxu0 0
      %1983 = vmatprep.subr.bf16.mxu0 0
      %1984 = vmatpush2.bf16.msra.mxu0 0
      %1985 = vmatprep.subr.bf16.mxu0 0
      %1986 = vmatpush2.bf16.msra.mxu0 0
      %1987 = vmatprep.subr.bf16.mxu0 0
      %1988 = vmatpush2.bf16.msra.mxu0 0
      %1989 = vmatprep.subr.bf16.mxu0 0
      %1990 = vmatpush2.bf16.msra.mxu0 0
      %1991 = vmatprep.subr.bf16.mxu0 0
      %1992 = vmatpush2.bf16.msra.mxu0 0
      %1993 = vmatprep.subr.bf16.mxu0 0
      %1994 = vmatpush2.bf16.msra.mxu0 0
      %1995 = vmatprep.subr.bf16.mxu0 0
      %1996 = vmatpush2.bf16.msra.mxu0 0
      %1997 = vmatprep.mubr.bf16.mxu0 0
      %1998 = vmatmul.mubr.bf16.gmra.mxu0 %v672
      %v1999 = vpop.f32.mrf.mxu0
      %v2000 = vadd.f32 %v936, %v1999
      %v2001 = vpop.f32.mrf.mxu0
      %v2002 = vpop.f32.mrf.mxu0
      %v2003 = vpop.f32.mrf.mxu0
      %2004 = vdwg.mxu0
      %v2005 = vpack.c.bf16 %v1032, %v1032
      %v2006 = vpack.c.bf16 %v1120, %v1120
      %v2007 = vpack.c.bf16 %v1208, %v1208
      %v2008 = vpack.c.bf16 %v1296, %v1296
      %v2009 = vpack.c.bf16 %v1384, %v1384
      %v2010 = vpack.c.bf16 %v1472, %v1472
      %v2011 = vpack.c.bf16 %v1560, %v1560
      %v2012 = vpack.c.bf16 %v1648, %v1648
      %vm2013 = vcmask 261120
      %v2015 = vsel %vm2013, %v2005, 0
      %v2018 = vsel %vm2013, %v2009, 0
      %2020 = vmatprep.subr.bf16.mxu0 0
      %2021 = vmatpush1.bf16.xpose.msra.mxu0 0
      %2022 = vmatprep.subr.bf16.mxu0 0
      %2023 = vmatpush1.bf16.xpose.msra.mxu0 0
      %2024 = vmatprep.subr.bf16.mxu0 0
      %2025 = vmatpush1.bf16.xpose.msra.mxu0 0
      %2026 = vmatprep.subr.bf16.mxu0 0
      %2027 = vmatpush1.bf16.xpose.msra.mxu0 0
      %2028 = vmatprep.subr.bf16.mxu0 0
      %2029 = vmatpush1.bf16.xpose.msra.mxu0 0
      %2030 = vmatprep.subr.bf16.mxu0 0
      %2031 = vmatpush1.bf16.xpose.msra.mxu0 0
      %2032 = vmatprep.subr.bf16.mxu0 0
      %2033 = vmatpush1.bf16.xpose.msra.mxu0 0
      %2034 = vmatprep.subr.bf16.mxu0 0
      %2035 = vmatpush1.bf16.xpose.msra.mxu0 %v2018
      %2036 = vmatprep.subr.bf16.mxu0 0
      %2037 = vmatpush2.bf16.xpose.msra.mxu0 0
      %2038 = vmatprep.subr.bf16.mxu0 0
      %2039 = vmatpush2.bf16.xpose.msra.mxu0 0
      %2040 = vmatprep.subr.bf16.mxu0 0
      %2041 = vmatpush2.bf16.xpose.msra.mxu0 0
      %2042 = vmatprep.subr.bf16.mxu0 0
      %2043 = vmatpush2.bf16.xpose.msra.mxu0 0
      %2044 = vmatprep.subr.bf16.mxu0 0
      %2045 = vmatpush2.bf16.xpose.msra.mxu0 0
      %2046 = vmatprep.subr.bf16.mxu0 0
      %2047 = vmatpush2.bf16.xpose.msra.mxu0 0
      %2048 = vmatprep.subr.bf16.mxu0 0
      %2049 = vmatpush2.bf16.xpose.msra.mxu0 0
      %2050 = vmatprep.subr.bf16.mxu0 0
      %2051 = vmatpush2.bf16.xpose.msra.mxu0 0
      %2052 = vmatprep.mubr.bf16.mxu0 0
      %2053 = vmatmul.mubr.bf16.gmra.mxu0 %v2015
      %v2054 = vpop.f32.mrf.mxu0
      %v2055 = vadd.f32 0.0, %v2054
      %v2056 = vpop.f32.mrf.mxu0
      %v2057 = vpop.f32.mrf.mxu0
      %v2058 = vpop.f32.mrf.mxu0
      %2059 = vdwg.mxu0
      %v2061 = vsel %vm2013, %v2006, 0
      %v2064 = vsel %vm2013, %v2010, 0
      %2066 = vmatprep.subr.bf16.mxu0 0
      %2067 = vmatpush1.bf16.xpose.msra.mxu0 0
      %2068 = vmatprep.subr.bf16.mxu0 0
      %2069 = vmatpush1.bf16.xpose.msra.mxu0 0
      %2070 = vmatprep.subr.bf16.mxu0 0
      %2071 = vmatpush1.bf16.xpose.msra.mxu0 0
      %2072 = vmatprep.subr.bf16.mxu0 0
      %2073 = vmatpush1.bf16.xpose.msra.mxu0 0
      %2074 = vmatprep.subr.bf16.mxu0 0
      %2075 = vmatpush1.bf16.xpose.msra.mxu0 0
      %2076 = vmatprep.subr.bf16.mxu0 0
      %2077 = vmatpush1.bf16.xpose.msra.mxu0 0
      %2078 = vmatprep.subr.bf16.mxu0 0
      %2079 = vmatpush1.bf16.xpose.msra.mxu0 0
      %2080 = vmatprep.subr.bf16.mxu0 0
      %2081 = vmatpush1.bf16.xpose.msra.mxu0 %v2064
      %2082 = vmatprep.subr.bf16.mxu0 0
      %2083 = vmatpush2.bf16.xpose.msra.mxu0 0
      %2084 = vmatprep.subr.bf16.mxu0 0
      %2085 = vmatpush2.bf16.xpose.msra.mxu0 0
      %2086 = vmatprep.subr.bf16.mxu0 0
      %2087 = vmatpush2.bf16.xpose.msra.mxu0 0
      %2088 = vmatprep.subr.bf16.mxu0 0
      %2089 = vmatpush2.bf16.xpose.msra.mxu0 0
      %2090 = vmatprep.subr.bf16.mxu0 0
      %2091 = vmatpush2.bf16.xpose.msra.mxu0 0
      %2092 = vmatprep.subr.bf16.mxu0 0
      %2093 = vmatpush2.bf16.xpose.msra.mxu0 0
      %2094 = vmatprep.subr.bf16.mxu0 0
      %2095 = vmatpush2.bf16.xpose.msra.mxu0 0
      %2096 = vmatprep.subr.bf16.mxu0 0
      %2097 = vmatpush2.bf16.xpose.msra.mxu0 0
      %2098 = vmatprep.mubr.bf16.mxu0 0
      %2099 = vmatmul.mubr.bf16.gmra.mxu0 %v2061
      %v2100 = vpop.f32.mrf.mxu0
      %v2101 = vadd.f32 0.0, %v2100
      %v2102 = vpop.f32.mrf.mxu0
      %v2103 = vpop.f32.mrf.mxu0
      %v2104 = vpop.f32.mrf.mxu0
      %2105 = vdwg.mxu0
      %v2107 = vsel %vm2013, %v2007, 0
      %v2110 = vsel %vm2013, %v2011, 0
      %2112 = vmatprep.subr.bf16.mxu0 0
      %2113 = vmatpush1.bf16.xpose.msra.mxu0 0
      %2114 = vmatprep.subr.bf16.mxu0 0
      %2115 = vmatpush1.bf16.xpose.msra.mxu0 0
      %2116 = vmatprep.subr.bf16.mxu0 0
      %2117 = vmatpush1.bf16.xpose.msra.mxu0 0
      %2118 = vmatprep.subr.bf16.mxu0 0
      %2119 = vmatpush1.bf16.xpose.msra.mxu0 0
      %2120 = vmatprep.subr.bf16.mxu0 0
      %2121 = vmatpush1.bf16.xpose.msra.mxu0 0
      %2122 = vmatprep.subr.bf16.mxu0 0
      %2123 = vmatpush1.bf16.xpose.msra.mxu0 0
      %2124 = vmatprep.subr.bf16.mxu0 0
      %2125 = vmatpush1.bf16.xpose.msra.mxu0 0
      %2126 = vmatprep.subr.bf16.mxu0 0
      %2127 = vmatpush1.bf16.xpose.msra.mxu0 %v2110
      %2128 = vmatprep.subr.bf16.mxu0 0
      %2129 = vmatpush2.bf16.xpose.msra.mxu0 0
      %2130 = vmatprep.subr.bf16.mxu0 0
      %2131 = vmatpush2.bf16.xpose.msra.mxu0 0
      %2132 = vmatprep.subr.bf16.mxu0 0
      %2133 = vmatpush2.bf16.xpose.msra.mxu0 0
      %2134 = vmatprep.subr.bf16.mxu0 0
      %2135 = vmatpush2.bf16.xpose.msra.mxu0 0
      %2136 = vmatprep.subr.bf16.mxu0 0
      %2137 = vmatpush2.bf16.xpose.msra.mxu0 0
      %2138 = vmatprep.subr.bf16.mxu0 0
      %2139 = vmatpush2.bf16.xpose.msra.mxu0 0
      %2140 = vmatprep.subr.bf16.mxu0 0
      %2141 = vmatpush2.bf16.xpose.msra.mxu0 0
      %2142 = vmatprep.subr.bf16.mxu0 0
      %2143 = vmatpush2.bf16.xpose.msra.mxu0 0
      %2144 = vmatprep.mubr.bf16.mxu0 0
      %2145 = vmatmul.mubr.bf16.gmra.mxu0 %v2107
      %v2146 = vpop.f32.mrf.mxu0
      %v2147 = vadd.f32 0.0, %v2146
      %v2148 = vpop.f32.mrf.mxu0
      %v2149 = vpop.f32.mrf.mxu0
      %v2150 = vpop.f32.mrf.mxu0
      %2151 = vdwg.mxu0
      %v2153 = vsel %vm2013, %v2008, 0
      %v2156 = vsel %vm2013, %v2012, 0
      %2158 = vmatprep.subr.bf16.mxu0 0
      %2159 = vmatpush1.bf16.xpose.msra.mxu0 0
      %2160 = vmatprep.subr.bf16.mxu0 0
      %2161 = vmatpush1.bf16.xpose.msra.mxu0 0
      %2162 = vmatprep.subr.bf16.mxu0 0
      %2163 = vmatpush1.bf16.xpose.msra.mxu0 0
      %2164 = vmatprep.subr.bf16.mxu0 0
      %2165 = vmatpush1.bf16.xpose.msra.mxu0 0
      %2166 = vmatprep.subr.bf16.mxu0 0
      %2167 = vmatpush1.bf16.xpose.msra.mxu0 0
      %2168 = vmatprep.subr.bf16.mxu0 0
      %2169 = vmatpush1.bf16.xpose.msra.mxu0 0
      %2170 = vmatprep.subr.bf16.mxu0 0
      %2171 = vmatpush1.bf16.xpose.msra.mxu0 0
      %2172 = vmatprep.subr.bf16.mxu0 0
      %2173 = vmatpush1.bf16.xpose.msra.mxu0 %v2156
      %2174 = vmatprep.subr.bf16.mxu0 0
      %2175 = vmatpush2.bf16.xpose.msra.mxu0 0
      %2176 = vmatprep.subr.bf16.mxu0 0
      %2177 = vmatpush2.bf16.xpose.msra.mxu0 0
      %2178 = vmatprep.subr.bf16.mxu0 0
      %2179 = vmatpush2.bf16.xpose.msra.mxu0 0
      %2180 = vmatprep.subr.bf16.mxu0 0
      %2181 = vmatpush2.bf16.xpose.msra.mxu0 0
      %2182 = vmatprep.subr.bf16.mxu0 0
      %2183 = vmatpush2.bf16.xpose.msra.mxu0 0
      %2184 = vmatprep.subr.bf16.mxu0 0
      %2185 = vmatpush2.bf16.xpose.msra.mxu0 0
      %2186 = vmatprep.subr.bf16.mxu0 0
      %2187 = vmatpush2.bf16.xpose.msra.mxu0 0
      %2188 = vmatprep.subr.bf16.mxu0 0
      %2189 = vmatpush2.bf16.xpose.msra.mxu0 0
      %2190 = vmatprep.mubr.bf16.mxu0 0
      %2191 = vmatmul.mubr.bf16.gmra.mxu0 %v2153
      %v2192 = vpop.f32.mrf.mxu0
      %v2193 = vadd.f32 0.0, %v2192
      %v2194 = vpop.f32.mrf.mxu0
      %v2195 = vpop.f32.mrf.mxu0
      %v2196 = vpop.f32.mrf.mxu0
      %2197 = vdwg.mxu0
      %v2198 = vmul.f32 %v2055, 0.17677669
      %v2199 = vmul.f32 %v2101, 0.17677669
      %v2200 = vmul.f32 %v2147, 0.17677669
      %v2201 = vmul.f32 %v2193, 0.17677669
      %v2203 = vlaneseq
      %v2204 = vshrl.u32 %v2203, 7
      %v2205 = vsub.s32 0, %v2204
      %v2206 = vrot.slane %v671, %v2205
      %v2208 = vadd.f32 %v2198, %v2206
      %v2209 = vadd.f32 %v2199, %v2206
      %v2210 = vadd.f32 %v2200, %v2206
      %v2211 = vadd.f32 %v2201, %v2206
      %vm2212 = vcmask 64512
      %v2213 = vsel %vm2212, %v2208, -inf
      %2214 = vmax.xlane.f32.xlu0 %v2213
      %v2215 = vpop.xlane.xlu0 %2214
      %v2216 = vsel %vm2212, %v2209, -inf
      %2217 = vmax.xlane.f32.xlu0 %v2216
      %v2218 = vpop.xlane.xlu0 %2217
      %v2219 = vsel %vm2212, %v2210, -inf
      %2220 = vmax.xlane.f32.xlu0 %v2219
      %v2221 = vpop.xlane.xlu0 %2220
      %v2222 = vsel %vm2212, %v2211, -inf
      %2223 = vmax.xlane.f32.xlu0 %v2222
      %v2224 = vpop.xlane.xlu0 %2223
      %v2225 = vsub.f32 %v2208, %v2215
      %v2226 = vsub.f32 %v2209, %v2218
      %v2227 = vsub.f32 %v2210, %v2221
      %v2228 = vsub.f32 %v2211, %v2224
      %v2229 = vmul.f32 %v2225, 1.442695
      %v2230 = vpow.pop %v2229
      %v2231 = vmul.f32 %v2226, 1.442695
      %v2232 = vpow.pop %v2231
      %v2233 = vmul.f32 %v2227, 1.442695
      %v2234 = vpow.pop %v2233
      %v2235 = vmul.f32 %v2228, 1.442695
      %v2236 = vpow.pop %v2235
      %v2237 = vsel %vm2212, %v2230, 0.0
      %2238 = vadd.xlane.f32.xlu0 %v2237
      %v2239 = vpop.xlane.xlu0 %2238
      %v2240 = vsel %vm2212, %v2232, 0.0
      %2241 = vadd.xlane.f32.xlu0 %v2240
      %v2242 = vpop.xlane.xlu0 %2241
      %v2243 = vsel %vm2212, %v2234, 0.0
      %2244 = vadd.xlane.f32.xlu0 %v2243
      %v2245 = vpop.xlane.xlu0 %2244
      %v2246 = vsel %vm2212, %v2236, 0.0
      %2247 = vadd.xlane.f32.xlu0 %v2246
      %v2248 = vpop.xlane.xlu0 %2247
      %v2249 = vrcp.pop %v2239
      %v2250 = vrcp.pop %v2242
      %v2251 = vrcp.pop %v2245
      %v2252 = vrcp.pop %v2248
      %v2253 = vmul.f32 %v2230, %v2249
      %v2254 = vmul.f32 %v2232, %v2250
      %v2255 = vmul.f32 %v2234, %v2251
      %v2256 = vmul.f32 %v2236, %v2252
      %v2257 = vpack.c.bf16 %v2253, %v2253
      %v2258 = vpack.c.bf16 %v2254, %v2254
      %v2259 = vpack.c.bf16 %v2255, %v2255
      %v2260 = vpack.c.bf16 %v2256, %v2256
      %v2261 = vpack.c.bf16 %v1736, %v1736
      %v2262 = vpack.c.bf16 %v1824, %v1824
      %v2263 = vpack.c.bf16 %v1912, %v1912
      %v2264 = vpack.c.bf16 %v2000, %v2000
      %v2266 = vsel %vm2212, %v2257, 0
      %vm2268 = vcmask 1043456
      %v2270 = vsel %vm2268, %v2261, 0
      %2272 = vmatprep.subr.bf16.mxu0 0
      %2273 = vmatpush1.bf16.msra.mxu0 0
      %2274 = vmatprep.subr.bf16.mxu0 0
      %2275 = vmatpush1.bf16.msra.mxu0 0
      %2276 = vmatprep.subr.bf16.mxu0 0
      %2277 = vmatpush1.bf16.msra.mxu0 0
      %2278 = vmatprep.subr.bf16.mxu0 0
      %2279 = vmatpush1.bf16.msra.mxu0 0
      %2280 = vmatprep.subr.bf16.mxu0 0
      %2281 = vmatpush1.bf16.msra.mxu0 0
      %2282 = vmatprep.subr.bf16.mxu0 0
      %2283 = vmatpush1.bf16.msra.mxu0 0
      %2284 = vmatprep.subr.bf16.mxu0 0
      %2285 = vmatpush1.bf16.msra.mxu0 0
      %2286 = vmatprep.subr.bf16.mxu0 0
      %2287 = vmatpush1.bf16.msra.mxu0 %v2270
      %2288 = vmatprep.subr.bf16.mxu0 0
      %2289 = vmatpush2.bf16.msra.mxu0 0
      %2290 = vmatprep.subr.bf16.mxu0 0
      %2291 = vmatpush2.bf16.msra.mxu0 0
      %2292 = vmatprep.subr.bf16.mxu0 0
      %2293 = vmatpush2.bf16.msra.mxu0 0
      %2294 = vmatprep.subr.bf16.mxu0 0
      %2295 = vmatpush2.bf16.msra.mxu0 0
      %2296 = vmatprep.subr.bf16.mxu0 0
      %2297 = vmatpush2.bf16.msra.mxu0 0
      %2298 = vmatprep.subr.bf16.mxu0 0
      %2299 = vmatpush2.bf16.msra.mxu0 0
      %2300 = vmatprep.subr.bf16.mxu0 0
      %2301 = vmatpush2.bf16.msra.mxu0 0
      %2302 = vmatprep.subr.bf16.mxu0 0
      %2303 = vmatpush2.bf16.msra.mxu0 0
      %2304 = vmatprep.mubr.bf16.mxu0 0
      %2305 = vmatmul.mubr.bf16.gmra.mxu0 %v2266
      %v2306 = vpop.f32.mrf.mxu0
      %v2307 = vadd.f32 0.0, %v2306
      %v2308 = vpop.f32.mrf.mxu0
      %v2309 = vpop.f32.mrf.mxu0
      %v2310 = vpop.f32.mrf.mxu0
      %2311 = vdwg.mxu0
      %v2313 = vsel %vm2212, %v2258, 0
      %v2316 = vsel %vm2268, %v2262, 0
      %2318 = vmatprep.subr.bf16.mxu0 0
      %2319 = vmatpush1.bf16.msra.mxu0 0
      %2320 = vmatprep.subr.bf16.mxu0 0
      %2321 = vmatpush1.bf16.msra.mxu0 0
      %2322 = vmatprep.subr.bf16.mxu0 0
      %2323 = vmatpush1.bf16.msra.mxu0 0
      %2324 = vmatprep.subr.bf16.mxu0 0
      %2325 = vmatpush1.bf16.msra.mxu0 0
      %2326 = vmatprep.subr.bf16.mxu0 0
      %2327 = vmatpush1.bf16.msra.mxu0 0
      %2328 = vmatprep.subr.bf16.mxu0 0
      %2329 = vmatpush1.bf16.msra.mxu0 0
      %2330 = vmatprep.subr.bf16.mxu0 0
      %2331 = vmatpush1.bf16.msra.mxu0 0
      %2332 = vmatprep.subr.bf16.mxu0 0
      %2333 = vmatpush1.bf16.msra.mxu0 %v2316
      %2334 = vmatprep.subr.bf16.mxu0 0
      %2335 = vmatpush2.bf16.msra.mxu0 0
      %2336 = vmatprep.subr.bf16.mxu0 0
      %2337 = vmatpush2.bf16.msra.mxu0 0
      %2338 = vmatprep.subr.bf16.mxu0 0
      %2339 = vmatpush2.bf16.msra.mxu0 0
      %2340 = vmatprep.subr.bf16.mxu0 0
      %2341 = vmatpush2.bf16.msra.mxu0 0
      %2342 = vmatprep.subr.bf16.mxu0 0
      %2343 = vmatpush2.bf16.msra.mxu0 0
      %2344 = vmatprep.subr.bf16.mxu0 0
      %2345 = vmatpush2.bf16.msra.mxu0 0
      %2346 = vmatprep.subr.bf16.mxu0 0
      %2347 = vmatpush2.bf16.msra.mxu0 0
      %2348 = vmatprep.subr.bf16.mxu0 0
      %2349 = vmatpush2.bf16.msra.mxu0 0
      %2350 = vmatprep.mubr.bf16.mxu0 0
      %2351 = vmatmul.mubr.bf16.gmra.mxu0 %v2313
      %v2352 = vpop.f32.mrf.mxu0
      %v2353 = vadd.f32 0.0, %v2352
      %v2354 = vpop.f32.mrf.mxu0
      %v2355 = vpop.f32.mrf.mxu0
      %v2356 = vpop.f32.mrf.mxu0
      %2357 = vdwg.mxu0
      %v2359 = vsel %vm2212, %v2259, 0
      %v2362 = vsel %vm2268, %v2263, 0
      %2364 = vmatprep.subr.bf16.mxu0 0
      %2365 = vmatpush1.bf16.msra.mxu0 0
      %2366 = vmatprep.subr.bf16.mxu0 0
      %2367 = vmatpush1.bf16.msra.mxu0 0
      %2368 = vmatprep.subr.bf16.mxu0 0
      %2369 = vmatpush1.bf16.msra.mxu0 0
      %2370 = vmatprep.subr.bf16.mxu0 0
      %2371 = vmatpush1.bf16.msra.mxu0 0
      %2372 = vmatprep.subr.bf16.mxu0 0
      %2373 = vmatpush1.bf16.msra.mxu0 0
      %2374 = vmatprep.subr.bf16.mxu0 0
      %2375 = vmatpush1.bf16.msra.mxu0 0
      %2376 = vmatprep.subr.bf16.mxu0 0
      %2377 = vmatpush1.bf16.msra.mxu0 0
      %2378 = vmatprep.subr.bf16.mxu0 0
      %2379 = vmatpush1.bf16.msra.mxu0 %v2362
      %2380 = vmatprep.subr.bf16.mxu0 0
      %2381 = vmatpush2.bf16.msra.mxu0 0
      %2382 = vmatprep.subr.bf16.mxu0 0
      %2383 = vmatpush2.bf16.msra.mxu0 0
      %2384 = vmatprep.subr.bf16.mxu0 0
      %2385 = vmatpush2.bf16.msra.mxu0 0
      %2386 = vmatprep.subr.bf16.mxu0 0
      %2387 = vmatpush2.bf16.msra.mxu0 0
      %2388 = vmatprep.subr.bf16.mxu0 0
      %2389 = vmatpush2.bf16.msra.mxu0 0
      %2390 = vmatprep.subr.bf16.mxu0 0
      %2391 = vmatpush2.bf16.msra.mxu0 0
      %2392 = vmatprep.subr.bf16.mxu0 0
      %2393 = vmatpush2.bf16.msra.mxu0 0
      %2394 = vmatprep.subr.bf16.mxu0 0
      %2395 = vmatpush2.bf16.msra.mxu0 0
      %2396 = vmatprep.mubr.bf16.mxu0 0
      %2397 = vmatmul.mubr.bf16.gmra.mxu0 %v2359
      %v2398 = vpop.f32.mrf.mxu0
      %v2399 = vadd.f32 0.0, %v2398
      %v2400 = vpop.f32.mrf.mxu0
      %v2401 = vpop.f32.mrf.mxu0
      %v2402 = vpop.f32.mrf.mxu0
      %2403 = vdwg.mxu0
      %v2405 = vsel %vm2212, %v2260, 0
      %v2408 = vsel %vm2268, %v2264, 0
      %2410 = vmatprep.subr.bf16.mxu0 0
      %2411 = vmatpush1.bf16.msra.mxu0 0
      %2412 = vmatprep.subr.bf16.mxu0 0
      %2413 = vmatpush1.bf16.msra.mxu0 0
      %2414 = vmatprep.subr.bf16.mxu0 0
      %2415 = vmatpush1.bf16.msra.mxu0 0
      %2416 = vmatprep.subr.bf16.mxu0 0
      %2417 = vmatpush1.bf16.msra.mxu0 0
      %2418 = vmatprep.subr.bf16.mxu0 0
      %2419 = vmatpush1.bf16.msra.mxu0 0
      %2420 = vmatprep.subr.bf16.mxu0 0
      %2421 = vmatpush1.bf16.msra.mxu0 0
      %2422 = vmatprep.subr.bf16.mxu0 0
      %2423 = vmatpush1.bf16.msra.mxu0 0
      %2424 = vmatprep.subr.bf16.mxu0 0
      %2425 = vmatpush1.bf16.msra.mxu0 %v2408
      %2426 = vmatprep.subr.bf16.mxu0 0
      %2427 = vmatpush2.bf16.msra.mxu0 0
      %2428 = vmatprep.subr.bf16.mxu0 0
      %2429 = vmatpush2.bf16.msra.mxu0 0
      %2430 = vmatprep.subr.bf16.mxu0 0
      %2431 = vmatpush2.bf16.msra.mxu0 0
      %2432 = vmatprep.subr.bf16.mxu0 0
      %2433 = vmatpush2.bf16.msra.mxu0 0
      %2434 = vmatprep.subr.bf16.mxu0 0
      %2435 = vmatpush2.bf16.msra.mxu0 0
      %2436 = vmatprep.subr.bf16.mxu0 0
      %2437 = vmatpush2.bf16.msra.mxu0 0
      %2438 = vmatprep.subr.bf16.mxu0 0
      %2439 = vmatpush2.bf16.msra.mxu0 0
      %2440 = vmatprep.subr.bf16.mxu0 0
      %2441 = vmatpush2.bf16.msra.mxu0 0
      %2442 = vmatprep.mubr.bf16.mxu0 0
      %2443 = vmatmul.mubr.bf16.gmra.mxu0 %v2405
      %v2444 = vpop.f32.mrf.mxu0
      %v2445 = vadd.f32 0.0, %v2444
      %v2446 = vpop.f32.mrf.mxu0
      %v2447 = vpop.f32.mrf.mxu0
      %v2448 = vpop.f32.mrf.mxu0
      %2449 = vdwg.mxu0
      %v2450 = vpack.c.bf16 %v2307, %v2307
      %v2451 = vpack.c.bf16 %v2353, %v2353
      %v2452 = vpack.c.bf16 %v2399, %v2399
      %v2453 = vpack.c.bf16 %v2445, %v2445
      %v2454 = vld [vmem:[%s6] sm:$0xf]
      %v2455 = vld [vmem:[%s6 + $0x4] sm:$0xf]
      %v2456 = vld [vmem:[%s6 + $0x8] sm:$0xf]
      %v2457 = vld [vmem:[%s6 + $0xc] sm:$0xf]
      %v2458 = vld [vmem:[%s6 + $0x10] sm:$0xf]
      %v2459 = vld [vmem:[%s6 + $0x14] sm:$0xf]
      %v2460 = vld [vmem:[%s6 + $0x18] sm:$0xf]
      %v2461 = vld [vmem:[%s6 + $0x1c] sm:$0xf]
      %v2462 = vld [vmem:[%s6 + $0x20] sm:$0xf]
      %v2463 = vld [vmem:[%s6 + $0x24] sm:$0xf]
      %v2464 = vld [vmem:[%s6 + $0x28] sm:$0xf]
      %v2465 = vld [vmem:[%s6 + $0x2c] sm:$0xf]
      %v2466 = vld [vmem:[%s6 + $0x30] sm:$0xf]
      %v2467 = vld [vmem:[%s6 + $0x34] sm:$0xf]
      %v2468 = vld [vmem:[%s6 + $0x38] sm:$0xf]
      %v2469 = vld [vmem:[%s6 + $0x3c] sm:$0xf]
      %v2474 = vunpack.c.l.b16 %v2454
      %v2475 = vunpack.c.l.b16 %v2455
      %v2476 = vunpack.c.l.b16 %v2456
      %v2477 = vunpack.c.l.b16 %v2457
      %v2478 = vpack.c.b16 %v2475, %v2474
      %v2479 = vpack.c.b16 %v2477, %v2476
      %v2483 = vsel %vm2013, %v2450, 0
      %2485 = vmatprep.subr.bf16.mxu0 0
      %2486 = vmatpush1.bf16.msra.mxu0 0
      %2487 = vmatprep.subr.bf16.mxu0 0
      %2488 = vmatpush1.bf16.msra.mxu0 0
      %2489 = vmatprep.subr.bf16.mxu0 0
      %2490 = vmatpush1.bf16.msra.mxu0 0
      %2491 = vmatprep.subr.bf16.mxu0 0
      %2492 = vmatpush1.bf16.msra.mxu0 0
      %2493 = vmatprep.subr.bf16.mxu0 0
      %2494 = vmatpush1.bf16.msra.mxu0 0
      %2495 = vmatprep.subr.bf16.mxu0 0
      %2496 = vmatpush1.bf16.msra.mxu0 0
      %2497 = vmatprep.subr.bf16.mxu0 0
      %2498 = vmatpush1.bf16.msra.mxu0 %v2479
      %2499 = vmatprep.subr.bf16.mxu0 0
      %2500 = vmatpush1.bf16.msra.mxu0 %v2478
      %2501 = vmatprep.subr.bf16.mxu0 0
      %2502 = vmatpush2.bf16.msra.mxu0 0
      %2503 = vmatprep.subr.bf16.mxu0 0
      %2504 = vmatpush2.bf16.msra.mxu0 0
      %2505 = vmatprep.subr.bf16.mxu0 0
      %2506 = vmatpush2.bf16.msra.mxu0 0
      %2507 = vmatprep.subr.bf16.mxu0 0
      %2508 = vmatpush2.bf16.msra.mxu0 0
      %2509 = vmatprep.subr.bf16.mxu0 0
      %2510 = vmatpush2.bf16.msra.mxu0 0
      %2511 = vmatprep.subr.bf16.mxu0 0
      %2512 = vmatpush2.bf16.msra.mxu0 0
      %2513 = vmatprep.subr.bf16.mxu0 0
      %2514 = vmatpush2.bf16.msra.mxu0 0
      %2515 = vmatprep.subr.bf16.mxu0 0
      %2516 = vmatpush2.bf16.msra.mxu0 0
      %2517 = vmatprep.mubr.bf16.mxu0 0
      %2518 = vmatmul.mubr.bf16.gmra.mxu0 %v2483
      %v2519 = vpop.f32.mrf.mxu0
      %v2520 = vadd.f32 0.0, %v2519
      %v2521 = vpop.f32.mrf.mxu0
      %v2522 = vpop.f32.mrf.mxu0
      %v2523 = vpop.f32.mrf.mxu0
      %2524 = vdwg.mxu0
      %v2529 = vunpack.c.l.b16 %v2458
      %v2530 = vunpack.c.l.b16 %v2459
      %v2531 = vunpack.c.l.b16 %v2460
      %v2532 = vunpack.c.l.b16 %v2461
      %v2533 = vpack.c.b16 %v2530, %v2529
      %v2534 = vpack.c.b16 %v2532, %v2531
      %v2538 = vsel %vm2013, %v2451, 0
      %2540 = vmatprep.subr.bf16.mxu0 0
      %2541 = vmatpush1.bf16.msra.mxu0 0
      %2542 = vmatprep.subr.bf16.mxu0 0
      %2543 = vmatpush1.bf16.msra.mxu0 0
      %2544 = vmatprep.subr.bf16.mxu0 0
      %2545 = vmatpush1.bf16.msra.mxu0 0
      %2546 = vmatprep.subr.bf16.mxu0 0
      %2547 = vmatpush1.bf16.msra.mxu0 0
      %2548 = vmatprep.subr.bf16.mxu0 0
      %2549 = vmatpush1.bf16.msra.mxu0 0
      %2550 = vmatprep.subr.bf16.mxu0 0
      %2551 = vmatpush1.bf16.msra.mxu0 0
      %2552 = vmatprep.subr.bf16.mxu0 0
      %2553 = vmatpush1.bf16.msra.mxu0 %v2534
      %2554 = vmatprep.subr.bf16.mxu0 0
      %2555 = vmatpush1.bf16.msra.mxu0 %v2533
      %2556 = vmatprep.subr.bf16.mxu0 0
      %2557 = vmatpush2.bf16.msra.mxu0 0
      %2558 = vmatprep.subr.bf16.mxu0 0
      %2559 = vmatpush2.bf16.msra.mxu0 0
      %2560 = vmatprep.subr.bf16.mxu0 0
      %2561 = vmatpush2.bf16.msra.mxu0 0
      %2562 = vmatprep.subr.bf16.mxu0 0
      %2563 = vmatpush2.bf16.msra.mxu0 0
      %2564 = vmatprep.subr.bf16.mxu0 0
      %2565 = vmatpush2.bf16.msra.mxu0 0
      %2566 = vmatprep.subr.bf16.mxu0 0
      %2567 = vmatpush2.bf16.msra.mxu0 0
      %2568 = vmatprep.subr.bf16.mxu0 0
      %2569 = vmatpush2.bf16.msra.mxu0 0
      %2570 = vmatprep.subr.bf16.mxu0 0
      %2571 = vmatpush2.bf16.msra.mxu0 0
      %2572 = vmatprep.mubr.bf16.mxu0 0
      %2573 = vmatmul.mubr.bf16.gmra.mxu0 %v2538
      %v2574 = vpop.f32.mrf.mxu0
      %v2575 = vadd.f32 0.0, %v2574
      %v2576 = vpop.f32.mrf.mxu0
      %v2577 = vpop.f32.mrf.mxu0
      %v2578 = vpop.f32.mrf.mxu0
      %2579 = vdwg.mxu0
      %v2584 = vunpack.c.l.b16 %v2462
      %v2585 = vunpack.c.l.b16 %v2463
      %v2586 = vunpack.c.l.b16 %v2464
      %v2587 = vunpack.c.l.b16 %v2465
      %v2588 = vpack.c.b16 %v2585, %v2584
      %v2589 = vpack.c.b16 %v2587, %v2586
      %v2593 = vsel %vm2013, %v2452, 0
      %2595 = vmatprep.subr.bf16.mxu0 0
      %2596 = vmatpush1.bf16.msra.mxu0 0
      %2597 = vmatprep.subr.bf16.mxu0 0
      %2598 = vmatpush1.bf16.msra.mxu0 0
      %2599 = vmatprep.subr.bf16.mxu0 0
      %2600 = vmatpush1.bf16.msra.mxu0 0
      %2601 = vmatprep.subr.bf16.mxu0 0
      %2602 = vmatpush1.bf16.msra.mxu0 0
      %2603 = vmatprep.subr.bf16.mxu0 0
      %2604 = vmatpush1.bf16.msra.mxu0 0
      %2605 = vmatprep.subr.bf16.mxu0 0
      %2606 = vmatpush1.bf16.msra.mxu0 0
      %2607 = vmatprep.subr.bf16.mxu0 0
      %2608 = vmatpush1.bf16.msra.mxu0 %v2589
      %2609 = vmatprep.subr.bf16.mxu0 0
      %2610 = vmatpush1.bf16.msra.mxu0 %v2588
      %2611 = vmatprep.subr.bf16.mxu0 0
      %2612 = vmatpush2.bf16.msra.mxu0 0
      %2613 = vmatprep.subr.bf16.mxu0 0
      %2614 = vmatpush2.bf16.msra.mxu0 0
      %2615 = vmatprep.subr.bf16.mxu0 0
      %2616 = vmatpush2.bf16.msra.mxu0 0
      %2617 = vmatprep.subr.bf16.mxu0 0
      %2618 = vmatpush2.bf16.msra.mxu0 0
      %2619 = vmatprep.subr.bf16.mxu0 0
      %2620 = vmatpush2.bf16.msra.mxu0 0
      %2621 = vmatprep.subr.bf16.mxu0 0
      %2622 = vmatpush2.bf16.msra.mxu0 0
      %2623 = vmatprep.subr.bf16.mxu0 0
      %2624 = vmatpush2.bf16.msra.mxu0 0
      %2625 = vmatprep.subr.bf16.mxu0 0
      %2626 = vmatpush2.bf16.msra.mxu0 0
      %2627 = vmatprep.mubr.bf16.mxu0 0
      %2628 = vmatmul.mubr.bf16.gmra.mxu0 %v2593
      %v2629 = vpop.f32.mrf.mxu0
      %v2630 = vadd.f32 0.0, %v2629
      %v2631 = vpop.f32.mrf.mxu0
      %v2632 = vpop.f32.mrf.mxu0
      %v2633 = vpop.f32.mrf.mxu0
      %2634 = vdwg.mxu0
      %v2639 = vunpack.c.l.b16 %v2466
      %v2640 = vunpack.c.l.b16 %v2467
      %v2641 = vunpack.c.l.b16 %v2468
      %v2642 = vunpack.c.l.b16 %v2469
      %v2643 = vpack.c.b16 %v2640, %v2639
      %v2644 = vpack.c.b16 %v2642, %v2641
      %v2648 = vsel %vm2013, %v2453, 0
      %2650 = vmatprep.subr.bf16.mxu0 0
      %2651 = vmatpush1.bf16.msra.mxu0 0
      %2652 = vmatprep.subr.bf16.mxu0 0
      %2653 = vmatpush1.bf16.msra.mxu0 0
      %2654 = vmatprep.subr.bf16.mxu0 0
      %2655 = vmatpush1.bf16.msra.mxu0 0
      %2656 = vmatprep.subr.bf16.mxu0 0
      %2657 = vmatpush1.bf16.msra.mxu0 0
      %2658 = vmatprep.subr.bf16.mxu0 0
      %2659 = vmatpush1.bf16.msra.mxu0 0
      %2660 = vmatprep.subr.bf16.mxu0 0
      %2661 = vmatpush1.bf16.msra.mxu0 0
      %2662 = vmatprep.subr.bf16.mxu0 0
      %2663 = vmatpush1.bf16.msra.mxu0 %v2644
      %2664 = vmatprep.subr.bf16.mxu0 0
      %2665 = vmatpush1.bf16.msra.mxu0 %v2643
      %2666 = vmatprep.subr.bf16.mxu0 0
      %2667 = vmatpush2.bf16.msra.mxu0 0
      %2668 = vmatprep.subr.bf16.mxu0 0
      %2669 = vmatpush2.bf16.msra.mxu0 0
      %2670 = vmatprep.subr.bf16.mxu0 0
      %2671 = vmatpush2.bf16.msra.mxu0 0
      %2672 = vmatprep.subr.bf16.mxu0 0
      %2673 = vmatpush2.bf16.msra.mxu0 0
      %2674 = vmatprep.subr.bf16.mxu0 0
      %2675 = vmatpush2.bf16.msra.mxu0 0
      %2676 = vmatprep.subr.bf16.mxu0 0
      %2677 = vmatpush2.bf16.msra.mxu0 0
      %2678 = vmatprep.subr.bf16.mxu0 0
      %2679 = vmatpush2.bf16.msra.mxu0 0
      %2680 = vmatprep.subr.bf16.mxu0 0
      %2681 = vmatpush2.bf16.msra.mxu0 0
      %2682 = vmatprep.mubr.bf16.mxu0 0
      %2683 = vmatmul.mubr.bf16.gmra.mxu0 %v2648
      %v2684 = vpop.f32.mrf.mxu0
      %v2685 = vadd.f32 0.0, %v2684
      %v2686 = vpop.f32.mrf.mxu0
      %v2687 = vpop.f32.mrf.mxu0
      %v2688 = vpop.f32.mrf.mxu0
      %2689 = vdwg.mxu0
      %v2690 = vadd.f32 %v2520, %v2575
      %v2691 = vadd.f32 %v2690, %v2630
      %v2692 = vadd.f32 %v2691, %v2685
      %v2693 = vld [vmem:[%s7] sm:$0x1]
      %v2695 = vlaneseq
      %v2696 = vshrl.u32 %v2695, 7
      %v2697 = vsub.s32 0, %v2696
      %v2698 = vrot.slane %v2693, %v2697
      %v2700 = vadd.f32 %v2692, %v2698
      %v2701 = vadd.f32 %v668, %v2700
      %v2702 = vld [vmem:[%s8] sm:$0x1]
      %v2703 = vld [vmem:[%s9] sm:$0x1]
      %2704 = vadd.xlane.f32.xlu0 %v2701
      %v2705 = vpop.xlane.xlu0 %2704
      %v2706 = vmul.f32 %v2705, %v645
      %v2707 = vsub.f32 %v2701, %v2706
      %v2708 = vmul.f32 %v2707, %v2707
      %2709 = vadd.xlane.f32.xlu0 %v2708
      %v2710 = vpop.xlane.xlu0 %2709
      %v2711 = vmul.f32 %v2710, %v645
      %v2712 = vadd.f32 %v2711, 1e-05
      %v2713 = vrsqrt.pop %v2712
      %v2714 = vmul.f32 %v2707, %v2713
      %v2716 = vlaneseq
      %v2717 = vshrl.u32 %v2716, 7
      %v2718 = vsub.s32 0, %v2717
      %v2719 = vrot.slane %v2702, %v2718
      %v2721 = vmul.f32 %v2714, %v2719
      %v2723 = vlaneseq
      %v2724 = vshrl.u32 %v2723, 7
      %v2725 = vsub.s32 0, %v2724
      %v2726 = vrot.slane %v2703, %v2725
      %v2728 = vadd.f32 %v2721, %v2726
      %v2729 = vpack.c.bf16 %v2728, %v2728
      %v2730 = vld [vmem:[%s10] sm:$0xff]
      %v2731 = vld [vmem:[%s10 + $0x8] sm:$0xff]
      %v2732 = vld [vmem:[%s10 + $0x10] sm:$0xff]
      %v2733 = vld [vmem:[%s10 + $0x18] sm:$0xff]
      %v2734 = vld [vmem:[%s10 + $0x20] sm:$0xff]
      %v2735 = vld [vmem:[%s10 + $0x28] sm:$0xff]
      %v2736 = vld [vmem:[%s10 + $0x30] sm:$0xff]
      %v2737 = vld [vmem:[%s10 + $0x38] sm:$0xff]
      %v2738 = vld [vmem:[%s10 + $0x40] sm:$0xff]
      %v2739 = vld [vmem:[%s10 + $0x48] sm:$0xff]
      %v2740 = vld [vmem:[%s10 + $0x50] sm:$0xff]
      %v2741 = vld [vmem:[%s10 + $0x58] sm:$0xff]
      %v2742 = vld [vmem:[%s10 + $0x60] sm:$0xff]
      %v2743 = vld [vmem:[%s10 + $0x68] sm:$0xff]
      %v2744 = vld [vmem:[%s10 + $0x70] sm:$0xff]
      %v2745 = vld [vmem:[%s10 + $0x78] sm:$0xff]
      %v2746 = vld [vmem:[%s10 + $0x80] sm:$0xff]
      %v2747 = vld [vmem:[%s10 + $0x88] sm:$0xff]
      %v2748 = vld [vmem:[%s10 + $0x90] sm:$0xff]
      %v2749 = vld [vmem:[%s10 + $0x98] sm:$0xff]
      %v2750 = vld [vmem:[%s10 + $0xa0] sm:$0xff]
      %v2751 = vld [vmem:[%s10 + $0xa8] sm:$0xff]
      %v2752 = vld [vmem:[%s10 + $0xb0] sm:$0xff]
      %v2753 = vld [vmem:[%s10 + $0xb8] sm:$0xff]
      %v2754 = vld [vmem:[%s10 + $0xc0] sm:$0xff]
      %v2755 = vld [vmem:[%s10 + $0xc8] sm:$0xff]
      %v2756 = vld [vmem:[%s10 + $0xd0] sm:$0xff]
      %v2757 = vld [vmem:[%s10 + $0xd8] sm:$0xff]
      %v2758 = vld [vmem:[%s10 + $0xe0] sm:$0xff]
      %v2759 = vld [vmem:[%s10 + $0xe8] sm:$0xff]
      %v2760 = vld [vmem:[%s10 + $0xf0] sm:$0xff]
      %v2761 = vld [vmem:[%s10 + $0xf8] sm:$0xff]
      %v2762 = vld [vmem:[%s11] sm:$0xf]
      %v2764 = vlaneseq
      %v2765 = vshrl.u32 %v2764, 7
      %v2766 = vsub.s32 0, %v2765
      %v2767 = vrot.slane %v2762, %v2766
      %v2768 = vlaneseq
      %v2769 = vshrl.u32 %v2768, 7
      %v2770 = vsub.s32 1, %v2769
      %v2771 = vrot.slane %v2762, %v2770
      %v2772 = vlaneseq
      %v2773 = vshrl.u32 %v2772, 7
      %v2774 = vsub.s32 2, %v2773
      %v2775 = vrot.slane %v2762, %v2774
      %v2776 = vlaneseq
      %v2777 = vshrl.u32 %v2776, 7
      %v2778 = vsub.s32 3, %v2777
      %v2779 = vrot.slane %v2762, %v2778
      %v2816 = vunpack.c.l.b16 %v2730
      %v2817 = vunpack.c.h.b16 %v2730
      %v2818 = vunpack.c.l.b16 %v2731
      %v2819 = vunpack.c.h.b16 %v2731
      %v2820 = vunpack.c.l.b16 %v2732
      %v2821 = vunpack.c.h.b16 %v2732
      %v2822 = vunpack.c.l.b16 %v2733
      %v2823 = vunpack.c.h.b16 %v2733
      %v2824 = vunpack.c.l.b16 %v2734
      %v2825 = vunpack.c.h.b16 %v2734
      %v2826 = vunpack.c.l.b16 %v2735
      %v2827 = vunpack.c.h.b16 %v2735
      %v2828 = vunpack.c.l.b16 %v2736
      %v2829 = vunpack.c.h.b16 %v2736
      %v2830 = vunpack.c.l.b16 %v2737
      %v2831 = vunpack.c.h.b16 %v2737
      %v2832 = vunpack.c.l.b16 %v2738
      %v2833 = vunpack.c.h.b16 %v2738
      %v2834 = vunpack.c.l.b16 %v2739
      %v2835 = vunpack.c.h.b16 %v2739
      %v2836 = vunpack.c.l.b16 %v2740
      %v2837 = vunpack.c.h.b16 %v2740
      %v2838 = vunpack.c.l.b16 %v2741
      %v2839 = vunpack.c.h.b16 %v2741
      %v2840 = vunpack.c.l.b16 %v2742
      %v2841 = vunpack.c.h.b16 %v2742
      %v2842 = vunpack.c.l.b16 %v2743
      %v2843 = vunpack.c.h.b16 %v2743
      %v2844 = vunpack.c.l.b16 %v2744
      %v2845 = vunpack.c.h.b16 %v2744
      %v2846 = vunpack.c.l.b16 %v2745
      %v2847 = vunpack.c.h.b16 %v2745
      %v2848 = vunpack.c.l.b16 %v2746
      %v2849 = vunpack.c.h.b16 %v2746
      %v2850 = vunpack.c.l.b16 %v2747
      %v2851 = vunpack.c.h.b16 %v2747
      %v2852 = vunpack.c.l.b16 %v2748
      %v2853 = vunpack.c.h.b16 %v2748
      %v2854 = vunpack.c.l.b16 %v2749
      %v2855 = vunpack.c.h.b16 %v2749
      %v2856 = vunpack.c.l.b16 %v2750
      %v2857 = vunpack.c.h.b16 %v2750
      %v2858 = vunpack.c.l.b16 %v2751
      %v2859 = vunpack.c.h.b16 %v2751
      %v2860 = vunpack.c.l.b16 %v2752
      %v2861 = vunpack.c.h.b16 %v2752
      %v2862 = vunpack.c.l.b16 %v2753
      %v2863 = vunpack.c.h.b16 %v2753
      %v2864 = vunpack.c.l.b16 %v2754
      %v2865 = vunpack.c.h.b16 %v2754
      %v2866 = vunpack.c.l.b16 %v2755
      %v2867 = vunpack.c.h.b16 %v2755
      %v2868 = vunpack.c.l.b16 %v2756
      %v2869 = vunpack.c.h.b16 %v2756
      %v2870 = vunpack.c.l.b16 %v2757
      %v2871 = vunpack.c.h.b16 %v2757
      %v2872 = vunpack.c.l.b16 %v2758
      %v2873 = vunpack.c.h.b16 %v2758
      %v2874 = vunpack.c.l.b16 %v2759
      %v2875 = vunpack.c.h.b16 %v2759
      %v2876 = vunpack.c.l.b16 %v2760
      %v2877 = vunpack.c.h.b16 %v2760
      %v2878 = vunpack.c.l.b16 %v2761
      %v2879 = vunpack.c.h.b16 %v2761
      %v2880 = vpack.c.b16 %v2820, %v2816
      %v2881 = vpack.c.b16 %v2821, %v2817
      %v2882 = vpack.c.b16 %v2822, %v2818
      %v2883 = vpack.c.b16 %v2823, %v2819
      %v2884 = vpack.c.b16 %v2828, %v2824
      %v2885 = vpack.c.b16 %v2829, %v2825
      %v2886 = vpack.c.b16 %v2830, %v2826
      %v2887 = vpack.c.b16 %v2831, %v2827
      %v2888 = vpack.c.b16 %v2836, %v2832
      %v2889 = vpack.c.b16 %v2837, %v2833
      %v2890 = vpack.c.b16 %v2838, %v2834
      %v2891 = vpack.c.b16 %v2839, %v2835
      %v2892 = vpack.c.b16 %v2844, %v2840
      %v2893 = vpack.c.b16 %v2845, %v2841
      %v2894 = vpack.c.b16 %v2846, %v2842
      %v2895 = vpack.c.b16 %v2847, %v2843
      %v2896 = vpack.c.b16 %v2852, %v2848
      %v2897 = vpack.c.b16 %v2853, %v2849
      %v2898 = vpack.c.b16 %v2854, %v2850
      %v2899 = vpack.c.b16 %v2855, %v2851
      %v2900 = vpack.c.b16 %v2860, %v2856
      %v2901 = vpack.c.b16 %v2861, %v2857
      %v2902 = vpack.c.b16 %v2862, %v2858
      %v2903 = vpack.c.b16 %v2863, %v2859
      %v2904 = vpack.c.b16 %v2868, %v2864
      %v2905 = vpack.c.b16 %v2869, %v2865
      %v2906 = vpack.c.b16 %v2870, %v2866
      %v2907 = vpack.c.b16 %v2871, %v2867
      %v2908 = vpack.c.b16 %v2876, %v2872
      %v2909 = vpack.c.b16 %v2877, %v2873
      %v2910 = vpack.c.b16 %v2878, %v2874
      %v2911 = vpack.c.b16 %v2879, %v2875
      %2944 = vmatprep.subr.bf16.mxu0 %v2909
      %2945 = vmatpush1.bf16.msra.mxu0 %v2908
      %2946 = vmatprep.subr.bf16.mxu0 %v2905
      %2947 = vmatpush1.bf16.msra.mxu0 %v2904
      %2948 = vmatprep.subr.bf16.mxu0 %v2901
      %2949 = vmatpush1.bf16.msra.mxu0 %v2900
      %2950 = vmatprep.subr.bf16.mxu0 %v2897
      %2951 = vmatpush1.bf16.msra.mxu0 %v2896
      %2952 = vmatprep.subr.bf16.mxu0 %v2893
      %2953 = vmatpush1.bf16.msra.mxu0 %v2892
      %2954 = vmatprep.subr.bf16.mxu0 %v2889
      %2955 = vmatpush1.bf16.msra.mxu0 %v2888
      %2956 = vmatprep.subr.bf16.mxu0 %v2885
      %2957 = vmatpush1.bf16.msra.mxu0 %v2884
      %2958 = vmatprep.subr.bf16.mxu0 %v2881
      %2959 = vmatpush1.bf16.msra.mxu0 %v2880
      %2960 = vmatprep.subr.bf16.mxu0 0
      %2961 = vmatpush2.bf16.msra.mxu0 0
      %2962 = vmatprep.subr.bf16.mxu0 0
      %2963 = vmatpush2.bf16.msra.mxu0 0
      %2964 = vmatprep.subr.bf16.mxu0 0
      %2965 = vmatpush2.bf16.msra.mxu0 0
      %2966 = vmatprep.subr.bf16.mxu0 0
      %2967 = vmatpush2.bf16.msra.mxu0 0
      %2968 = vmatprep.subr.bf16.mxu0 0
      %2969 = vmatpush2.bf16.msra.mxu0 0
      %2970 = vmatprep.subr.bf16.mxu0 0
      %2971 = vmatpush2.bf16.msra.mxu0 0
      %2972 = vmatprep.subr.bf16.mxu0 0
      %2973 = vmatpush2.bf16.msra.mxu0 0
      %2974 = vmatprep.subr.bf16.mxu0 0
      %2975 = vmatpush2.bf16.msra.mxu0 0
      %2976 = vmatprep.mubr.bf16.mxu0 0
      %2977 = vmatmul.mubr.bf16.gmra.mxu0 %v2729
      %v2978 = vpop.f32.mrf.mxu0
      %v2979 = vadd.f32 %v2767, %v2978
      %v2980 = vpop.f32.mrf.mxu0
      %v2981 = vadd.f32 %v2771, %v2980
      %v2982 = vpop.f32.mrf.mxu0
      %v2983 = vpop.f32.mrf.mxu0
      %2984 = vdwg.mxu0
      %2985 = vmatprep.subr.bf16.mxu0 %v2911
      %2986 = vmatpush1.bf16.msra.mxu0 %v2910
      %2987 = vmatprep.subr.bf16.mxu0 %v2907
      %2988 = vmatpush1.bf16.msra.mxu0 %v2906
      %2989 = vmatprep.subr.bf16.mxu0 %v2903
      %2990 = vmatpush1.bf16.msra.mxu0 %v2902
      %2991 = vmatprep.subr.bf16.mxu0 %v2899
      %2992 = vmatpush1.bf16.msra.mxu0 %v2898
      %2993 = vmatprep.subr.bf16.mxu0 %v2895
      %2994 = vmatpush1.bf16.msra.mxu0 %v2894
      %2995 = vmatprep.subr.bf16.mxu0 %v2891
      %2996 = vmatpush1.bf16.msra.mxu0 %v2890
      %2997 = vmatprep.subr.bf16.mxu0 %v2887
      %2998 = vmatpush1.bf16.msra.mxu0 %v2886
      %2999 = vmatprep.subr.bf16.mxu0 %v2883
      %3000 = vmatpush1.bf16.msra.mxu0 %v2882
      %3001 = vmatprep.subr.bf16.mxu0 0
      %3002 = vmatpush2.bf16.msra.mxu0 0
      %3003 = vmatprep.subr.bf16.mxu0 0
      %3004 = vmatpush2.bf16.msra.mxu0 0
      %3005 = vmatprep.subr.bf16.mxu0 0
      %3006 = vmatpush2.bf16.msra.mxu0 0
      %3007 = vmatprep.subr.bf16.mxu0 0
      %3008 = vmatpush2.bf16.msra.mxu0 0
      %3009 = vmatprep.subr.bf16.mxu0 0
      %3010 = vmatpush2.bf16.msra.mxu0 0
      %3011 = vmatprep.subr.bf16.mxu0 0
      %3012 = vmatpush2.bf16.msra.mxu0 0
      %3013 = vmatprep.subr.bf16.mxu0 0
      %3014 = vmatpush2.bf16.msra.mxu0 0
      %3015 = vmatprep.subr.bf16.mxu0 0
      %3016 = vmatpush2.bf16.msra.mxu0 0
      %3017 = vmatprep.mubr.bf16.mxu0 0
      %3018 = vmatmul.mubr.bf16.gmra.mxu0 %v2729
      %v3019 = vpop.f32.mrf.mxu0
      %v3020 = vadd.f32 %v2775, %v3019
      %v3021 = vpop.f32.mrf.mxu0
      %v3022 = vadd.f32 %v2779, %v3021
      %v3023 = vpop.f32.mrf.mxu0
      %v3024 = vpop.f32.mrf.mxu0
      %3025 = vdwg.mxu0
      %v3026 = vmul.f32 %v2979, 0.5
      %v3027 = vmul.f32 %v2981, 0.5
      %v3028 = vmul.f32 %v3020, 0.5
      %v3029 = vmul.f32 %v3022, 0.5
      %v3030 = vmul.f32 %v2979, 0.044715
      %v3031 = vmul.f32 %v2981, 0.044715
      %v3032 = vmul.f32 %v3020, 0.044715
      %v3033 = vmul.f32 %v3022, 0.044715
      %v3034 = vmul.f32 %v3030, %v2979
      %v3035 = vmul.f32 %v3031, %v2981
      %v3036 = vmul.f32 %v3032, %v3020
      %v3037 = vmul.f32 %v3033, %v3022
      %v3038 = vmul.f32 %v3034, %v2979
      %v3039 = vmul.f32 %v3035, %v2981
      %v3040 = vmul.f32 %v3036, %v3020
      %v3041 = vmul.f32 %v3037, %v3022
      %v3042 = vadd.f32 %v2979, %v3038
      %v3043 = vadd.f32 %v2981, %v3039
      %v3044 = vadd.f32 %v3020, %v3040
      %v3045 = vadd.f32 %v3022, %v3041
      %v3046 = vmul.f32 %v3042, 0.7978846
      %v3047 = vmul.f32 %v3043, 0.7978846
      %v3048 = vmul.f32 %v3044, 0.7978846
      %v3049 = vmul.f32 %v3045, 0.7978846
      %v3050 = vtanh.pop %v3046
      %v3051 = vtanh.pop %v3047
      %v3052 = vtanh.pop %v3048
      %v3053 = vtanh.pop %v3049
      %v3054 = vadd.f32 %v3050, 1.0
      %v3055 = vadd.f32 %v3051, 1.0
      %v3056 = vadd.f32 %v3052, 1.0
      %v3057 = vadd.f32 %v3053, 1.0
      %v3058 = vmul.f32 %v3026, %v3054
      %v3059 = vmul.f32 %v3027, %v3055
      %v3060 = vmul.f32 %v3028, %v3056
      %v3061 = vmul.f32 %v3029, %v3057
      %v3062 = vpack.c.bf16 %v3058, %v3058
      %v3063 = vpack.c.bf16 %v3059, %v3059
      %v3064 = vpack.c.bf16 %v3060, %v3060
      %v3065 = vpack.c.bf16 %v3061, %v3061
      %v3066 = vld [vmem:[%s12] sm:$0xf]
      %v3067 = vld [vmem:[%s12 + $0x4] sm:$0xf]
      %v3068 = vld [vmem:[%s12 + $0x8] sm:$0xf]
      %v3069 = vld [vmem:[%s12 + $0xc] sm:$0xf]
      %v3070 = vld [vmem:[%s12 + $0x10] sm:$0xf]
      %v3071 = vld [vmem:[%s12 + $0x14] sm:$0xf]
      %v3072 = vld [vmem:[%s12 + $0x18] sm:$0xf]
      %v3073 = vld [vmem:[%s12 + $0x1c] sm:$0xf]
      %v3074 = vld [vmem:[%s12 + $0x20] sm:$0xf]
      %v3075 = vld [vmem:[%s12 + $0x24] sm:$0xf]
      %v3076 = vld [vmem:[%s12 + $0x28] sm:$0xf]
      %v3077 = vld [vmem:[%s12 + $0x2c] sm:$0xf]
      %v3078 = vld [vmem:[%s12 + $0x30] sm:$0xf]
      %v3079 = vld [vmem:[%s12 + $0x34] sm:$0xf]
      %v3080 = vld [vmem:[%s12 + $0x38] sm:$0xf]
      %v3081 = vld [vmem:[%s12 + $0x3c] sm:$0xf]
      %v3082 = vld [vmem:[%s12 + $0x40] sm:$0xf]
      %v3083 = vld [vmem:[%s12 + $0x44] sm:$0xf]
      %v3084 = vld [vmem:[%s12 + $0x48] sm:$0xf]
      %v3085 = vld [vmem:[%s12 + $0x4c] sm:$0xf]
      %v3086 = vld [vmem:[%s12 + $0x50] sm:$0xf]
      %v3087 = vld [vmem:[%s12 + $0x54] sm:$0xf]
      %v3088 = vld [vmem:[%s12 + $0x58] sm:$0xf]
      %v3089 = vld [vmem:[%s12 + $0x5c] sm:$0xf]
      %v3090 = vld [vmem:[%s12 + $0x60] sm:$0xf]
      %v3091 = vld [vmem:[%s12 + $0x64] sm:$0xf]
      %v3092 = vld [vmem:[%s12 + $0x68] sm:$0xf]
      %v3093 = vld [vmem:[%s12 + $0x6c] sm:$0xf]
      %v3094 = vld [vmem:[%s12 + $0x70] sm:$0xf]
      %v3095 = vld [vmem:[%s12 + $0x74] sm:$0xf]
      %v3096 = vld [vmem:[%s12 + $0x78] sm:$0xf]
      %v3097 = vld [vmem:[%s12 + $0x7c] sm:$0xf]
      %v3098 = vld [vmem:[%s12 + $0x80] sm:$0xf]
      %v3099 = vld [vmem:[%s12 + $0x84] sm:$0xf]
      %v3100 = vld [vmem:[%s12 + $0x88] sm:$0xf]
      %v3101 = vld [vmem:[%s12 + $0x8c] sm:$0xf]
      %v3102 = vld [vmem:[%s12 + $0x90] sm:$0xf]
      %v3103 = vld [vmem:[%s12 + $0x94] sm:$0xf]
      %v3104 = vld [vmem:[%s12 + $0x98] sm:$0xf]
      %v3105 = vld [vmem:[%s12 + $0x9c] sm:$0xf]
      %v3106 = vld [vmem:[%s12 + $0xa0] sm:$0xf]
      %v3107 = vld [vmem:[%s12 + $0xa4] sm:$0xf]
      %v3108 = vld [vmem:[%s12 + $0xa8] sm:$0xf]
      %v3109 = vld [vmem:[%s12 + $0xac] sm:$0xf]
      %v3110 = vld [vmem:[%s12 + $0xb0] sm:$0xf]
      %v3111 = vld [vmem:[%s12 + $0xb4] sm:$0xf]
      %v3112 = vld [vmem:[%s12 + $0xb8] sm:$0xf]
      %v3113 = vld [vmem:[%s12 + $0xbc] sm:$0xf]
      %v3114 = vld [vmem:[%s12 + $0xc0] sm:$0xf]
      %v3115 = vld [vmem:[%s12 + $0xc4] sm:$0xf]
      %v3116 = vld [vmem:[%s12 + $0xc8] sm:$0xf]
      %v3117 = vld [vmem:[%s12 + $0xcc] sm:$0xf]
      %v3118 = vld [vmem:[%s12 + $0xd0] sm:$0xf]
      %v3119 = vld [vmem:[%s12 + $0xd4] sm:$0xf]
      %v3120 = vld [vmem:[%s12 + $0xd8] sm:$0xf]
      %v3121 = vld [vmem:[%s12 + $0xdc] sm:$0xf]
      %v3122 = vld [vmem:[%s12 + $0xe0] sm:$0xf]
      %v3123 = vld [vmem:[%s12 + $0xe4] sm:$0xf]
      %v3124 = vld [vmem:[%s12 + $0xe8] sm:$0xf]
      %v3125 = vld [vmem:[%s12 + $0xec] sm:$0xf]
      %v3126 = vld [vmem:[%s12 + $0xf0] sm:$0xf]
      %v3127 = vld [vmem:[%s12 + $0xf4] sm:$0xf]
      %v3128 = vld [vmem:[%s12 + $0xf8] sm:$0xf]
      %v3129 = vld [vmem:[%s12 + $0xfc] sm:$0xf]
      %v3130 = vld [vmem:[%s13] sm:$0x1]
      %v3132 = vlaneseq
      %v3133 = vshrl.u32 %v3132, 7
      %v3134 = vsub.s32 0, %v3133
      %v3135 = vrot.slane %v3130, %v3134
      %v3201 = vunpack.c.l.b16 %v3066
      %v3202 = vunpack.c.l.b16 %v3067
      %v3203 = vunpack.c.l.b16 %v3068
      %v3204 = vunpack.c.l.b16 %v3069
      %v3205 = vunpack.c.l.b16 %v3070
      %v3206 = vunpack.c.l.b16 %v3071
      %v3207 = vunpack.c.l.b16 %v3072
      %v3208 = vunpack.c.l.b16 %v3073
      %v3209 = vunpack.c.l.b16 %v3074
      %v3210 = vunpack.c.l.b16 %v3075
      %v3211 = vunpack.c.l.b16 %v3076
      %v3212 = vunpack.c.l.b16 %v3077
      %v3213 = vunpack.c.l.b16 %v3078
      %v3214 = vunpack.c.l.b16 %v3079
      %v3215 = vunpack.c.l.b16 %v3080
      %v3216 = vunpack.c.l.b16 %v3081
      %v3217 = vunpack.c.l.b16 %v3082
      %v3218 = vunpack.c.l.b16 %v3083
      %v3219 = vunpack.c.l.b16 %v3084
      %v3220 = vunpack.c.l.b16 %v3085
      %v3221 = vunpack.c.l.b16 %v3086
      %v3222 = vunpack.c.l.b16 %v3087
      %v3223 = vunpack.c.l.b16 %v3088
      %v3224 = vunpack.c.l.b16 %v3089
      %v3225 = vunpack.c.l.b16 %v3090
      %v3226 = vunpack.c.l.b16 %v3091
      %v3227 = vunpack.c.l.b16 %v3092
      %v3228 = vunpack.c.l.b16 %v3093
      %v3229 = vunpack.c.l.b16 %v3094
      %v3230 = vunpack.c.l.b16 %v3095
      %v3231 = vunpack.c.l.b16 %v3096
      %v3232 = vunpack.c.l.b16 %v3097
      %v3233 = vunpack.c.l.b16 %v3098
      %v3234 = vunpack.c.l.b16 %v3099
      %v3235 = vunpack.c.l.b16 %v3100
      %v3236 = vunpack.c.l.b16 %v3101
      %v3237 = vunpack.c.l.b16 %v3102
      %v3238 = vunpack.c.l.b16 %v3103
      %v3239 = vunpack.c.l.b16 %v3104
      %v3240 = vunpack.c.l.b16 %v3105
      %v3241 = vunpack.c.l.b16 %v3106
      %v3242 = vunpack.c.l.b16 %v3107
      %v3243 = vunpack.c.l.b16 %v3108
      %v3244 = vunpack.c.l.b16 %v3109
      %v3245 = vunpack.c.l.b16 %v3110
      %v3246 = vunpack.c.l.b16 %v3111
      %v3247 = vunpack.c.l.b16 %v3112
      %v3248 = vunpack.c.l.b16 %v3113
      %v3249 = vunpack.c.l.b16 %v3114
      %v3250 = vunpack.c.l.b16 %v3115
      %v3251 = vunpack.c.l.b16 %v3116
      %v3252 = vunpack.c.l.b16 %v3117
      %v3253 = vunpack.c.l.b16 %v3118
      %v3254 = vunpack.c.l.b16 %v3119
      %v3255 = vunpack.c.l.b16 %v3120
      %v3256 = vunpack.c.l.b16 %v3121
      %v3257 = vunpack.c.l.b16 %v3122
      %v3258 = vunpack.c.l.b16 %v3123
      %v3259 = vunpack.c.l.b16 %v3124
      %v3260 = vunpack.c.l.b16 %v3125
      %v3261 = vunpack.c.l.b16 %v3126
      %v3262 = vunpack.c.l.b16 %v3127
      %v3263 = vunpack.c.l.b16 %v3128
      %v3264 = vunpack.c.l.b16 %v3129
      %v3265 = vpack.c.b16 %v3202, %v3201
      %v3266 = vpack.c.b16 %v3204, %v3203
      %v3267 = vpack.c.b16 %v3206, %v3205
      %v3268 = vpack.c.b16 %v3208, %v3207
      %v3269 = vpack.c.b16 %v3210, %v3209
      %v3270 = vpack.c.b16 %v3212, %v3211
      %v3271 = vpack.c.b16 %v3214, %v3213
      %v3272 = vpack.c.b16 %v3216, %v3215
      %v3273 = vpack.c.b16 %v3218, %v3217
      %v3274 = vpack.c.b16 %v3220, %v3219
      %v3275 = vpack.c.b16 %v3222, %v3221
      %v3276 = vpack.c.b16 %v3224, %v3223
      %v3277 = vpack.c.b16 %v3226, %v3225
      %v3278 = vpack.c.b16 %v3228, %v3227
      %v3279 = vpack.c.b16 %v3230, %v3229
      %v3280 = vpack.c.b16 %v3232, %v3231
      %v3281 = vpack.c.b16 %v3234, %v3233
      %v3282 = vpack.c.b16 %v3236, %v3235
      %v3283 = vpack.c.b16 %v3238, %v3237
      %v3284 = vpack.c.b16 %v3240, %v3239
      %v3285 = vpack.c.b16 %v3242, %v3241
      %v3286 = vpack.c.b16 %v3244, %v3243
      %v3287 = vpack.c.b16 %v3246, %v3245
      %v3288 = vpack.c.b16 %v3248, %v3247
      %v3289 = vpack.c.b16 %v3250, %v3249
      %v3290 = vpack.c.b16 %v3252, %v3251
      %v3291 = vpack.c.b16 %v3254, %v3253
      %v3292 = vpack.c.b16 %v3256, %v3255
      %v3293 = vpack.c.b16 %v3258, %v3257
      %v3294 = vpack.c.b16 %v3260, %v3259
      %v3295 = vpack.c.b16 %v3262, %v3261
      %v3296 = vpack.c.b16 %v3264, %v3263
      %3329 = vmatprep.subr.bf16.mxu0 0
      %3330 = vmatpush1.bf16.msra.mxu0 %v3272
      %3331 = vmatprep.subr.bf16.mxu0 0
      %3332 = vmatpush1.bf16.msra.mxu0 %v3271
      %3333 = vmatprep.subr.bf16.mxu0 0
      %3334 = vmatpush1.bf16.msra.mxu0 %v3270
      %3335 = vmatprep.subr.bf16.mxu0 0
      %3336 = vmatpush1.bf16.msra.mxu0 %v3269
      %3337 = vmatprep.subr.bf16.mxu0 0
      %3338 = vmatpush1.bf16.msra.mxu0 %v3268
      %3339 = vmatprep.subr.bf16.mxu0 0
      %3340 = vmatpush1.bf16.msra.mxu0 %v3267
      %3341 = vmatprep.subr.bf16.mxu0 0
      %3342 = vmatpush1.bf16.msra.mxu0 %v3266
      %3343 = vmatprep.subr.bf16.mxu0 0
      %3344 = vmatpush1.bf16.msra.mxu0 %v3265
      %3345 = vmatprep.subr.bf16.mxu0 0
      %3346 = vmatpush2.bf16.msra.mxu0 %v3280
      %3347 = vmatprep.subr.bf16.mxu0 0
      %3348 = vmatpush2.bf16.msra.mxu0 %v3279
      %3349 = vmatprep.subr.bf16.mxu0 0
      %3350 = vmatpush2.bf16.msra.mxu0 %v3278
      %3351 = vmatprep.subr.bf16.mxu0 0
      %3352 = vmatpush2.bf16.msra.mxu0 %v3277
      %3353 = vmatprep.subr.bf16.mxu0 0
      %3354 = vmatpush2.bf16.msra.mxu0 %v3276
      %3355 = vmatprep.subr.bf16.mxu0 0
      %3356 = vmatpush2.bf16.msra.mxu0 %v3275
      %3357 = vmatprep.subr.bf16.mxu0 0
      %3358 = vmatpush2.bf16.msra.mxu0 %v3274
      %3359 = vmatprep.subr.bf16.mxu0 0
      %3360 = vmatpush2.bf16.msra.mxu0 %v3273
      %3361 = vmatprep.mubr.bf16.mxu0 %v3063
      %3362 = vmatmul.mubr.bf16.gmra.mxu0 %v3062
      %v3363 = vpop.f32.mrf.mxu0
      %v3364 = vadd.f32 %v3135, %v3363
      %v3365 = vpop.f32.mrf.mxu0
      %v3366 = vpop.f32.mrf.mxu0
      %v3367 = vpop.f32.mrf.mxu0
      %3368 = vdwg.mxu0
      %3369 = vmatprep.subr.bf16.mxu0 0
      %3370 = vmatpush1.bf16.msra.mxu0 %v3288
      %3371 = vmatprep.subr.bf16.mxu0 0
      %3372 = vmatpush1.bf16.msra.mxu0 %v3287
      %3373 = vmatprep.subr.bf16.mxu0 0
      %3374 = vmatpush1.bf16.msra.mxu0 %v3286
      %3375 = vmatprep.subr.bf16.mxu0 0
      %3376 = vmatpush1.bf16.msra.mxu0 %v3285
      %3377 = vmatprep.subr.bf16.mxu0 0
      %3378 = vmatpush1.bf16.msra.mxu0 %v3284
      %3379 = vmatprep.subr.bf16.mxu0 0
      %3380 = vmatpush1.bf16.msra.mxu0 %v3283
      %3381 = vmatprep.subr.bf16.mxu0 0
      %3382 = vmatpush1.bf16.msra.mxu0 %v3282
      %3383 = vmatprep.subr.bf16.mxu0 0
      %3384 = vmatpush1.bf16.msra.mxu0 %v3281
      %3385 = vmatprep.subr.bf16.mxu0 0
      %3386 = vmatpush2.bf16.msra.mxu0 %v3296
      %3387 = vmatprep.subr.bf16.mxu0 0
      %3388 = vmatpush2.bf16.msra.mxu0 %v3295
      %3389 = vmatprep.subr.bf16.mxu0 0
      %3390 = vmatpush2.bf16.msra.mxu0 %v3294
      %3391 = vmatprep.subr.bf16.mxu0 0
      %3392 = vmatpush2.bf16.msra.mxu0 %v3293
      %3393 = vmatprep.subr.bf16.mxu0 0
      %3394 = vmatpush2.bf16.msra.mxu0 %v3292
      %3395 = vmatprep.subr.bf16.mxu0 0
      %3396 = vmatpush2.bf16.msra.mxu0 %v3291
      %3397 = vmatprep.subr.bf16.mxu0 0
      %3398 = vmatpush2.bf16.msra.mxu0 %v3290
      %3399 = vmatprep.subr.bf16.mxu0 0
      %3400 = vmatpush2.bf16.msra.mxu0 %v3289
      %3401 = vmatprep.mubr.bf16.mxu0 %v3065
      %3402 = vmatmul.mubr.bf16.gmra.mxu0 %v3064
      %v3403 = vpop.f32.mrf.mxu0
      %v3404 = vadd.f32 %v3364, %v3403
      %v3405 = vpop.f32.mrf.mxu0
      %v3406 = vpop.f32.mrf.mxu0
      %v3407 = vpop.f32.mrf.mxu0
      %3408 = vdwg.mxu0
      %v3409 = vadd.f32 %v2728, %v3404
      %v3410 = vld [vmem:[%s14] sm:$0x1]
      %v3411 = vld [vmem:[%s15] sm:$0x1]
      %3412 = vadd.xlane.f32.xlu0 %v3409
      %v3413 = vpop.xlane.xlu0 %3412
      %v3414 = vmul.f32 %v3413, %v645
      %v3415 = vsub.f32 %v3409, %v3414
      %v3416 = vmul.f32 %v3415, %v3415
      %3417 = vadd.xlane.f32.xlu0 %v3416
      %v3418 = vpop.xlane.xlu0 %3417
      %v3419 = vmul.f32 %v3418, %v645
      %v3420 = vadd.f32 %v3419, 1e-05
      %v3421 = vrsqrt.pop %v3420
      %v3422 = vmul.f32 %v3415, %v3421
      %v3424 = vlaneseq
      %v3425 = vshrl.u32 %v3424, 7
      %v3426 = vsub.s32 0, %v3425
      %v3427 = vrot.slane %v3410, %v3426
      %v3429 = vmul.f32 %v3422, %v3427
      %v3431 = vlaneseq
      %v3432 = vshrl.u32 %v3431, 7
      %v3433 = vsub.s32 0, %v3432
      %v3434 = vrot.slane %v3411, %v3433
      %v3436 = vadd.f32 %v3429, %v3434
      %v3437 = vpack.c.bf16 %v3436, %v3436
      %s3438 = scalar_lea.vmem %s4, 768
      %v3439 = vld [vmem:[%s3438] sm:$0xf]
      %v3440 = vld [vmem:[%s3438 + $0x4] sm:$0xf]
      %v3441 = vld [vmem:[%s3438 + $0x8] sm:$0xf]
      %v3442 = vld [vmem:[%s3438 + $0xc] sm:$0xf]
      %v3443 = vld [vmem:[%s3438 + $0x10] sm:$0xf]
      %v3444 = vld [vmem:[%s3438 + $0x14] sm:$0xf]
      %v3445 = vld [vmem:[%s3438 + $0x18] sm:$0xf]
      %v3446 = vld [vmem:[%s3438 + $0x1c] sm:$0xf]
      %v3447 = vld [vmem:[%s3438 + $0x20] sm:$0xf]
      %v3448 = vld [vmem:[%s3438 + $0x24] sm:$0xf]
      %v3449 = vld [vmem:[%s3438 + $0x28] sm:$0xf]
      %v3450 = vld [vmem:[%s3438 + $0x2c] sm:$0xf]
      %v3451 = vld [vmem:[%s3438 + $0x30] sm:$0xf]
      %v3452 = vld [vmem:[%s3438 + $0x34] sm:$0xf]
      %v3453 = vld [vmem:[%s3438 + $0x38] sm:$0xf]
      %v3454 = vld [vmem:[%s3438 + $0x3c] sm:$0xf]
      %v3455 = vld [vmem:[%s3438 + $0x40] sm:$0xf]
      %v3456 = vld [vmem:[%s3438 + $0x44] sm:$0xf]
      %v3457 = vld [vmem:[%s3438 + $0x48] sm:$0xf]
      %v3458 = vld [vmem:[%s3438 + $0x4c] sm:$0xf]
      %v3459 = vld [vmem:[%s3438 + $0x50] sm:$0xf]
      %v3460 = vld [vmem:[%s3438 + $0x54] sm:$0xf]
      %v3461 = vld [vmem:[%s3438 + $0x58] sm:$0xf]
      %v3462 = vld [vmem:[%s3438 + $0x5c] sm:$0xf]
      %v3463 = vld [vmem:[%s3438 + $0x60] sm:$0xf]
      %v3464 = vld [vmem:[%s3438 + $0x64] sm:$0xf]
      %v3465 = vld [vmem:[%s3438 + $0x68] sm:$0xf]
      %v3466 = vld [vmem:[%s3438 + $0x6c] sm:$0xf]
      %v3467 = vld [vmem:[%s3438 + $0x70] sm:$0xf]
      %v3468 = vld [vmem:[%s3438 + $0x74] sm:$0xf]
      %v3469 = vld [vmem:[%s3438 + $0x78] sm:$0xf]
      %v3470 = vld [vmem:[%s3438 + $0x7c] sm:$0xf]
      %v3471 = vld [vmem:[%s3438 + $0x80] sm:$0xf]
      %v3472 = vld [vmem:[%s3438 + $0x84] sm:$0xf]
      %v3473 = vld [vmem:[%s3438 + $0x88] sm:$0xf]
      %v3474 = vld [vmem:[%s3438 + $0x8c] sm:$0xf]
      %v3475 = vld [vmem:[%s3438 + $0x90] sm:$0xf]
      %v3476 = vld [vmem:[%s3438 + $0x94] sm:$0xf]
      %v3477 = vld [vmem:[%s3438 + $0x98] sm:$0xf]
      %v3478 = vld [vmem:[%s3438 + $0x9c] sm:$0xf]
      %v3479 = vld [vmem:[%s3438 + $0xa0] sm:$0xf]
      %v3480 = vld [vmem:[%s3438 + $0xa4] sm:$0xf]
      %v3481 = vld [vmem:[%s3438 + $0xa8] sm:$0xf]
      %v3482 = vld [vmem:[%s3438 + $0xac] sm:$0xf]
      %v3483 = vld [vmem:[%s3438 + $0xb0] sm:$0xf]
      %v3484 = vld [vmem:[%s3438 + $0xb4] sm:$0xf]
      %v3485 = vld [vmem:[%s3438 + $0xb8] sm:$0xf]
      %v3486 = vld [vmem:[%s3438 + $0xbc] sm:$0xf]
      %v3487 = vld [vmem:[%s3438 + $0xc0] sm:$0xf]
      %v3488 = vld [vmem:[%s3438 + $0xc4] sm:$0xf]
      %v3489 = vld [vmem:[%s3438 + $0xc8] sm:$0xf]
      %v3490 = vld [vmem:[%s3438 + $0xcc] sm:$0xf]
      %v3491 = vld [vmem:[%s3438 + $0xd0] sm:$0xf]
      %v3492 = vld [vmem:[%s3438 + $0xd4] sm:$0xf]
      %v3493 = vld [vmem:[%s3438 + $0xd8] sm:$0xf]
      %v3494 = vld [vmem:[%s3438 + $0xdc] sm:$0xf]
      %v3495 = vld [vmem:[%s3438 + $0xe0] sm:$0xf]
      %v3496 = vld [vmem:[%s3438 + $0xe4] sm:$0xf]
      %v3497 = vld [vmem:[%s3438 + $0xe8] sm:$0xf]
      %v3498 = vld [vmem:[%s3438 + $0xec] sm:$0xf]
      %v3499 = vld [vmem:[%s3438 + $0xf0] sm:$0xf]
      %v3500 = vld [vmem:[%s3438 + $0xf4] sm:$0xf]
      %v3501 = vld [vmem:[%s3438 + $0xf8] sm:$0xf]
      %v3502 = vld [vmem:[%s3438 + $0xfc] sm:$0xf]
      %v3503 = vld [vmem:[%s3438 + $0x100] sm:$0xf]
      %v3504 = vld [vmem:[%s3438 + $0x104] sm:$0xf]
      %v3505 = vld [vmem:[%s3438 + $0x108] sm:$0xf]
      %v3506 = vld [vmem:[%s3438 + $0x10c] sm:$0xf]
      %v3507 = vld [vmem:[%s3438 + $0x110] sm:$0xf]
      %v3508 = vld [vmem:[%s3438 + $0x114] sm:$0xf]
      %v3509 = vld [vmem:[%s3438 + $0x118] sm:$0xf]
      %v3510 = vld [vmem:[%s3438 + $0x11c] sm:$0xf]
      %v3511 = vld [vmem:[%s3438 + $0x120] sm:$0xf]
      %v3512 = vld [vmem:[%s3438 + $0x124] sm:$0xf]
      %v3513 = vld [vmem:[%s3438 + $0x128] sm:$0xf]
      %v3514 = vld [vmem:[%s3438 + $0x12c] sm:$0xf]
      %v3515 = vld [vmem:[%s3438 + $0x130] sm:$0xf]
      %v3516 = vld [vmem:[%s3438 + $0x134] sm:$0xf]
      %v3517 = vld [vmem:[%s3438 + $0x138] sm:$0xf]
      %v3518 = vld [vmem:[%s3438 + $0x13c] sm:$0xf]
      %v3519 = vld [vmem:[%s3438 + $0x140] sm:$0xf]
      %v3520 = vld [vmem:[%s3438 + $0x144] sm:$0xf]
      %v3521 = vld [vmem:[%s3438 + $0x148] sm:$0xf]
      %v3522 = vld [vmem:[%s3438 + $0x14c] sm:$0xf]
      %v3523 = vld [vmem:[%s3438 + $0x150] sm:$0xf]
      %v3524 = vld [vmem:[%s3438 + $0x154] sm:$0xf]
      %v3525 = vld [vmem:[%s3438 + $0x158] sm:$0xf]
      %v3526 = vld [vmem:[%s3438 + $0x15c] sm:$0xf]
      %v3527 = vld [vmem:[%s3438 + $0x160] sm:$0xf]
      %v3528 = vld [vmem:[%s3438 + $0x164] sm:$0xf]
      %v3529 = vld [vmem:[%s3438 + $0x168] sm:$0xf]
      %v3530 = vld [vmem:[%s3438 + $0x16c] sm:$0xf]
      %v3531 = vld [vmem:[%s3438 + $0x170] sm:$0xf]
      %v3532 = vld [vmem:[%s3438 + $0x174] sm:$0xf]
      %v3533 = vld [vmem:[%s3438 + $0x178] sm:$0xf]
      %v3534 = vld [vmem:[%s3438 + $0x17c] sm:$0xf]
      %v3535 = vld [vmem:[%s3438 + $0x180] sm:$0xf]
      %v3536 = vld [vmem:[%s3438 + $0x184] sm:$0xf]
      %v3537 = vld [vmem:[%s3438 + $0x188] sm:$0xf]
      %v3538 = vld [vmem:[%s3438 + $0x18c] sm:$0xf]
      %v3539 = vld [vmem:[%s3438 + $0x190] sm:$0xf]
      %v3540 = vld [vmem:[%s3438 + $0x194] sm:$0xf]
      %v3541 = vld [vmem:[%s3438 + $0x198] sm:$0xf]
      %v3542 = vld [vmem:[%s3438 + $0x19c] sm:$0xf]
      %v3543 = vld [vmem:[%s3438 + $0x1a0] sm:$0xf]
      %v3544 = vld [vmem:[%s3438 + $0x1a4] sm:$0xf]
      %v3545 = vld [vmem:[%s3438 + $0x1a8] sm:$0xf]
      %v3546 = vld [vmem:[%s3438 + $0x1ac] sm:$0xf]
      %v3547 = vld [vmem:[%s3438 + $0x1b0] sm:$0xf]
      %v3548 = vld [vmem:[%s3438 + $0x1b4] sm:$0xf]
      %v3549 = vld [vmem:[%s3438 + $0x1b8] sm:$0xf]
      %v3550 = vld [vmem:[%s3438 + $0x1bc] sm:$0xf]
      %v3551 = vld [vmem:[%s3438 + $0x1c0] sm:$0xf]
      %v3552 = vld [vmem:[%s3438 + $0x1c4] sm:$0xf]
      %v3553 = vld [vmem:[%s3438 + $0x1c8] sm:$0xf]
      %v3554 = vld [vmem:[%s3438 + $0x1cc] sm:$0xf]
      %v3555 = vld [vmem:[%s3438 + $0x1d0] sm:$0xf]
      %v3556 = vld [vmem:[%s3438 + $0x1d4] sm:$0xf]
      %v3557 = vld [vmem:[%s3438 + $0x1d8] sm:$0xf]
      %v3558 = vld [vmem:[%s3438 + $0x1dc] sm:$0xf]
      %v3559 = vld [vmem:[%s3438 + $0x1e0] sm:$0xf]
      %v3560 = vld [vmem:[%s3438 + $0x1e4] sm:$0xf]
      %v3561 = vld [vmem:[%s3438 + $0x1e8] sm:$0xf]
      %v3562 = vld [vmem:[%s3438 + $0x1ec] sm:$0xf]
      %v3563 = vld [vmem:[%s3438 + $0x1f0] sm:$0xf]
      %v3564 = vld [vmem:[%s3438 + $0x1f4] sm:$0xf]
      %v3565 = vld [vmem:[%s3438 + $0x1f8] sm:$0xf]
      %v3566 = vld [vmem:[%s3438 + $0x1fc] sm:$0xf]
      %v3567 = vld [vmem:[%s3438 + $0x200] sm:$0xf]
      %v3568 = vld [vmem:[%s3438 + $0x204] sm:$0xf]
      %v3569 = vld [vmem:[%s3438 + $0x208] sm:$0xf]
      %v3570 = vld [vmem:[%s3438 + $0x20c] sm:$0xf]
      %v3571 = vld [vmem:[%s3438 + $0x210] sm:$0xf]
      %v3572 = vld [vmem:[%s3438 + $0x214] sm:$0xf]
      %v3573 = vld [vmem:[%s3438 + $0x218] sm:$0xf]
      %v3574 = vld [vmem:[%s3438 + $0x21c] sm:$0xf]
      %v3575 = vld [vmem:[%s3438 + $0x220] sm:$0xf]
      %v3576 = vld [vmem:[%s3438 + $0x224] sm:$0xf]
      %v3577 = vld [vmem:[%s3438 + $0x228] sm:$0xf]
      %v3578 = vld [vmem:[%s3438 + $0x22c] sm:$0xf]
      %v3579 = vld [vmem:[%s3438 + $0x230] sm:$0xf]
      %v3580 = vld [vmem:[%s3438 + $0x234] sm:$0xf]
      %v3581 = vld [vmem:[%s3438 + $0x238] sm:$0xf]
      %v3582 = vld [vmem:[%s3438 + $0x23c] sm:$0xf]
      %v3583 = vld [vmem:[%s3438 + $0x240] sm:$0xf]
      %v3584 = vld [vmem:[%s3438 + $0x244] sm:$0xf]
      %v3585 = vld [vmem:[%s3438 + $0x248] sm:$0xf]
      %v3586 = vld [vmem:[%s3438 + $0x24c] sm:$0xf]
      %v3587 = vld [vmem:[%s3438 + $0x250] sm:$0xf]
      %v3588 = vld [vmem:[%s3438 + $0x254] sm:$0xf]
      %v3589 = vld [vmem:[%s3438 + $0x258] sm:$0xf]
      %v3590 = vld [vmem:[%s3438 + $0x25c] sm:$0xf]
      %v3591 = vld [vmem:[%s3438 + $0x260] sm:$0xf]
      %v3592 = vld [vmem:[%s3438 + $0x264] sm:$0xf]
      %v3593 = vld [vmem:[%s3438 + $0x268] sm:$0xf]
      %v3594 = vld [vmem:[%s3438 + $0x26c] sm:$0xf]
      %v3595 = vld [vmem:[%s3438 + $0x270] sm:$0xf]
      %v3596 = vld [vmem:[%s3438 + $0x274] sm:$0xf]
      %v3597 = vld [vmem:[%s3438 + $0x278] sm:$0xf]
      %v3598 = vld [vmem:[%s3438 + $0x27c] sm:$0xf]
      %v3599 = vld [vmem:[%s3438 + $0x280] sm:$0xf]
      %v3600 = vld [vmem:[%s3438 + $0x284] sm:$0xf]
      %v3601 = vld [vmem:[%s3438 + $0x288] sm:$0xf]
      %v3602 = vld [vmem:[%s3438 + $0x28c] sm:$0xf]
      %v3603 = vld [vmem:[%s3438 + $0x290] sm:$0xf]
      %v3604 = vld [vmem:[%s3438 + $0x294] sm:$0xf]
      %v3605 = vld [vmem:[%s3438 + $0x298] sm:$0xf]
      %v3606 = vld [vmem:[%s3438 + $0x29c] sm:$0xf]
      %v3607 = vld [vmem:[%s3438 + $0x2a0] sm:$0xf]
      %v3608 = vld [vmem:[%s3438 + $0x2a4] sm:$0xf]
      %v3609 = vld [vmem:[%s3438 + $0x2a8] sm:$0xf]
      %v3610 = vld [vmem:[%s3438 + $0x2ac] sm:$0xf]
      %v3611 = vld [vmem:[%s3438 + $0x2b0] sm:$0xf]
      %v3612 = vld [vmem:[%s3438 + $0x2b4] sm:$0xf]
      %v3613 = vld [vmem:[%s3438 + $0x2b8] sm:$0xf]
      %v3614 = vld [vmem:[%s3438 + $0x2bc] sm:$0xf]
      %v3615 = vld [vmem:[%s3438 + $0x2c0] sm:$0xf]
      %v3616 = vld [vmem:[%s3438 + $0x2c4] sm:$0xf]
      %v3617 = vld [vmem:[%s3438 + $0x2c8] sm:$0xf]
      %v3618 = vld [vmem:[%s3438 + $0x2cc] sm:$0xf]
      %v3619 = vld [vmem:[%s3438 + $0x2d0] sm:$0xf]
      %v3620 = vld [vmem:[%s3438 + $0x2d4] sm:$0xf]
      %v3621 = vld [vmem:[%s3438 + $0x2d8] sm:$0xf]
      %v3622 = vld [vmem:[%s3438 + $0x2dc] sm:$0xf]
      %v3623 = vld [vmem:[%s3438 + $0x2e0] sm:$0xf]
      %v3624 = vld [vmem:[%s3438 + $0x2e4] sm:$0xf]
      %v3625 = vld [vmem:[%s3438 + $0x2e8] sm:$0xf]
      %v3626 = vld [vmem:[%s3438 + $0x2ec] sm:$0xf]
      %v3627 = vld [vmem:[%s3438 + $0x2f0] sm:$0xf]
      %v3628 = vld [vmem:[%s3438 + $0x2f4] sm:$0xf]
      %v3629 = vld [vmem:[%s3438 + $0x2f8] sm:$0xf]
      %v3630 = vld [vmem:[%s3438 + $0x2fc] sm:$0xf]
      %s3631 = scalar_lea.vmem %s5, 12
      %v3632 = vld [vmem:[%s3631] sm:$0x1]
      %v3633 = vld [vmem:[%s3631 + $0x1] sm:$0x1]
      %v3634 = vld [vmem:[%s3631 + $0x2] sm:$0x1]
      %v3635 = vld [vmem:[%s3631 + $0x3] sm:$0x1]
      %v3636 = vld [vmem:[%s3631 + $0x4] sm:$0x1]
      %v3637 = vld [vmem:[%s3631 + $0x5] sm:$0x1]
      %v3638 = vld [vmem:[%s3631 + $0x6] sm:$0x1]
      %v3639 = vld [vmem:[%s3631 + $0x7] sm:$0x1]
      %v3640 = vld [vmem:[%s3631 + $0x8] sm:$0x1]
      %v3641 = vld [vmem:[%s3631 + $0x9] sm:$0x1]
      %v3642 = vld [vmem:[%s3631 + $0xa] sm:$0x1]
      %v3643 = vld [vmem:[%s3631 + $0xb] sm:$0x1]
      %v3656 = vlaneseq
      %v3657 = vshrl.u32 %v3656, 7
      %v3658 = vsub.s32 0, %v3657
      %v3659 = vrot.slane %v3632, %v3658
      %v3660 = vlaneseq
      %v3661 = vshrl.u32 %v3660, 7
      %v3662 = vsub.s32 0, %v3661
      %v3663 = vrot.slane %v3633, %v3662
      %v3664 = vlaneseq
      %v3665 = vshrl.u32 %v3664, 7
      %v3666 = vsub.s32 0, %v3665
      %v3667 = vrot.slane %v3634, %v3666
      %v3668 = vlaneseq
      %v3669 = vshrl.u32 %v3668, 7
      %v3670 = vsub.s32 0, %v3669
      %v3671 = vrot.slane %v3635, %v3670
      %v3672 = vlaneseq
      %v3673 = vshrl.u32 %v3672, 7
      %v3674 = vsub.s32 0, %v3673
      %v3675 = vrot.slane %v3636, %v3674
      %v3676 = vlaneseq
      %v3677 = vshrl.u32 %v3676, 7
      %v3678 = vsub.s32 0, %v3677
      %v3679 = vrot.slane %v3637, %v3678
      %v3680 = vlaneseq
      %v3681 = vshrl.u32 %v3680, 7
      %v3682 = vsub.s32 0, %v3681
      %v3683 = vrot.slane %v3638, %v3682
      %v3684 = vlaneseq
      %v3685 = vshrl.u32 %v3684, 7
      %v3686 = vsub.s32 0, %v3685
      %v3687 = vrot.slane %v3639, %v3686
      %v3688 = vlaneseq
      %v3689 = vshrl.u32 %v3688, 7
      %v3690 = vsub.s32 0, %v3689
      %v3691 = vrot.slane %v3640, %v3690
      %v3692 = vlaneseq
      %v3693 = vshrl.u32 %v3692, 7
      %v3694 = vsub.s32 0, %v3693
      %v3695 = vrot.slane %v3641, %v3694
      %v3696 = vlaneseq
      %v3697 = vshrl.u32 %v3696, 7
      %v3698 = vsub.s32 0, %v3697
      %v3699 = vrot.slane %v3642, %v3698
      %v3700 = vlaneseq
      %v3701 = vshrl.u32 %v3700, 7
      %v3702 = vsub.s32 0, %v3701
      %v3703 = vrot.slane %v3643, %v3702
      %v3732 = vunpack.c.l.b16 %v3439
      %v3733 = vunpack.c.l.b16 %v3440
      %v3734 = vunpack.c.l.b16 %v3441
      %v3735 = vunpack.c.l.b16 %v3442
      %v3736 = vunpack.c.l.b16 %v3443
      %v3737 = vunpack.c.l.b16 %v3444
      %v3738 = vunpack.c.l.b16 %v3445
      %v3739 = vunpack.c.l.b16 %v3446
      %v3740 = vunpack.c.l.b16 %v3447
      %v3741 = vunpack.c.l.b16 %v3448
      %v3742 = vunpack.c.l.b16 %v3449
      %v3743 = vunpack.c.l.b16 %v3450
      %v3744 = vunpack.c.l.b16 %v3451
      %v3745 = vunpack.c.l.b16 %v3452
      %v3746 = vunpack.c.l.b16 %v3453
      %v3747 = vunpack.c.l.b16 %v3454
      %v3748 = vpack.c.b16 %v3733, %v3732
      %v3749 = vpack.c.b16 %v3735, %v3734
      %v3750 = vpack.c.b16 %v3737, %v3736
      %v3751 = vpack.c.b16 %v3739, %v3738
      %v3752 = vpack.c.b16 %v3741, %v3740
      %v3753 = vpack.c.b16 %v3743, %v3742
      %v3754 = vpack.c.b16 %v3745, %v3744
      %v3755 = vpack.c.b16 %v3747, %v3746
      %3764 = vmatprep.subr.bf16.mxu0 0
      %3765 = vmatpush1.bf16.msra.mxu0 %v3755
      %3766 = vmatprep.subr.bf16.mxu0 0
      %3767 = vmatpush1.bf16.msra.mxu0 %v3754
      %3768 = vmatprep.subr.bf16.mxu0 0
      %3769 = vmatpush1.bf16.msra.mxu0 %v3753
      %3770 = vmatprep.subr.bf16.mxu0 0
      %3771 = vmatpush1.bf16.msra.mxu0 %v3752
      %3772 = vmatprep.subr.bf16.mxu0 0
      %3773 = vmatpush1.bf16.msra.mxu0 %v3751
      %3774 = vmatprep.subr.bf16.mxu0 0
      %3775 = vmatpush1.bf16.msra.mxu0 %v3750
      %3776 = vmatprep.subr.bf16.mxu0 0
      %3777 = vmatpush1.bf16.msra.mxu0 %v3749
      %3778 = vmatprep.subr.bf16.mxu0 0
      %3779 = vmatpush1.bf16.msra.mxu0 %v3748
      %3780 = vmatprep.subr.bf16.mxu0 0
      %3781 = vmatpush2.bf16.msra.mxu0 0
      %3782 = vmatprep.subr.bf16.mxu0 0
      %3783 = vmatpush2.bf16.msra.mxu0 0
      %3784 = vmatprep.subr.bf16.mxu0 0
      %3785 = vmatpush2.bf16.msra.mxu0 0
      %3786 = vmatprep.subr.bf16.mxu0 0
      %3787 = vmatpush2.bf16.msra.mxu0 0
      %3788 = vmatprep.subr.bf16.mxu0 0
      %3789 = vmatpush2.bf16.msra.mxu0 0
      %3790 = vmatprep.subr.bf16.mxu0 0
      %3791 = vmatpush2.bf16.msra.mxu0 0
      %3792 = vmatprep.subr.bf16.mxu0 0
      %3793 = vmatpush2.bf16.msra.mxu0 0
      %3794 = vmatprep.subr.bf16.mxu0 0
      %3795 = vmatpush2.bf16.msra.mxu0 0
      %3796 = vmatprep.mubr.bf16.mxu0 0
      %3797 = vmatmul.mubr.bf16.gmra.mxu0 %v3437
      %v3798 = vpop.f32.mrf.mxu0
      %v3799 = vadd.f32 %v3659, %v3798
      %v3800 = vpop.f32.mrf.mxu0
      %v3801 = vpop.f32.mrf.mxu0
      %v3802 = vpop.f32.mrf.mxu0
      %3803 = vdwg.mxu0
      %v3820 = vunpack.c.l.b16 %v3455
      %v3821 = vunpack.c.l.b16 %v3456
      %v3822 = vunpack.c.l.b16 %v3457
      %v3823 = vunpack.c.l.b16 %v3458
      %v3824 = vunpack.c.l.b16 %v3459
      %v3825 = vunpack.c.l.b16 %v3460
      %v3826 = vunpack.c.l.b16 %v3461
      %v3827 = vunpack.c.l.b16 %v3462
      %v3828 = vunpack.c.l.b16 %v3463
      %v3829 = vunpack.c.l.b16 %v3464
      %v3830 = vunpack.c.l.b16 %v3465
      %v3831 = vunpack.c.l.b16 %v3466
      %v3832 = vunpack.c.l.b16 %v3467
      %v3833 = vunpack.c.l.b16 %v3468
      %v3834 = vunpack.c.l.b16 %v3469
      %v3835 = vunpack.c.l.b16 %v3470
      %v3836 = vpack.c.b16 %v3821, %v3820
      %v3837 = vpack.c.b16 %v3823, %v3822
      %v3838 = vpack.c.b16 %v3825, %v3824
      %v3839 = vpack.c.b16 %v3827, %v3826
      %v3840 = vpack.c.b16 %v3829, %v3828
      %v3841 = vpack.c.b16 %v3831, %v3830
      %v3842 = vpack.c.b16 %v3833, %v3832
      %v3843 = vpack.c.b16 %v3835, %v3834
      %3852 = vmatprep.subr.bf16.mxu0 0
      %3853 = vmatpush1.bf16.msra.mxu0 %v3843
      %3854 = vmatprep.subr.bf16.mxu0 0
      %3855 = vmatpush1.bf16.msra.mxu0 %v3842
      %3856 = vmatprep.subr.bf16.mxu0 0
      %3857 = vmatpush1.bf16.msra.mxu0 %v3841
      %3858 = vmatprep.subr.bf16.mxu0 0
      %3859 = vmatpush1.bf16.msra.mxu0 %v3840
      %3860 = vmatprep.subr.bf16.mxu0 0
      %3861 = vmatpush1.bf16.msra.mxu0 %v3839
      %3862 = vmatprep.subr.bf16.mxu0 0
      %3863 = vmatpush1.bf16.msra.mxu0 %v3838
      %3864 = vmatprep.subr.bf16.mxu0 0
      %3865 = vmatpush1.bf16.msra.mxu0 %v3837
      %3866 = vmatprep.subr.bf16.mxu0 0
      %3867 = vmatpush1.bf16.msra.mxu0 %v3836
      %3868 = vmatprep.subr.bf16.mxu0 0
      %3869 = vmatpush2.bf16.msra.mxu0 0
      %3870 = vmatprep.subr.bf16.mxu0 0
      %3871 = vmatpush2.bf16.msra.mxu0 0
      %3872 = vmatprep.subr.bf16.mxu0 0
      %3873 = vmatpush2.bf16.msra.mxu0 0
      %3874 = vmatprep.subr.bf16.mxu0 0
      %3875 = vmatpush2.bf16.msra.mxu0 0
      %3876 = vmatprep.subr.bf16.mxu0 0
      %3877 = vmatpush2.bf16.msra.mxu0 0
      %3878 = vmatprep.subr.bf16.mxu0 0
      %3879 = vmatpush2.bf16.msra.mxu0 0
      %3880 = vmatprep.subr.bf16.mxu0 0
      %3881 = vmatpush2.bf16.msra.mxu0 0
      %3882 = vmatprep.subr.bf16.mxu0 0
      %3883 = vmatpush2.bf16.msra.mxu0 0
      %3884 = vmatprep.mubr.bf16.mxu0 0
      %3885 = vmatmul.mubr.bf16.gmra.mxu0 %v3437
      %v3886 = vpop.f32.mrf.mxu0
      %v3887 = vadd.f32 %v3663, %v3886
      %v3888 = vpop.f32.mrf.mxu0
      %v3889 = vpop.f32.mrf.mxu0
      %v3890 = vpop.f32.mrf.mxu0
      %3891 = vdwg.mxu0
      %v3908 = vunpack.c.l.b16 %v3471
      %v3909 = vunpack.c.l.b16 %v3472
      %v3910 = vunpack.c.l.b16 %v3473
      %v3911 = vunpack.c.l.b16 %v3474
      %v3912 = vunpack.c.l.b16 %v3475
      %v3913 = vunpack.c.l.b16 %v3476
      %v3914 = vunpack.c.l.b16 %v3477
      %v3915 = vunpack.c.l.b16 %v3478
      %v3916 = vunpack.c.l.b16 %v3479
      %v3917 = vunpack.c.l.b16 %v3480
      %v3918 = vunpack.c.l.b16 %v3481
      %v3919 = vunpack.c.l.b16 %v3482
      %v3920 = vunpack.c.l.b16 %v3483
      %v3921 = vunpack.c.l.b16 %v3484
      %v3922 = vunpack.c.l.b16 %v3485
      %v3923 = vunpack.c.l.b16 %v3486
      %v3924 = vpack.c.b16 %v3909, %v3908
      %v3925 = vpack.c.b16 %v3911, %v3910
      %v3926 = vpack.c.b16 %v3913, %v3912
      %v3927 = vpack.c.b16 %v3915, %v3914
      %v3928 = vpack.c.b16 %v3917, %v3916
      %v3929 = vpack.c.b16 %v3919, %v3918
      %v3930 = vpack.c.b16 %v3921, %v3920
      %v3931 = vpack.c.b16 %v3923, %v3922
      %3940 = vmatprep.subr.bf16.mxu0 0
      %3941 = vmatpush1.bf16.msra.mxu0 %v3931
      %3942 = vmatprep.subr.bf16.mxu0 0
      %3943 = vmatpush1.bf16.msra.mxu0 %v3930
      %3944 = vmatprep.subr.bf16.mxu0 0
      %3945 = vmatpush1.bf16.msra.mxu0 %v3929
      %3946 = vmatprep.subr.bf16.mxu0 0
      %3947 = vmatpush1.bf16.msra.mxu0 %v3928
      %3948 = vmatprep.subr.bf16.mxu0 0
      %3949 = vmatpush1.bf16.msra.mxu0 %v3927
      %3950 = vmatprep.subr.bf16.mxu0 0
      %3951 = vmatpush1.bf16.msra.mxu0 %v3926
      %3952 = vmatprep.subr.bf16.mxu0 0
      %3953 = vmatpush1.bf16.msra.mxu0 %v3925
      %3954 = vmatprep.subr.bf16.mxu0 0
      %3955 = vmatpush1.bf16.msra.mxu0 %v3924
      %3956 = vmatprep.subr.bf16.mxu0 0
      %3957 = vmatpush2.bf16.msra.mxu0 0
      %3958 = vmatprep.subr.bf16.mxu0 0
      %3959 = vmatpush2.bf16.msra.mxu0 0
      %3960 = vmatprep.subr.bf16.mxu0 0
      %3961 = vmatpush2.bf16.msra.mxu0 0
      %3962 = vmatprep.subr.bf16.mxu0 0
      %3963 = vmatpush2.bf16.msra.mxu0 0
      %3964 = vmatprep.subr.bf16.mxu0 0
      %3965 = vmatpush2.bf16.msra.mxu0 0
      %3966 = vmatprep.subr.bf16.mxu0 0
      %3967 = vmatpush2.bf16.msra.mxu0 0
      %3968 = vmatprep.subr.bf16.mxu0 0
      %3969 = vmatpush2.bf16.msra.mxu0 0
      %3970 = vmatprep.subr.bf16.mxu0 0
      %3971 = vmatpush2.bf16.msra.mxu0 0
      %3972 = vmatprep.mubr.bf16.mxu0 0
      %3973 = vmatmul.mubr.bf16.gmra.mxu0 %v3437
      %v3974 = vpop.f32.mrf.mxu0
      %v3975 = vadd.f32 %v3667, %v3974
      %v3976 = vpop.f32.mrf.mxu0
      %v3977 = vpop.f32.mrf.mxu0
      %v3978 = vpop.f32.mrf.mxu0
      %3979 = vdwg.mxu0
      %v3996 = vunpack.c.l.b16 %v3487
      %v3997 = vunpack.c.l.b16 %v3488
      %v3998 = vunpack.c.l.b16 %v3489
      %v3999 = vunpack.c.l.b16 %v3490
      %v4000 = vunpack.c.l.b16 %v3491
      %v4001 = vunpack.c.l.b16 %v3492
      %v4002 = vunpack.c.l.b16 %v3493
      %v4003 = vunpack.c.l.b16 %v3494
      %v4004 = vunpack.c.l.b16 %v3495
      %v4005 = vunpack.c.l.b16 %v3496
      %v4006 = vunpack.c.l.b16 %v3497
      %v4007 = vunpack.c.l.b16 %v3498
      %v4008 = vunpack.c.l.b16 %v3499
      %v4009 = vunpack.c.l.b16 %v3500
      %v4010 = vunpack.c.l.b16 %v3501
      %v4011 = vunpack.c.l.b16 %v3502
      %v4012 = vpack.c.b16 %v3997, %v3996
      %v4013 = vpack.c.b16 %v3999, %v3998
      %v4014 = vpack.c.b16 %v4001, %v4000
      %v4015 = vpack.c.b16 %v4003, %v4002
      %v4016 = vpack.c.b16 %v4005, %v4004
      %v4017 = vpack.c.b16 %v4007, %v4006
      %v4018 = vpack.c.b16 %v4009, %v4008
      %v4019 = vpack.c.b16 %v4011, %v4010
      %4028 = vmatprep.subr.bf16.mxu0 0
      %4029 = vmatpush1.bf16.msra.mxu0 %v4019
      %4030 = vmatprep.subr.bf16.mxu0 0
      %4031 = vmatpush1.bf16.msra.mxu0 %v4018
      %4032 = vmatprep.subr.bf16.mxu0 0
      %4033 = vmatpush1.bf16.msra.mxu0 %v4017
      %4034 = vmatprep.subr.bf16.mxu0 0
      %4035 = vmatpush1.bf16.msra.mxu0 %v4016
      %4036 = vmatprep.subr.bf16.mxu0 0
      %4037 = vmatpush1.bf16.msra.mxu0 %v4015
      %4038 = vmatprep.subr.bf16.mxu0 0
      %4039 = vmatpush1.bf16.msra.mxu0 %v4014
      %4040 = vmatprep.subr.bf16.mxu0 0
      %4041 = vmatpush1.bf16.msra.mxu0 %v4013
      %4042 = vmatprep.subr.bf16.mxu0 0
      %4043 = vmatpush1.bf16.msra.mxu0 %v4012
      %4044 = vmatprep.subr.bf16.mxu0 0
      %4045 = vmatpush2.bf16.msra.mxu0 0
      %4046 = vmatprep.subr.bf16.mxu0 0
      %4047 = vmatpush2.bf16.msra.mxu0 0
      %4048 = vmatprep.subr.bf16.mxu0 0
      %4049 = vmatpush2.bf16.msra.mxu0 0
      %4050 = vmatprep.subr.bf16.mxu0 0
      %4051 = vmatpush2.bf16.msra.mxu0 0
      %4052 = vmatprep.subr.bf16.mxu0 0
      %4053 = vmatpush2.bf16.msra.mxu0 0
      %4054 = vmatprep.subr.bf16.mxu0 0
      %4055 = vmatpush2.bf16.msra.mxu0 0
      %4056 = vmatprep.subr.bf16.mxu0 0
      %4057 = vmatpush2.bf16.msra.mxu0 0
      %4058 = vmatprep.subr.bf16.mxu0 0
      %4059 = vmatpush2.bf16.msra.mxu0 0
      %4060 = vmatprep.mubr.bf16.mxu0 0
      %4061 = vmatmul.mubr.bf16.gmra.mxu0 %v3437
      %v4062 = vpop.f32.mrf.mxu0
      %v4063 = vadd.f32 %v3671, %v4062
      %v4064 = vpop.f32.mrf.mxu0
      %v4065 = vpop.f32.mrf.mxu0
      %v4066 = vpop.f32.mrf.mxu0
      %4067 = vdwg.mxu0
      %v4084 = vunpack.c.l.b16 %v3503
      %v4085 = vunpack.c.l.b16 %v3504
      %v4086 = vunpack.c.l.b16 %v3505
      %v4087 = vunpack.c.l.b16 %v3506
      %v4088 = vunpack.c.l.b16 %v3507
      %v4089 = vunpack.c.l.b16 %v3508
      %v4090 = vunpack.c.l.b16 %v3509
      %v4091 = vunpack.c.l.b16 %v3510
      %v4092 = vunpack.c.l.b16 %v3511
      %v4093 = vunpack.c.l.b16 %v3512
      %v4094 = vunpack.c.l.b16 %v3513
      %v4095 = vunpack.c.l.b16 %v3514
      %v4096 = vunpack.c.l.b16 %v3515
      %v4097 = vunpack.c.l.b16 %v3516
      %v4098 = vunpack.c.l.b16 %v3517
      %v4099 = vunpack.c.l.b16 %v3518
      %v4100 = vpack.c.b16 %v4085, %v4084
      %v4101 = vpack.c.b16 %v4087, %v4086
      %v4102 = vpack.c.b16 %v4089, %v4088
      %v4103 = vpack.c.b16 %v4091, %v4090
      %v4104 = vpack.c.b16 %v4093, %v4092
      %v4105 = vpack.c.b16 %v4095, %v4094
      %v4106 = vpack.c.b16 %v4097, %v4096
      %v4107 = vpack.c.b16 %v4099, %v4098
      %4116 = vmatprep.subr.bf16.mxu0 0
      %4117 = vmatpush1.bf16.msra.mxu0 %v4107
      %4118 = vmatprep.subr.bf16.mxu0 0
      %4119 = vmatpush1.bf16.msra.mxu0 %v4106
      %4120 = vmatprep.subr.bf16.mxu0 0
      %4121 = vmatpush1.bf16.msra.mxu0 %v4105
      %4122 = vmatprep.subr.bf16.mxu0 0
      %4123 = vmatpush1.bf16.msra.mxu0 %v4104
      %4124 = vmatprep.subr.bf16.mxu0 0
      %4125 = vmatpush1.bf16.msra.mxu0 %v4103
      %4126 = vmatprep.subr.bf16.mxu0 0
      %4127 = vmatpush1.bf16.msra.mxu0 %v4102
      %4128 = vmatprep.subr.bf16.mxu0 0
      %4129 = vmatpush1.bf16.msra.mxu0 %v4101
      %4130 = vmatprep.subr.bf16.mxu0 0
      %4131 = vmatpush1.bf16.msra.mxu0 %v4100
      %4132 = vmatprep.subr.bf16.mxu0 0
      %4133 = vmatpush2.bf16.msra.mxu0 0
      %4134 = vmatprep.subr.bf16.mxu0 0
      %4135 = vmatpush2.bf16.msra.mxu0 0
      %4136 = vmatprep.subr.bf16.mxu0 0
      %4137 = vmatpush2.bf16.msra.mxu0 0
      %4138 = vmatprep.subr.bf16.mxu0 0
      %4139 = vmatpush2.bf16.msra.mxu0 0
      %4140 = vmatprep.subr.bf16.mxu0 0
      %4141 = vmatpush2.bf16.msra.mxu0 0
      %4142 = vmatprep.subr.bf16.mxu0 0
      %4143 = vmatpush2.bf16.msra.mxu0 0
      %4144 = vmatprep.subr.bf16.mxu0 0
      %4145 = vmatpush2.bf16.msra.mxu0 0
      %4146 = vmatprep.subr.bf16.mxu0 0
      %4147 = vmatpush2.bf16.msra.mxu0 0
      %4148 = vmatprep.mubr.bf16.mxu0 0
      %4149 = vmatmul.mubr.bf16.gmra.mxu0 %v3437
      %v4150 = vpop.f32.mrf.mxu0
      %v4151 = vadd.f32 %v3675, %v4150
      %v4152 = vpop.f32.mrf.mxu0
      %v4153 = vpop.f32.mrf.mxu0
      %v4154 = vpop.f32.mrf.mxu0
      %4155 = vdwg.mxu0
      %v4172 = vunpack.c.l.b16 %v3519
      %v4173 = vunpack.c.l.b16 %v3520
      %v4174 = vunpack.c.l.b16 %v3521
      %v4175 = vunpack.c.l.b16 %v3522
      %v4176 = vunpack.c.l.b16 %v3523
      %v4177 = vunpack.c.l.b16 %v3524
      %v4178 = vunpack.c.l.b16 %v3525
      %v4179 = vunpack.c.l.b16 %v3526
      %v4180 = vunpack.c.l.b16 %v3527
      %v4181 = vunpack.c.l.b16 %v3528
      %v4182 = vunpack.c.l.b16 %v3529
      %v4183 = vunpack.c.l.b16 %v3530
      %v4184 = vunpack.c.l.b16 %v3531
      %v4185 = vunpack.c.l.b16 %v3532
      %v4186 = vunpack.c.l.b16 %v3533
      %v4187 = vunpack.c.l.b16 %v3534
      %v4188 = vpack.c.b16 %v4173, %v4172
      %v4189 = vpack.c.b16 %v4175, %v4174
      %v4190 = vpack.c.b16 %v4177, %v4176
      %v4191 = vpack.c.b16 %v4179, %v4178
      %v4192 = vpack.c.b16 %v4181, %v4180
      %v4193 = vpack.c.b16 %v4183, %v4182
      %v4194 = vpack.c.b16 %v4185, %v4184
      %v4195 = vpack.c.b16 %v4187, %v4186
      %4204 = vmatprep.subr.bf16.mxu0 0
      %4205 = vmatpush1.bf16.msra.mxu0 %v4195
      %4206 = vmatprep.subr.bf16.mxu0 0
      %4207 = vmatpush1.bf16.msra.mxu0 %v4194
      %4208 = vmatprep.subr.bf16.mxu0 0
      %4209 = vmatpush1.bf16.msra.mxu0 %v4193
      %4210 = vmatprep.subr.bf16.mxu0 0
      %4211 = vmatpush1.bf16.msra.mxu0 %v4192
      %4212 = vmatprep.subr.bf16.mxu0 0
      %4213 = vmatpush1.bf16.msra.mxu0 %v4191
      %4214 = vmatprep.subr.bf16.mxu0 0
      %4215 = vmatpush1.bf16.msra.mxu0 %v4190
      %4216 = vmatprep.subr.bf16.mxu0 0
      %4217 = vmatpush1.bf16.msra.mxu0 %v4189
      %4218 = vmatprep.subr.bf16.mxu0 0
      %4219 = vmatpush1.bf16.msra.mxu0 %v4188
      %4220 = vmatprep.subr.bf16.mxu0 0
      %4221 = vmatpush2.bf16.msra.mxu0 0
      %4222 = vmatprep.subr.bf16.mxu0 0
      %4223 = vmatpush2.bf16.msra.mxu0 0
      %4224 = vmatprep.subr.bf16.mxu0 0
      %4225 = vmatpush2.bf16.msra.mxu0 0
      %4226 = vmatprep.subr.bf16.mxu0 0
      %4227 = vmatpush2.bf16.msra.mxu0 0
      %4228 = vmatprep.subr.bf16.mxu0 0
      %4229 = vmatpush2.bf16.msra.mxu0 0
      %4230 = vmatprep.subr.bf16.mxu0 0
      %4231 = vmatpush2.bf16.msra.mxu0 0
      %4232 = vmatprep.subr.bf16.mxu0 0
      %4233 = vmatpush2.bf16.msra.mxu0 0
      %4234 = vmatprep.subr.bf16.mxu0 0
      %4235 = vmatpush2.bf16.msra.mxu0 0
      %4236 = vmatprep.mubr.bf16.mxu0 0
      %4237 = vmatmul.mubr.bf16.gmra.mxu0 %v3437
      %v4238 = vpop.f32.mrf.mxu0
      %v4239 = vadd.f32 %v3679, %v4238
      %v4240 = vpop.f32.mrf.mxu0
      %v4241 = vpop.f32.mrf.mxu0
      %v4242 = vpop.f32.mrf.mxu0
      %4243 = vdwg.mxu0
      %v4260 = vunpack.c.l.b16 %v3535
      %v4261 = vunpack.c.l.b16 %v3536
      %v4262 = vunpack.c.l.b16 %v3537
      %v4263 = vunpack.c.l.b16 %v3538
      %v4264 = vunpack.c.l.b16 %v3539
      %v4265 = vunpack.c.l.b16 %v3540
      %v4266 = vunpack.c.l.b16 %v3541
      %v4267 = vunpack.c.l.b16 %v3542
      %v4268 = vunpack.c.l.b16 %v3543
      %v4269 = vunpack.c.l.b16 %v3544
      %v4270 = vunpack.c.l.b16 %v3545
      %v4271 = vunpack.c.l.b16 %v3546
      %v4272 = vunpack.c.l.b16 %v3547
      %v4273 = vunpack.c.l.b16 %v3548
      %v4274 = vunpack.c.l.b16 %v3549
      %v4275 = vunpack.c.l.b16 %v3550
      %v4276 = vpack.c.b16 %v4261, %v4260
      %v4277 = vpack.c.b16 %v4263, %v4262
      %v4278 = vpack.c.b16 %v4265, %v4264
      %v4279 = vpack.c.b16 %v4267, %v4266
      %v4280 = vpack.c.b16 %v4269, %v4268
      %v4281 = vpack.c.b16 %v4271, %v4270
      %v4282 = vpack.c.b16 %v4273, %v4272
      %v4283 = vpack.c.b16 %v4275, %v4274
      %4292 = vmatprep.subr.bf16.mxu0 0
      %4293 = vmatpush1.bf16.msra.mxu0 %v4283
      %4294 = vmatprep.subr.bf16.mxu0 0
      %4295 = vmatpush1.bf16.msra.mxu0 %v4282
      %4296 = vmatprep.subr.bf16.mxu0 0
      %4297 = vmatpush1.bf16.msra.mxu0 %v4281
      %4298 = vmatprep.subr.bf16.mxu0 0
      %4299 = vmatpush1.bf16.msra.mxu0 %v4280
      %4300 = vmatprep.subr.bf16.mxu0 0
      %4301 = vmatpush1.bf16.msra.mxu0 %v4279
      %4302 = vmatprep.subr.bf16.mxu0 0
      %4303 = vmatpush1.bf16.msra.mxu0 %v4278
      %4304 = vmatprep.subr.bf16.mxu0 0
      %4305 = vmatpush1.bf16.msra.mxu0 %v4277
      %4306 = vmatprep.subr.bf16.mxu0 0
      %4307 = vmatpush1.bf16.msra.mxu0 %v4276
      %4308 = vmatprep.subr.bf16.mxu0 0
      %4309 = vmatpush2.bf16.msra.mxu0 0
      %4310 = vmatprep.subr.bf16.mxu0 0
      %4311 = vmatpush2.bf16.msra.mxu0 0
      %4312 = vmatprep.subr.bf16.mxu0 0
      %4313 = vmatpush2.bf16.msra.mxu0 0
      %4314 = vmatprep.subr.bf16.mxu0 0
      %4315 = vmatpush2.bf16.msra.mxu0 0
      %4316 = vmatprep.subr.bf16.mxu0 0
      %4317 = vmatpush2.bf16.msra.mxu0 0
      %4318 = vmatprep.subr.bf16.mxu0 0
      %4319 = vmatpush2.bf16.msra.mxu0 0
      %4320 = vmatprep.subr.bf16.mxu0 0
      %4321 = vmatpush2.bf16.msra.mxu0 0
      %4322 = vmatprep.subr.bf16.mxu0 0
      %4323 = vmatpush2.bf16.msra.mxu0 0
      %4324 = vmatprep.mubr.bf16.mxu0 0
      %4325 = vmatmul.mubr.bf16.gmra.mxu0 %v3437
      %v4326 = vpop.f32.mrf.mxu0
      %v4327 = vadd.f32 %v3683, %v4326
      %v4328 = vpop.f32.mrf.mxu0
      %v4329 = vpop.f32.mrf.mxu0
      %v4330 = vpop.f32.mrf.mxu0
      %4331 = vdwg.mxu0
      %v4348 = vunpack.c.l.b16 %v3551
      %v4349 = vunpack.c.l.b16 %v3552
      %v4350 = vunpack.c.l.b16 %v3553
      %v4351 = vunpack.c.l.b16 %v3554
      %v4352 = vunpack.c.l.b16 %v3555
      %v4353 = vunpack.c.l.b16 %v3556
      %v4354 = vunpack.c.l.b16 %v3557
      %v4355 = vunpack.c.l.b16 %v3558
      %v4356 = vunpack.c.l.b16 %v3559
      %v4357 = vunpack.c.l.b16 %v3560
      %v4358 = vunpack.c.l.b16 %v3561
      %v4359 = vunpack.c.l.b16 %v3562
      %v4360 = vunpack.c.l.b16 %v3563
      %v4361 = vunpack.c.l.b16 %v3564
      %v4362 = vunpack.c.l.b16 %v3565
      %v4363 = vunpack.c.l.b16 %v3566
      %v4364 = vpack.c.b16 %v4349, %v4348
      %v4365 = vpack.c.b16 %v4351, %v4350
      %v4366 = vpack.c.b16 %v4353, %v4352
      %v4367 = vpack.c.b16 %v4355, %v4354
      %v4368 = vpack.c.b16 %v4357, %v4356
      %v4369 = vpack.c.b16 %v4359, %v4358
      %v4370 = vpack.c.b16 %v4361, %v4360
      %v4371 = vpack.c.b16 %v4363, %v4362
      %4380 = vmatprep.subr.bf16.mxu0 0
      %4381 = vmatpush1.bf16.msra.mxu0 %v4371
      %4382 = vmatprep.subr.bf16.mxu0 0
      %4383 = vmatpush1.bf16.msra.mxu0 %v4370
      %4384 = vmatprep.subr.bf16.mxu0 0
      %4385 = vmatpush1.bf16.msra.mxu0 %v4369
      %4386 = vmatprep.subr.bf16.mxu0 0
      %4387 = vmatpush1.bf16.msra.mxu0 %v4368
      %4388 = vmatprep.subr.bf16.mxu0 0
      %4389 = vmatpush1.bf16.msra.mxu0 %v4367
      %4390 = vmatprep.subr.bf16.mxu0 0
      %4391 = vmatpush1.bf16.msra.mxu0 %v4366
      %4392 = vmatprep.subr.bf16.mxu0 0
      %4393 = vmatpush1.bf16.msra.mxu0 %v4365
      %4394 = vmatprep.subr.bf16.mxu0 0
      %4395 = vmatpush1.bf16.msra.mxu0 %v4364
      %4396 = vmatprep.subr.bf16.mxu0 0
      %4397 = vmatpush2.bf16.msra.mxu0 0
      %4398 = vmatprep.subr.bf16.mxu0 0
      %4399 = vmatpush2.bf16.msra.mxu0 0
      %4400 = vmatprep.subr.bf16.mxu0 0
      %4401 = vmatpush2.bf16.msra.mxu0 0
      %4402 = vmatprep.subr.bf16.mxu0 0
      %4403 = vmatpush2.bf16.msra.mxu0 0
      %4404 = vmatprep.subr.bf16.mxu0 0
      %4405 = vmatpush2.bf16.msra.mxu0 0
      %4406 = vmatprep.subr.bf16.mxu0 0
      %4407 = vmatpush2.bf16.msra.mxu0 0
      %4408 = vmatprep.subr.bf16.mxu0 0
      %4409 = vmatpush2.bf16.msra.mxu0 0
      %4410 = vmatprep.subr.bf16.mxu0 0
      %4411 = vmatpush2.bf16.msra.mxu0 0
      %4412 = vmatprep.mubr.bf16.mxu0 0
      %4413 = vmatmul.mubr.bf16.gmra.mxu0 %v3437
      %v4414 = vpop.f32.mrf.mxu0
      %v4415 = vadd.f32 %v3687, %v4414
      %v4416 = vpop.f32.mrf.mxu0
      %v4417 = vpop.f32.mrf.mxu0
      %v4418 = vpop.f32.mrf.mxu0
      %4419 = vdwg.mxu0
      %v4436 = vunpack.c.l.b16 %v3567
      %v4437 = vunpack.c.l.b16 %v3568
      %v4438 = vunpack.c.l.b16 %v3569
      %v4439 = vunpack.c.l.b16 %v3570
      %v4440 = vunpack.c.l.b16 %v3571
      %v4441 = vunpack.c.l.b16 %v3572
      %v4442 = vunpack.c.l.b16 %v3573
      %v4443 = vunpack.c.l.b16 %v3574
      %v4444 = vunpack.c.l.b16 %v3575
      %v4445 = vunpack.c.l.b16 %v3576
      %v4446 = vunpack.c.l.b16 %v3577
      %v4447 = vunpack.c.l.b16 %v3578
      %v4448 = vunpack.c.l.b16 %v3579
      %v4449 = vunpack.c.l.b16 %v3580
      %v4450 = vunpack.c.l.b16 %v3581
      %v4451 = vunpack.c.l.b16 %v3582
      %v4452 = vpack.c.b16 %v4437, %v4436
      %v4453 = vpack.c.b16 %v4439, %v4438
      %v4454 = vpack.c.b16 %v4441, %v4440
      %v4455 = vpack.c.b16 %v4443, %v4442
      %v4456 = vpack.c.b16 %v4445, %v4444
      %v4457 = vpack.c.b16 %v4447, %v4446
      %v4458 = vpack.c.b16 %v4449, %v4448
      %v4459 = vpack.c.b16 %v4451, %v4450
      %4468 = vmatprep.subr.bf16.mxu0 0
      %4469 = vmatpush1.bf16.msra.mxu0 %v4459
      %4470 = vmatprep.subr.bf16.mxu0 0
      %4471 = vmatpush1.bf16.msra.mxu0 %v4458
      %4472 = vmatprep.subr.bf16.mxu0 0
      %4473 = vmatpush1.bf16.msra.mxu0 %v4457
      %4474 = vmatprep.subr.bf16.mxu0 0
      %4475 = vmatpush1.bf16.msra.mxu0 %v4456
      %4476 = vmatprep.subr.bf16.mxu0 0
      %4477 = vmatpush1.bf16.msra.mxu0 %v4455
      %4478 = vmatprep.subr.bf16.mxu0 0
      %4479 = vmatpush1.bf16.msra.mxu0 %v4454
      %4480 = vmatprep.subr.bf16.mxu0 0
      %4481 = vmatpush1.bf16.msra.mxu0 %v4453
      %4482 = vmatprep.subr.bf16.mxu0 0
      %4483 = vmatpush1.bf16.msra.mxu0 %v4452
      %4484 = vmatprep.subr.bf16.mxu0 0
      %4485 = vmatpush2.bf16.msra.mxu0 0
      %4486 = vmatprep.subr.bf16.mxu0 0
      %4487 = vmatpush2.bf16.msra.mxu0 0
      %4488 = vmatprep.subr.bf16.mxu0 0
      %4489 = vmatpush2.bf16.msra.mxu0 0
      %4490 = vmatprep.subr.bf16.mxu0 0
      %4491 = vmatpush2.bf16.msra.mxu0 0
      %4492 = vmatprep.subr.bf16.mxu0 0
      %4493 = vmatpush2.bf16.msra.mxu0 0
      %4494 = vmatprep.subr.bf16.mxu0 0
      %4495 = vmatpush2.bf16.msra.mxu0 0
      %4496 = vmatprep.subr.bf16.mxu0 0
      %4497 = vmatpush2.bf16.msra.mxu0 0
      %4498 = vmatprep.subr.bf16.mxu0 0
      %4499 = vmatpush2.bf16.msra.mxu0 0
      %4500 = vmatprep.mubr.bf16.mxu0 0
      %4501 = vmatmul.mubr.bf16.gmra.mxu0 %v3437
      %v4502 = vpop.f32.mrf.mxu0
      %v4503 = vadd.f32 %v3691, %v4502
      %v4504 = vpop.f32.mrf.mxu0
      %v4505 = vpop.f32.mrf.mxu0
      %v4506 = vpop.f32.mrf.mxu0
      %4507 = vdwg.mxu0
      %v4524 = vunpack.c.l.b16 %v3583
      %v4525 = vunpack.c.l.b16 %v3584
      %v4526 = vunpack.c.l.b16 %v3585
      %v4527 = vunpack.c.l.b16 %v3586
      %v4528 = vunpack.c.l.b16 %v3587
      %v4529 = vunpack.c.l.b16 %v3588
      %v4530 = vunpack.c.l.b16 %v3589
      %v4531 = vunpack.c.l.b16 %v3590
      %v4532 = vunpack.c.l.b16 %v3591
      %v4533 = vunpack.c.l.b16 %v3592
      %v4534 = vunpack.c.l.b16 %v3593
      %v4535 = vunpack.c.l.b16 %v3594
      %v4536 = vunpack.c.l.b16 %v3595
      %v4537 = vunpack.c.l.b16 %v3596
      %v4538 = vunpack.c.l.b16 %v3597
      %v4539 = vunpack.c.l.b16 %v3598
      %v4540 = vpack.c.b16 %v4525, %v4524
      %v4541 = vpack.c.b16 %v4527, %v4526
      %v4542 = vpack.c.b16 %v4529, %v4528
      %v4543 = vpack.c.b16 %v4531, %v4530
      %v4544 = vpack.c.b16 %v4533, %v4532
      %v4545 = vpack.c.b16 %v4535, %v4534
      %v4546 = vpack.c.b16 %v4537, %v4536
      %v4547 = vpack.c.b16 %v4539, %v4538
      %4556 = vmatprep.subr.bf16.mxu0 0
      %4557 = vmatpush1.bf16.msra.mxu0 %v4547
      %4558 = vmatprep.subr.bf16.mxu0 0
      %4559 = vmatpush1.bf16.msra.mxu0 %v4546
      %4560 = vmatprep.subr.bf16.mxu0 0
      %4561 = vmatpush1.bf16.msra.mxu0 %v4545
      %4562 = vmatprep.subr.bf16.mxu0 0
      %4563 = vmatpush1.bf16.msra.mxu0 %v4544
      %4564 = vmatprep.subr.bf16.mxu0 0
      %4565 = vmatpush1.bf16.msra.mxu0 %v4543
      %4566 = vmatprep.subr.bf16.mxu0 0
      %4567 = vmatpush1.bf16.msra.mxu0 %v4542
      %4568 = vmatprep.subr.bf16.mxu0 0
      %4569 = vmatpush1.bf16.msra.mxu0 %v4541
      %4570 = vmatprep.subr.bf16.mxu0 0
      %4571 = vmatpush1.bf16.msra.mxu0 %v4540
      %4572 = vmatprep.subr.bf16.mxu0 0
      %4573 = vmatpush2.bf16.msra.mxu0 0
      %4574 = vmatprep.subr.bf16.mxu0 0
      %4575 = vmatpush2.bf16.msra.mxu0 0
      %4576 = vmatprep.subr.bf16.mxu0 0
      %4577 = vmatpush2.bf16.msra.mxu0 0
      %4578 = vmatprep.subr.bf16.mxu0 0
      %4579 = vmatpush2.bf16.msra.mxu0 0
      %4580 = vmatprep.subr.bf16.mxu0 0
      %4581 = vmatpush2.bf16.msra.mxu0 0
      %4582 = vmatprep.subr.bf16.mxu0 0
      %4583 = vmatpush2.bf16.msra.mxu0 0
      %4584 = vmatprep.subr.bf16.mxu0 0
      %4585 = vmatpush2.bf16.msra.mxu0 0
      %4586 = vmatprep.subr.bf16.mxu0 0
      %4587 = vmatpush2.bf16.msra.mxu0 0
      %4588 = vmatprep.mubr.bf16.mxu0 0
      %4589 = vmatmul.mubr.bf16.gmra.mxu0 %v3437
      %v4590 = vpop.f32.mrf.mxu0
      %v4591 = vadd.f32 %v3695, %v4590
      %v4592 = vpop.f32.mrf.mxu0
      %v4593 = vpop.f32.mrf.mxu0
      %v4594 = vpop.f32.mrf.mxu0
      %4595 = vdwg.mxu0
      %v4612 = vunpack.c.l.b16 %v3599
      %v4613 = vunpack.c.l.b16 %v3600
      %v4614 = vunpack.c.l.b16 %v3601
      %v4615 = vunpack.c.l.b16 %v3602
      %v4616 = vunpack.c.l.b16 %v3603
      %v4617 = vunpack.c.l.b16 %v3604
      %v4618 = vunpack.c.l.b16 %v3605
      %v4619 = vunpack.c.l.b16 %v3606
      %v4620 = vunpack.c.l.b16 %v3607
      %v4621 = vunpack.c.l.b16 %v3608
      %v4622 = vunpack.c.l.b16 %v3609
      %v4623 = vunpack.c.l.b16 %v3610
      %v4624 = vunpack.c.l.b16 %v3611
      %v4625 = vunpack.c.l.b16 %v3612
      %v4626 = vunpack.c.l.b16 %v3613
      %v4627 = vunpack.c.l.b16 %v3614
      %v4628 = vpack.c.b16 %v4613, %v4612
      %v4629 = vpack.c.b16 %v4615, %v4614
      %v4630 = vpack.c.b16 %v4617, %v4616
      %v4631 = vpack.c.b16 %v4619, %v4618
      %v4632 = vpack.c.b16 %v4621, %v4620
      %v4633 = vpack.c.b16 %v4623, %v4622
      %v4634 = vpack.c.b16 %v4625, %v4624
      %v4635 = vpack.c.b16 %v4627, %v4626
      %4644 = vmatprep.subr.bf16.mxu0 0
      %4645 = vmatpush1.bf16.msra.mxu0 %v4635
      %4646 = vmatprep.subr.bf16.mxu0 0
      %4647 = vmatpush1.bf16.msra.mxu0 %v4634
      %4648 = vmatprep.subr.bf16.mxu0 0
      %4649 = vmatpush1.bf16.msra.mxu0 %v4633
      %4650 = vmatprep.subr.bf16.mxu0 0
      %4651 = vmatpush1.bf16.msra.mxu0 %v4632
      %4652 = vmatprep.subr.bf16.mxu0 0
      %4653 = vmatpush1.bf16.msra.mxu0 %v4631
      %4654 = vmatprep.subr.bf16.mxu0 0
      %4655 = vmatpush1.bf16.msra.mxu0 %v4630
      %4656 = vmatprep.subr.bf16.mxu0 0
      %4657 = vmatpush1.bf16.msra.mxu0 %v4629
      %4658 = vmatprep.subr.bf16.mxu0 0
      %4659 = vmatpush1.bf16.msra.mxu0 %v4628
      %4660 = vmatprep.subr.bf16.mxu0 0
      %4661 = vmatpush2.bf16.msra.mxu0 0
      %4662 = vmatprep.subr.bf16.mxu0 0
      %4663 = vmatpush2.bf16.msra.mxu0 0
      %4664 = vmatprep.subr.bf16.mxu0 0
      %4665 = vmatpush2.bf16.msra.mxu0 0
      %4666 = vmatprep.subr.bf16.mxu0 0
      %4667 = vmatpush2.bf16.msra.mxu0 0
      %4668 = vmatprep.subr.bf16.mxu0 0
      %4669 = vmatpush2.bf16.msra.mxu0 0
      %4670 = vmatprep.subr.bf16.mxu0 0
      %4671 = vmatpush2.bf16.msra.mxu0 0
      %4672 = vmatprep.subr.bf16.mxu0 0
      %4673 = vmatpush2.bf16.msra.mxu0 0
      %4674 = vmatprep.subr.bf16.mxu0 0
      %4675 = vmatpush2.bf16.msra.mxu0 0
      %4676 = vmatprep.mubr.bf16.mxu0 0
      %4677 = vmatmul.mubr.bf16.gmra.mxu0 %v3437
      %v4678 = vpop.f32.mrf.mxu0
      %v4679 = vadd.f32 %v3699, %v4678
      %v4680 = vpop.f32.mrf.mxu0
      %v4681 = vpop.f32.mrf.mxu0
      %v4682 = vpop.f32.mrf.mxu0
      %4683 = vdwg.mxu0
      %v4700 = vunpack.c.l.b16 %v3615
      %v4701 = vunpack.c.l.b16 %v3616
      %v4702 = vunpack.c.l.b16 %v3617
      %v4703 = vunpack.c.l.b16 %v3618
      %v4704 = vunpack.c.l.b16 %v3619
      %v4705 = vunpack.c.l.b16 %v3620
      %v4706 = vunpack.c.l.b16 %v3621
      %v4707 = vunpack.c.l.b16 %v3622
      %v4708 = vunpack.c.l.b16 %v3623
      %v4709 = vunpack.c.l.b16 %v3624
      %v4710 = vunpack.c.l.b16 %v3625
      %v4711 = vunpack.c.l.b16 %v3626
      %v4712 = vunpack.c.l.b16 %v3627
      %v4713 = vunpack.c.l.b16 %v3628
      %v4714 = vunpack.c.l.b16 %v3629
      %v4715 = vunpack.c.l.b16 %v3630
      %v4716 = vpack.c.b16 %v4701, %v4700
      %v4717 = vpack.c.b16 %v4703, %v4702
      %v4718 = vpack.c.b16 %v4705, %v4704
      %v4719 = vpack.c.b16 %v4707, %v4706
      %v4720 = vpack.c.b16 %v4709, %v4708
      %v4721 = vpack.c.b16 %v4711, %v4710
      %v4722 = vpack.c.b16 %v4713, %v4712
      %v4723 = vpack.c.b16 %v4715, %v4714
      %4732 = vmatprep.subr.bf16.mxu0 0
      %4733 = vmatpush1.bf16.msra.mxu0 %v4723
      %4734 = vmatprep.subr.bf16.mxu0 0
      %4735 = vmatpush1.bf16.msra.mxu0 %v4722
      %4736 = vmatprep.subr.bf16.mxu0 0
      %4737 = vmatpush1.bf16.msra.mxu0 %v4721
      %4738 = vmatprep.subr.bf16.mxu0 0
      %4739 = vmatpush1.bf16.msra.mxu0 %v4720
      %4740 = vmatprep.subr.bf16.mxu0 0
      %4741 = vmatpush1.bf16.msra.mxu0 %v4719
      %4742 = vmatprep.subr.bf16.mxu0 0
      %4743 = vmatpush1.bf16.msra.mxu0 %v4718
      %4744 = vmatprep.subr.bf16.mxu0 0
      %4745 = vmatpush1.bf16.msra.mxu0 %v4717
      %4746 = vmatprep.subr.bf16.mxu0 0
      %4747 = vmatpush1.bf16.msra.mxu0 %v4716
      %4748 = vmatprep.subr.bf16.mxu0 0
      %4749 = vmatpush2.bf16.msra.mxu0 0
      %4750 = vmatprep.subr.bf16.mxu0 0
      %4751 = vmatpush2.bf16.msra.mxu0 0
      %4752 = vmatprep.subr.bf16.mxu0 0
      %4753 = vmatpush2.bf16.msra.mxu0 0
      %4754 = vmatprep.subr.bf16.mxu0 0
      %4755 = vmatpush2.bf16.msra.mxu0 0
      %4756 = vmatprep.subr.bf16.mxu0 0
      %4757 = vmatpush2.bf16.msra.mxu0 0
      %4758 = vmatprep.subr.bf16.mxu0 0
      %4759 = vmatpush2.bf16.msra.mxu0 0
      %4760 = vmatprep.subr.bf16.mxu0 0
      %4761 = vmatpush2.bf16.msra.mxu0 0
      %4762 = vmatprep.subr.bf16.mxu0 0
      %4763 = vmatpush2.bf16.msra.mxu0 0
      %4764 = vmatprep.mubr.bf16.mxu0 0
      %4765 = vmatmul.mubr.bf16.gmra.mxu0 %v3437
      %v4766 = vpop.f32.mrf.mxu0
      %v4767 = vadd.f32 %v3703, %v4766
      %v4768 = vpop.f32.mrf.mxu0
      %v4769 = vpop.f32.mrf.mxu0
      %v4770 = vpop.f32.mrf.mxu0
      %4771 = vdwg.mxu0
      %v4772 = vpack.c.bf16 %v3799, %v3799
      %v4773 = vpack.c.bf16 %v3887, %v3887
      %v4774 = vpack.c.bf16 %v3975, %v3975
      %v4775 = vpack.c.bf16 %v4063, %v4063
      %v4776 = vpack.c.bf16 %v4151, %v4151
      %v4777 = vpack.c.bf16 %v4239, %v4239
      %v4778 = vpack.c.bf16 %v4327, %v4327
      %v4779 = vpack.c.bf16 %v4415, %v4415
      %v4781 = vsel %vm2013, %v4772, 0
      %v4784 = vsel %vm2013, %v4776, 0
      %4786 = vmatprep.subr.bf16.mxu0 0
      %4787 = vmatpush1.bf16.xpose.msra.mxu0 0
      %4788 = vmatprep.subr.bf16.mxu0 0
      %4789 = vmatpush1.bf16.xpose.msra.mxu0 0
      %4790 = vmatprep.subr.bf16.mxu0 0
      %4791 = vmatpush1.bf16.xpose.msra.mxu0 0
      %4792 = vmatprep.subr.bf16.mxu0 0
      %4793 = vmatpush1.bf16.xpose.msra.mxu0 0
      %4794 = vmatprep.subr.bf16.mxu0 0
      %4795 = vmatpush1.bf16.xpose.msra.mxu0 0
      %4796 = vmatprep.subr.bf16.mxu0 0
      %4797 = vmatpush1.bf16.xpose.msra.mxu0 0
      %4798 = vmatprep.subr.bf16.mxu0 0
      %4799 = vmatpush1.bf16.xpose.msra.mxu0 0
      %4800 = vmatprep.subr.bf16.mxu0 0
      %4801 = vmatpush1.bf16.xpose.msra.mxu0 %v4784
      %4802 = vmatprep.subr.bf16.mxu0 0
      %4803 = vmatpush2.bf16.xpose.msra.mxu0 0
      %4804 = vmatprep.subr.bf16.mxu0 0
      %4805 = vmatpush2.bf16.xpose.msra.mxu0 0
      %4806 = vmatprep.subr.bf16.mxu0 0
      %4807 = vmatpush2.bf16.xpose.msra.mxu0 0
      %4808 = vmatprep.subr.bf16.mxu0 0
      %4809 = vmatpush2.bf16.xpose.msra.mxu0 0
      %4810 = vmatprep.subr.bf16.mxu0 0
      %4811 = vmatpush2.bf16.xpose.msra.mxu0 0
      %4812 = vmatprep.subr.bf16.mxu0 0
      %4813 = vmatpush2.bf16.xpose.msra.mxu0 0
      %4814 = vmatprep.subr.bf16.mxu0 0
      %4815 = vmatpush2.bf16.xpose.msra.mxu0 0
      %4816 = vmatprep.subr.bf16.mxu0 0
      %4817 = vmatpush2.bf16.xpose.msra.mxu0 0
      %4818 = vmatprep.mubr.bf16.mxu0 0
      %4819 = vmatmul.mubr.bf16.gmra.mxu0 %v4781
      %v4820 = vpop.f32.mrf.mxu0
      %v4821 = vadd.f32 0.0, %v4820
      %v4822 = vpop.f32.mrf.mxu0
      %v4823 = vpop.f32.mrf.mxu0
      %v4824 = vpop.f32.mrf.mxu0
      %4825 = vdwg.mxu0
      %v4827 = vsel %vm2013, %v4773, 0
      %v4830 = vsel %vm2013, %v4777, 0
      %4832 = vmatprep.subr.bf16.mxu0 0
      %4833 = vmatpush1.bf16.xpose.msra.mxu0 0
      %4834 = vmatprep.subr.bf16.mxu0 0
      %4835 = vmatpush1.bf16.xpose.msra.mxu0 0
      %4836 = vmatprep.subr.bf16.mxu0 0
      %4837 = vmatpush1.bf16.xpose.msra.mxu0 0
      %4838 = vmatprep.subr.bf16.mxu0 0
      %4839 = vmatpush1.bf16.xpose.msra.mxu0 0
      %4840 = vmatprep.subr.bf16.mxu0 0
      %4841 = vmatpush1.bf16.xpose.msra.mxu0 0
      %4842 = vmatprep.subr.bf16.mxu0 0
      %4843 = vmatpush1.bf16.xpose.msra.mxu0 0
      %4844 = vmatprep.subr.bf16.mxu0 0
      %4845 = vmatpush1.bf16.xpose.msra.mxu0 0
      %4846 = vmatprep.subr.bf16.mxu0 0
      %4847 = vmatpush1.bf16.xpose.msra.mxu0 %v4830
      %4848 = vmatprep.subr.bf16.mxu0 0
      %4849 = vmatpush2.bf16.xpose.msra.mxu0 0
      %4850 = vmatprep.subr.bf16.mxu0 0
      %4851 = vmatpush2.bf16.xpose.msra.mxu0 0
      %4852 = vmatprep.subr.bf16.mxu0 0
      %4853 = vmatpush2.bf16.xpose.msra.mxu0 0
      %4854 = vmatprep.subr.bf16.mxu0 0
      %4855 = vmatpush2.bf16.xpose.msra.mxu0 0
      %4856 = vmatprep.subr.bf16.mxu0 0
      %4857 = vmatpush2.bf16.xpose.msra.mxu0 0
      %4858 = vmatprep.subr.bf16.mxu0 0
      %4859 = vmatpush2.bf16.xpose.msra.mxu0 0
      %4860 = vmatprep.subr.bf16.mxu0 0
      %4861 = vmatpush2.bf16.xpose.msra.mxu0 0
      %4862 = vmatprep.subr.bf16.mxu0 0
      %4863 = vmatpush2.bf16.xpose.msra.mxu0 0
      %4864 = vmatprep.mubr.bf16.mxu0 0
      %4865 = vmatmul.mubr.bf16.gmra.mxu0 %v4827
      %v4866 = vpop.f32.mrf.mxu0
      %v4867 = vadd.f32 0.0, %v4866
      %v4868 = vpop.f32.mrf.mxu0
      %v4869 = vpop.f32.mrf.mxu0
      %v4870 = vpop.f32.mrf.mxu0
      %4871 = vdwg.mxu0
      %v4873 = vsel %vm2013, %v4774, 0
      %v4876 = vsel %vm2013, %v4778, 0
      %4878 = vmatprep.subr.bf16.mxu0 0
      %4879 = vmatpush1.bf16.xpose.msra.mxu0 0
      %4880 = vmatprep.subr.bf16.mxu0 0
      %4881 = vmatpush1.bf16.xpose.msra.mxu0 0
      %4882 = vmatprep.subr.bf16.mxu0 0
      %4883 = vmatpush1.bf16.xpose.msra.mxu0 0
      %4884 = vmatprep.subr.bf16.mxu0 0
      %4885 = vmatpush1.bf16.xpose.msra.mxu0 0
      %4886 = vmatprep.subr.bf16.mxu0 0
      %4887 = vmatpush1.bf16.xpose.msra.mxu0 0
      %4888 = vmatprep.subr.bf16.mxu0 0
      %4889 = vmatpush1.bf16.xpose.msra.mxu0 0
      %4890 = vmatprep.subr.bf16.mxu0 0
      %4891 = vmatpush1.bf16.xpose.msra.mxu0 0
      %4892 = vmatprep.subr.bf16.mxu0 0
      %4893 = vmatpush1.bf16.xpose.msra.mxu0 %v4876
      %4894 = vmatprep.subr.bf16.mxu0 0
      %4895 = vmatpush2.bf16.xpose.msra.mxu0 0
      %4896 = vmatprep.subr.bf16.mxu0 0
      %4897 = vmatpush2.bf16.xpose.msra.mxu0 0
      %4898 = vmatprep.subr.bf16.mxu0 0
      %4899 = vmatpush2.bf16.xpose.msra.mxu0 0
      %4900 = vmatprep.subr.bf16.mxu0 0
      %4901 = vmatpush2.bf16.xpose.msra.mxu0 0
      %4902 = vmatprep.subr.bf16.mxu0 0
      %4903 = vmatpush2.bf16.xpose.msra.mxu0 0
      %4904 = vmatprep.subr.bf16.mxu0 0
      %4905 = vmatpush2.bf16.xpose.msra.mxu0 0
      %4906 = vmatprep.subr.bf16.mxu0 0
      %4907 = vmatpush2.bf16.xpose.msra.mxu0 0
      %4908 = vmatprep.subr.bf16.mxu0 0
      %4909 = vmatpush2.bf16.xpose.msra.mxu0 0
      %4910 = vmatprep.mubr.bf16.mxu0 0
      %4911 = vmatmul.mubr.bf16.gmra.mxu0 %v4873
      %v4912 = vpop.f32.mrf.mxu0
      %v4913 = vadd.f32 0.0, %v4912
      %v4914 = vpop.f32.mrf.mxu0
      %v4915 = vpop.f32.mrf.mxu0
      %v4916 = vpop.f32.mrf.mxu0
      %4917 = vdwg.mxu0
      %v4919 = vsel %vm2013, %v4775, 0
      %v4922 = vsel %vm2013, %v4779, 0
      %4924 = vmatprep.subr.bf16.mxu0 0
      %4925 = vmatpush1.bf16.xpose.msra.mxu0 0
      %4926 = vmatprep.subr.bf16.mxu0 0
      %4927 = vmatpush1.bf16.xpose.msra.mxu0 0
      %4928 = vmatprep.subr.bf16.mxu0 0
      %4929 = vmatpush1.bf16.xpose.msra.mxu0 0
      %4930 = vmatprep.subr.bf16.mxu0 0
      %4931 = vmatpush1.bf16.xpose.msra.mxu0 0
      %4932 = vmatprep.subr.bf16.mxu0 0
      %4933 = vmatpush1.bf16.xpose.msra.mxu0 0
      %4934 = vmatprep.subr.bf16.mxu0 0
      %4935 = vmatpush1.bf16.xpose.msra.mxu0 0
      %4936 = vmatprep.subr.bf16.mxu0 0
      %4937 = vmatpush1.bf16.xpose.msra.mxu0 0
      %4938 = vmatprep.subr.bf16.mxu0 0
      %4939 = vmatpush1.bf16.xpose.msra.mxu0 %v4922
      %4940 = vmatprep.subr.bf16.mxu0 0
      %4941 = vmatpush2.bf16.xpose.msra.mxu0 0
      %4942 = vmatprep.subr.bf16.mxu0 0
      %4943 = vmatpush2.bf16.xpose.msra.mxu0 0
      %4944 = vmatprep.subr.bf16.mxu0 0
      %4945 = vmatpush2.bf16.xpose.msra.mxu0 0
      %4946 = vmatprep.subr.bf16.mxu0 0
      %4947 = vmatpush2.bf16.xpose.msra.mxu0 0
      %4948 = vmatprep.subr.bf16.mxu0 0
      %4949 = vmatpush2.bf16.xpose.msra.mxu0 0
      %4950 = vmatprep.subr.bf16.mxu0 0
      %4951 = vmatpush2.bf16.xpose.msra.mxu0 0
      %4952 = vmatprep.subr.bf16.mxu0 0
      %4953 = vmatpush2.bf16.xpose.msra.mxu0 0
      %4954 = vmatprep.subr.bf16.mxu0 0
      %4955 = vmatpush2.bf16.xpose.msra.mxu0 0
      %4956 = vmatprep.mubr.bf16.mxu0 0
      %4957 = vmatmul.mubr.bf16.gmra.mxu0 %v4919
      %v4958 = vpop.f32.mrf.mxu0
      %v4959 = vadd.f32 0.0, %v4958
      %v4960 = vpop.f32.mrf.mxu0
      %v4961 = vpop.f32.mrf.mxu0
      %v4962 = vpop.f32.mrf.mxu0
      %4963 = vdwg.mxu0
      %v4964 = vmul.f32 %v4821, 0.17677669
      %v4965 = vmul.f32 %v4867, 0.17677669
      %v4966 = vmul.f32 %v4913, 0.17677669
      %v4967 = vmul.f32 %v4959, 0.17677669
      %v4968 = vadd.f32 %v4964, %v2206
      %v4969 = vadd.f32 %v4965, %v2206
      %v4970 = vadd.f32 %v4966, %v2206
      %v4971 = vadd.f32 %v4967, %v2206
      %v4972 = vsel %vm2212, %v4968, -inf
      %4973 = vmax.xlane.f32.xlu0 %v4972
      %v4974 = vpop.xlane.xlu0 %4973
      %v4975 = vsel %vm2212, %v4969, -inf
      %4976 = vmax.xlane.f32.xlu0 %v4975
      %v4977 = vpop.xlane.xlu0 %4976
      %v4978 = vsel %vm2212, %v4970, -inf
      %4979 = vmax.xlane.f32.xlu0 %v4978
      %v4980 = vpop.xlane.xlu0 %4979
      %v4981 = vsel %vm2212, %v4971, -inf
      %4982 = vmax.xlane.f32.xlu0 %v4981
      %v4983 = vpop.xlane.xlu0 %4982
      %v4984 = vsub.f32 %v4968, %v4974
      %v4985 = vsub.f32 %v4969, %v4977
      %v4986 = vsub.f32 %v4970, %v4980
      %v4987 = vsub.f32 %v4971, %v4983
      %v4988 = vmul.f32 %v4984, 1.442695
      %v4989 = vpow.pop %v4988
      %v4990 = vmul.f32 %v4985, 1.442695
      %v4991 = vpow.pop %v4990
      %v4992 = vmul.f32 %v4986, 1.442695
      %v4993 = vpow.pop %v4992
      %v4994 = vmul.f32 %v4987, 1.442695
      %v4995 = vpow.pop %v4994
      %v4996 = vsel %vm2212, %v4989, 0.0
      %4997 = vadd.xlane.f32.xlu0 %v4996
      %v4998 = vpop.xlane.xlu0 %4997
      %v4999 = vsel %vm2212, %v4991, 0.0
      %5000 = vadd.xlane.f32.xlu0 %v4999
      %v5001 = vpop.xlane.xlu0 %5000
      %v5002 = vsel %vm2212, %v4993, 0.0
      %5003 = vadd.xlane.f32.xlu0 %v5002
      %v5004 = vpop.xlane.xlu0 %5003
      %v5005 = vsel %vm2212, %v4995, 0.0
      %5006 = vadd.xlane.f32.xlu0 %v5005
      %v5007 = vpop.xlane.xlu0 %5006
      %v5008 = vrcp.pop %v4998
      %v5009 = vrcp.pop %v5001
      %v5010 = vrcp.pop %v5004
      %v5011 = vrcp.pop %v5007
      %v5012 = vmul.f32 %v4989, %v5008
      %v5013 = vmul.f32 %v4991, %v5009
      %v5014 = vmul.f32 %v4993, %v5010
      %v5015 = vmul.f32 %v4995, %v5011
      %v5016 = vpack.c.bf16 %v5012, %v5012
      %v5017 = vpack.c.bf16 %v5013, %v5013
      %v5018 = vpack.c.bf16 %v5014, %v5014
      %v5019 = vpack.c.bf16 %v5015, %v5015
      %v5020 = vpack.c.bf16 %v4503, %v4503
      %v5021 = vpack.c.bf16 %v4591, %v4591
      %v5022 = vpack.c.bf16 %v4679, %v4679
      %v5023 = vpack.c.bf16 %v4767, %v4767
      %v5025 = vsel %vm2212, %v5016, 0
      %v5028 = vsel %vm2268, %v5020, 0
      %5030 = vmatprep.subr.bf16.mxu0 0
      %5031 = vmatpush1.bf16.msra.mxu0 0
      %5032 = vmatprep.subr.bf16.mxu0 0
      %5033 = vmatpush1.bf16.msra.mxu0 0
      %5034 = vmatprep.subr.bf16.mxu0 0
      %5035 = vmatpush1.bf16.msra.mxu0 0
      %5036 = vmatprep.subr.bf16.mxu0 0
      %5037 = vmatpush1.bf16.msra.mxu0 0
      %5038 = vmatprep.subr.bf16.mxu0 0
      %5039 = vmatpush1.bf16.msra.mxu0 0
      %5040 = vmatprep.subr.bf16.mxu0 0
      %5041 = vmatpush1.bf16.msra.mxu0 0
      %5042 = vmatprep.subr.bf16.mxu0 0
      %5043 = vmatpush1.bf16.msra.mxu0 0
      %5044 = vmatprep.subr.bf16.mxu0 0
      %5045 = vmatpush1.bf16.msra.mxu0 %v5028
      %5046 = vmatprep.subr.bf16.mxu0 0
      %5047 = vmatpush2.bf16.msra.mxu0 0
      %5048 = vmatprep.subr.bf16.mxu0 0
      %5049 = vmatpush2.bf16.msra.mxu0 0
      %5050 = vmatprep.subr.bf16.mxu0 0
      %5051 = vmatpush2.bf16.msra.mxu0 0
      %5052 = vmatprep.subr.bf16.mxu0 0
      %5053 = vmatpush2.bf16.msra.mxu0 0
      %5054 = vmatprep.subr.bf16.mxu0 0
      %5055 = vmatpush2.bf16.msra.mxu0 0
      %5056 = vmatprep.subr.bf16.mxu0 0
      %5057 = vmatpush2.bf16.msra.mxu0 0
      %5058 = vmatprep.subr.bf16.mxu0 0
      %5059 = vmatpush2.bf16.msra.mxu0 0
      %5060 = vmatprep.subr.bf16.mxu0 0
      %5061 = vmatpush2.bf16.msra.mxu0 0
      %5062 = vmatprep.mubr.bf16.mxu0 0
      %5063 = vmatmul.mubr.bf16.gmra.mxu0 %v5025
      %v5064 = vpop.f32.mrf.mxu0
      %v5065 = vadd.f32 0.0, %v5064
      %v5066 = vpop.f32.mrf.mxu0
      %v5067 = vpop.f32.mrf.mxu0
      %v5068 = vpop.f32.mrf.mxu0
      %5069 = vdwg.mxu0
      %v5071 = vsel %vm2212, %v5017, 0
      %v5074 = vsel %vm2268, %v5021, 0
      %5076 = vmatprep.subr.bf16.mxu0 0
      %5077 = vmatpush1.bf16.msra.mxu0 0
      %5078 = vmatprep.subr.bf16.mxu0 0
      %5079 = vmatpush1.bf16.msra.mxu0 0
      %5080 = vmatprep.subr.bf16.mxu0 0
      %5081 = vmatpush1.bf16.msra.mxu0 0
      %5082 = vmatprep.subr.bf16.mxu0 0
      %5083 = vmatpush1.bf16.msra.mxu0 0
      %5084 = vmatprep.subr.bf16.mxu0 0
      %5085 = vmatpush1.bf16.msra.mxu0 0
      %5086 = vmatprep.subr.bf16.mxu0 0
      %5087 = vmatpush1.bf16.msra.mxu0 0
      %5088 = vmatprep.subr.bf16.mxu0 0
      %5089 = vmatpush1.bf16.msra.mxu0 0
      %5090 = vmatprep.subr.bf16.mxu0 0
      %5091 = vmatpush1.bf16.msra.mxu0 %v5074
      %5092 = vmatprep.subr.bf16.mxu0 0
      %5093 = vmatpush2.bf16.msra.mxu0 0
      %5094 = vmatprep.subr.bf16.mxu0 0
      %5095 = vmatpush2.bf16.msra.mxu0 0
      %5096 = vmatprep.subr.bf16.mxu0 0
      %5097 = vmatpush2.bf16.msra.mxu0 0
      %5098 = vmatprep.subr.bf16.mxu0 0
      %5099 = vmatpush2.bf16.msra.mxu0 0
      %5100 = vmatprep.subr.bf16.mxu0 0
      %5101 = vmatpush2.bf16.msra.mxu0 0
      %5102 = vmatprep.subr.bf16.mxu0 0
      %5103 = vmatpush2.bf16.msra.mxu0 0
      %5104 = vmatprep.subr.bf16.mxu0 0
      %5105 = vmatpush2.bf16.msra.mxu0 0
      %5106 = vmatprep.subr.bf16.mxu0 0
      %5107 = vmatpush2.bf16.msra.mxu0 0
      %5108 = vmatprep.mubr.bf16.mxu0 0
      %5109 = vmatmul.mubr.bf16.gmra.mxu0 %v5071
      %v5110 = vpop.f32.mrf.mxu0
      %v5111 = vadd.f32 0.0, %v5110
      %v5112 = vpop.f32.mrf.mxu0
      %v5113 = vpop.f32.mrf.mxu0
      %v5114 = vpop.f32.mrf.mxu0
      %5115 = vdwg.mxu0
      %v5117 = vsel %vm2212, %v5018, 0
      %v5120 = vsel %vm2268, %v5022, 0
      %5122 = vmatprep.subr.bf16.mxu0 0
      %5123 = vmatpush1.bf16.msra.mxu0 0
      %5124 = vmatprep.subr.bf16.mxu0 0
      %5125 = vmatpush1.bf16.msra.mxu0 0
      %5126 = vmatprep.subr.bf16.mxu0 0
      %5127 = vmatpush1.bf16.msra.mxu0 0
      %5128 = vmatprep.subr.bf16.mxu0 0
      %5129 = vmatpush1.bf16.msra.mxu0 0
      %5130 = vmatprep.subr.bf16.mxu0 0
      %5131 = vmatpush1.bf16.msra.mxu0 0
      %5132 = vmatprep.subr.bf16.mxu0 0
      %5133 = vmatpush1.bf16.msra.mxu0 0
      %5134 = vmatprep.subr.bf16.mxu0 0
      %5135 = vmatpush1.bf16.msra.mxu0 0
      %5136 = vmatprep.subr.bf16.mxu0 0
      %5137 = vmatpush1.bf16.msra.mxu0 %v5120
      %5138 = vmatprep.subr.bf16.mxu0 0
      %5139 = vmatpush2.bf16.msra.mxu0 0
      %5140 = vmatprep.subr.bf16.mxu0 0
      %5141 = vmatpush2.bf16.msra.mxu0 0
      %5142 = vmatprep.subr.bf16.mxu0 0
      %5143 = vmatpush2.bf16.msra.mxu0 0
      %5144 = vmatprep.subr.bf16.mxu0 0
      %5145 = vmatpush2.bf16.msra.mxu0 0
      %5146 = vmatprep.subr.bf16.mxu0 0
      %5147 = vmatpush2.bf16.msra.mxu0 0
      %5148 = vmatprep.subr.bf16.mxu0 0
      %5149 = vmatpush2.bf16.msra.mxu0 0
      %5150 = vmatprep.subr.bf16.mxu0 0
      %5151 = vmatpush2.bf16.msra.mxu0 0
      %5152 = vmatprep.subr.bf16.mxu0 0
      %5153 = vmatpush2.bf16.msra.mxu0 0
      %5154 = vmatprep.mubr.bf16.mxu0 0
      %5155 = vmatmul.mubr.bf16.gmra.mxu0 %v5117
      %v5156 = vpop.f32.mrf.mxu0
      %v5157 = vadd.f32 0.0, %v5156
      %v5158 = vpop.f32.mrf.mxu0
      %v5159 = vpop.f32.mrf.mxu0
      %v5160 = vpop.f32.mrf.mxu0
      %5161 = vdwg.mxu0
      %v5163 = vsel %vm2212, %v5019, 0
      %v5166 = vsel %vm2268, %v5023, 0
      %5168 = vmatprep.subr.bf16.mxu0 0
      %5169 = vmatpush1.bf16.msra.mxu0 0
      %5170 = vmatprep.subr.bf16.mxu0 0
      %5171 = vmatpush1.bf16.msra.mxu0 0
      %5172 = vmatprep.subr.bf16.mxu0 0
      %5173 = vmatpush1.bf16.msra.mxu0 0
      %5174 = vmatprep.subr.bf16.mxu0 0
      %5175 = vmatpush1.bf16.msra.mxu0 0
      %5176 = vmatprep.subr.bf16.mxu0 0
      %5177 = vmatpush1.bf16.msra.mxu0 0
      %5178 = vmatprep.subr.bf16.mxu0 0
      %5179 = vmatpush1.bf16.msra.mxu0 0
      %5180 = vmatprep.subr.bf16.mxu0 0
      %5181 = vmatpush1.bf16.msra.mxu0 0
      %5182 = vmatprep.subr.bf16.mxu0 0
      %5183 = vmatpush1.bf16.msra.mxu0 %v5166
      %5184 = vmatprep.subr.bf16.mxu0 0
      %5185 = vmatpush2.bf16.msra.mxu0 0
      %5186 = vmatprep.subr.bf16.mxu0 0
      %5187 = vmatpush2.bf16.msra.mxu0 0
      %5188 = vmatprep.subr.bf16.mxu0 0
      %5189 = vmatpush2.bf16.msra.mxu0 0
      %5190 = vmatprep.subr.bf16.mxu0 0
      %5191 = vmatpush2.bf16.msra.mxu0 0
      %5192 = vmatprep.subr.bf16.mxu0 0
      %5193 = vmatpush2.bf16.msra.mxu0 0
      %5194 = vmatprep.subr.bf16.mxu0 0
      %5195 = vmatpush2.bf16.msra.mxu0 0
      %5196 = vmatprep.subr.bf16.mxu0 0
      %5197 = vmatpush2.bf16.msra.mxu0 0
      %5198 = vmatprep.subr.bf16.mxu0 0
      %5199 = vmatpush2.bf16.msra.mxu0 0
      %5200 = vmatprep.mubr.bf16.mxu0 0
      %5201 = vmatmul.mubr.bf16.gmra.mxu0 %v5163
      %v5202 = vpop.f32.mrf.mxu0
      %v5203 = vadd.f32 0.0, %v5202
      %v5204 = vpop.f32.mrf.mxu0
      %v5205 = vpop.f32.mrf.mxu0
      %v5206 = vpop.f32.mrf.mxu0
      %5207 = vdwg.mxu0
      %v5208 = vpack.c.bf16 %v5065, %v5065
      %v5209 = vpack.c.bf16 %v5111, %v5111
      %v5210 = vpack.c.bf16 %v5157, %v5157
      %v5211 = vpack.c.bf16 %v5203, %v5203
      %s5212 = scalar_lea.vmem %s6, 64
      %v5213 = vld [vmem:[%s5212] sm:$0xf]
      %v5214 = vld [vmem:[%s5212 + $0x4] sm:$0xf]
      %v5215 = vld [vmem:[%s5212 + $0x8] sm:$0xf]
      %v5216 = vld [vmem:[%s5212 + $0xc] sm:$0xf]
      %v5217 = vld [vmem:[%s5212 + $0x10] sm:$0xf]
      %v5218 = vld [vmem:[%s5212 + $0x14] sm:$0xf]
      %v5219 = vld [vmem:[%s5212 + $0x18] sm:$0xf]
      %v5220 = vld [vmem:[%s5212 + $0x1c] sm:$0xf]
      %v5221 = vld [vmem:[%s5212 + $0x20] sm:$0xf]
      %v5222 = vld [vmem:[%s5212 + $0x24] sm:$0xf]
      %v5223 = vld [vmem:[%s5212 + $0x28] sm:$0xf]
      %v5224 = vld [vmem:[%s5212 + $0x2c] sm:$0xf]
      %v5225 = vld [vmem:[%s5212 + $0x30] sm:$0xf]
      %v5226 = vld [vmem:[%s5212 + $0x34] sm:$0xf]
      %v5227 = vld [vmem:[%s5212 + $0x38] sm:$0xf]
      %v5228 = vld [vmem:[%s5212 + $0x3c] sm:$0xf]
      %v5233 = vunpack.c.l.b16 %v5213
      %v5234 = vunpack.c.l.b16 %v5214
      %v5235 = vunpack.c.l.b16 %v5215
      %v5236 = vunpack.c.l.b16 %v5216
      %v5237 = vpack.c.b16 %v5234, %v5233
      %v5238 = vpack.c.b16 %v5236, %v5235
      %v5242 = vsel %vm2013, %v5208, 0
      %5244 = vmatprep.subr.bf16.mxu0 0
      %5245 = vmatpush1.bf16.msra.mxu0 0
      %5246 = vmatprep.subr.bf16.mxu0 0
      %5247 = vmatpush1.bf16.msra.mxu0 0
      %5248 = vmatprep.subr.bf16.mxu0 0
      %5249 = vmatpush1.bf16.msra.mxu0 0
      %5250 = vmatprep.subr.bf16.mxu0 0
      %5251 = vmatpush1.bf16.msra.mxu0 0
      %5252 = vmatprep.subr.bf16.mxu0 0
      %5253 = vmatpush1.bf16.msra.mxu0 0
      %5254 = vmatprep.subr.bf16.mxu0 0
      %5255 = vmatpush1.bf16.msra.mxu0 0
      %5256 = vmatprep.subr.bf16.mxu0 0
      %5257 = vmatpush1.bf16.msra.mxu0 %v5238
      %5258 = vmatprep.subr.bf16.mxu0 0
      %5259 = vmatpush1.bf16.msra.mxu0 %v5237
      %5260 = vmatprep.subr.bf16.mxu0 0
      %5261 = vmatpush2.bf16.msra.mxu0 0
      %5262 = vmatprep.subr.bf16.mxu0 0
      %5263 = vmatpush2.bf16.msra.mxu0 0
      %5264 = vmatprep.subr.bf16.mxu0 0
      %5265 = vmatpush2.bf16.msra.mxu0 0
      %5266 = vmatprep.subr.bf16.mxu0 0
      %5267 = vmatpush2.bf16.msra.mxu0 0
      %5268 = vmatprep.subr.bf16.mxu0 0
      %5269 = vmatpush2.bf16.msra.mxu0 0
      %5270 = vmatprep.subr.bf16.mxu0 0
      %5271 = vmatpush2.bf16.msra.mxu0 0
      %5272 = vmatprep.subr.bf16.mxu0 0
      %5273 = vmatpush2.bf16.msra.mxu0 0
      %5274 = vmatprep.subr.bf16.mxu0 0
      %5275 = vmatpush2.bf16.msra.mxu0 0
      %5276 = vmatprep.mubr.bf16.mxu0 0
      %5277 = vmatmul.mubr.bf16.gmra.mxu0 %v5242
      %v5278 = vpop.f32.mrf.mxu0
      %v5279 = vadd.f32 0.0, %v5278
      %v5280 = vpop.f32.mrf.mxu0
      %v5281 = vpop.f32.mrf.mxu0
      %v5282 = vpop.f32.mrf.mxu0
      %5283 = vdwg.mxu0
      %v5288 = vunpack.c.l.b16 %v5217
      %v5289 = vunpack.c.l.b16 %v5218
      %v5290 = vunpack.c.l.b16 %v5219
      %v5291 = vunpack.c.l.b16 %v5220
      %v5292 = vpack.c.b16 %v5289, %v5288
      %v5293 = vpack.c.b16 %v5291, %v5290
      %v5297 = vsel %vm2013, %v5209, 0
      %5299 = vmatprep.subr.bf16.mxu0 0
      %5300 = vmatpush1.bf16.msra.mxu0 0
      %5301 = vmatprep.subr.bf16.mxu0 0
      %5302 = vmatpush1.bf16.msra.mxu0 0
      %5303 = vmatprep.subr.bf16.mxu0 0
      %5304 = vmatpush1.bf16.msra.mxu0 0
      %5305 = vmatprep.subr.bf16.mxu0 0
      %5306 = vmatpush1.bf16.msra.mxu0 0
      %5307 = vmatprep.subr.bf16.mxu0 0
      %5308 = vmatpush1.bf16.msra.mxu0 0
      %5309 = vmatprep.subr.bf16.mxu0 0
      %5310 = vmatpush1.bf16.msra.mxu0 0
      %5311 = vmatprep.subr.bf16.mxu0 0
      %5312 = vmatpush1.bf16.msra.mxu0 %v5293
      %5313 = vmatprep.subr.bf16.mxu0 0
      %5314 = vmatpush1.bf16.msra.mxu0 %v5292
      %5315 = vmatprep.subr.bf16.mxu0 0
      %5316 = vmatpush2.bf16.msra.mxu0 0
      %5317 = vmatprep.subr.bf16.mxu0 0
      %5318 = vmatpush2.bf16.msra.mxu0 0
      %5319 = vmatprep.subr.bf16.mxu0 0
      %5320 = vmatpush2.bf16.msra.mxu0 0
      %5321 = vmatprep.subr.bf16.mxu0 0
      %5322 = vmatpush2.bf16.msra.mxu0 0
      %5323 = vmatprep.subr.bf16.mxu0 0
      %5324 = vmatpush2.bf16.msra.mxu0 0
      %5325 = vmatprep.subr.bf16.mxu0 0
      %5326 = vmatpush2.bf16.msra.mxu0 0
      %5327 = vmatprep.subr.bf16.mxu0 0
      %5328 = vmatpush2.bf16.msra.mxu0 0
      %5329 = vmatprep.subr.bf16.mxu0 0
      %5330 = vmatpush2.bf16.msra.mxu0 0
      %5331 = vmatprep.mubr.bf16.mxu0 0
      %5332 = vmatmul.mubr.bf16.gmra.mxu0 %v5297
      %v5333 = vpop.f32.mrf.mxu0
      %v5334 = vadd.f32 0.0, %v5333
      %v5335 = vpop.f32.mrf.mxu0
      %v5336 = vpop.f32.mrf.mxu0
      %v5337 = vpop.f32.mrf.mxu0
      %5338 = vdwg.mxu0
      %v5343 = vunpack.c.l.b16 %v5221
      %v5344 = vunpack.c.l.b16 %v5222
      %v5345 = vunpack.c.l.b16 %v5223
      %v5346 = vunpack.c.l.b16 %v5224
      %v5347 = vpack.c.b16 %v5344, %v5343
      %v5348 = vpack.c.b16 %v5346, %v5345
      %v5352 = vsel %vm2013, %v5210, 0
      %5354 = vmatprep.subr.bf16.mxu0 0
      %5355 = vmatpush1.bf16.msra.mxu0 0
      %5356 = vmatprep.subr.bf16.mxu0 0
      %5357 = vmatpush1.bf16.msra.mxu0 0
      %5358 = vmatprep.subr.bf16.mxu0 0
      %5359 = vmatpush1.bf16.msra.mxu0 0
      %5360 = vmatprep.subr.bf16.mxu0 0
      %5361 = vmatpush1.bf16.msra.mxu0 0
      %5362 = vmatprep.subr.bf16.mxu0 0
      %5363 = vmatpush1.bf16.msra.mxu0 0
      %5364 = vmatprep.subr.bf16.mxu0 0
      %5365 = vmatpush1.bf16.msra.mxu0 0
      %5366 = vmatprep.subr.bf16.mxu0 0
      %5367 = vmatpush1.bf16.msra.mxu0 %v5348
      %5368 = vmatprep.subr.bf16.mxu0 0
      %5369 = vmatpush1.bf16.msra.mxu0 %v5347
      %5370 = vmatprep.subr.bf16.mxu0 0
      %5371 = vmatpush2.bf16.msra.mxu0 0
      %5372 = vmatprep.subr.bf16.mxu0 0
      %5373 = vmatpush2.bf16.msra.mxu0 0
      %5374 = vmatprep.subr.bf16.mxu0 0
      %5375 = vmatpush2.bf16.msra.mxu0 0
      %5376 = vmatprep.subr.bf16.mxu0 0
      %5377 = vmatpush2.bf16.msra.mxu0 0
      %5378 = vmatprep.subr.bf16.mxu0 0
      %5379 = vmatpush2.bf16.msra.mxu0 0
      %5380 = vmatprep.subr.bf16.mxu0 0
      %5381 = vmatpush2.bf16.msra.mxu0 0
      %5382 = vmatprep.subr.bf16.mxu0 0
      %5383 = vmatpush2.bf16.msra.mxu0 0
      %5384 = vmatprep.subr.bf16.mxu0 0
      %5385 = vmatpush2.bf16.msra.mxu0 0
      %5386 = vmatprep.mubr.bf16.mxu0 0
      %5387 = vmatmul.mubr.bf16.gmra.mxu0 %v5352
      %v5388 = vpop.f32.mrf.mxu0
      %v5389 = vadd.f32 0.0, %v5388
      %v5390 = vpop.f32.mrf.mxu0
      %v5391 = vpop.f32.mrf.mxu0
      %v5392 = vpop.f32.mrf.mxu0
      %5393 = vdwg.mxu0
      %v5398 = vunpack.c.l.b16 %v5225
      %v5399 = vunpack.c.l.b16 %v5226
      %v5400 = vunpack.c.l.b16 %v5227
      %v5401 = vunpack.c.l.b16 %v5228
      %v5402 = vpack.c.b16 %v5399, %v5398
      %v5403 = vpack.c.b16 %v5401, %v5400
      %v5407 = vsel %vm2013, %v5211, 0
      %5409 = vmatprep.subr.bf16.mxu0 0
      %5410 = vmatpush1.bf16.msra.mxu0 0
      %5411 = vmatprep.subr.bf16.mxu0 0
      %5412 = vmatpush1.bf16.msra.mxu0 0
      %5413 = vmatprep.subr.bf16.mxu0 0
      %5414 = vmatpush1.bf16.msra.mxu0 0
      %5415 = vmatprep.subr.bf16.mxu0 0
      %5416 = vmatpush1.bf16.msra.mxu0 0
      %5417 = vmatprep.subr.bf16.mxu0 0
      %5418 = vmatpush1.bf16.msra.mxu0 0
      %5419 = vmatprep.subr.bf16.mxu0 0
      %5420 = vmatpush1.bf16.msra.mxu0 0
      %5421 = vmatprep.subr.bf16.mxu0 0
      %5422 = vmatpush1.bf16.msra.mxu0 %v5403
      %5423 = vmatprep.subr.bf16.mxu0 0
      %5424 = vmatpush1.bf16.msra.mxu0 %v5402
      %5425 = vmatprep.subr.bf16.mxu0 0
      %5426 = vmatpush2.bf16.msra.mxu0 0
      %5427 = vmatprep.subr.bf16.mxu0 0
      %5428 = vmatpush2.bf16.msra.mxu0 0
      %5429 = vmatprep.subr.bf16.mxu0 0
      %5430 = vmatpush2.bf16.msra.mxu0 0
      %5431 = vmatprep.subr.bf16.mxu0 0
      %5432 = vmatpush2.bf16.msra.mxu0 0
      %5433 = vmatprep.subr.bf16.mxu0 0
      %5434 = vmatpush2.bf16.msra.mxu0 0
      %5435 = vmatprep.subr.bf16.mxu0 0
      %5436 = vmatpush2.bf16.msra.mxu0 0
      %5437 = vmatprep.subr.bf16.mxu0 0
      %5438 = vmatpush2.bf16.msra.mxu0 0
      %5439 = vmatprep.subr.bf16.mxu0 0
      %5440 = vmatpush2.bf16.msra.mxu0 0
      %5441 = vmatprep.mubr.bf16.mxu0 0
      %5442 = vmatmul.mubr.bf16.gmra.mxu0 %v5407
      %v5443 = vpop.f32.mrf.mxu0
      %v5444 = vadd.f32 0.0, %v5443
      %v5445 = vpop.f32.mrf.mxu0
      %v5446 = vpop.f32.mrf.mxu0
      %v5447 = vpop.f32.mrf.mxu0
      %5448 = vdwg.mxu0
      %v5449 = vadd.f32 %v5279, %v5334
      %v5450 = vadd.f32 %v5449, %v5389
      %v5451 = vadd.f32 %v5450, %v5444
      %s5452 = scalar_lea.vmem %s7, 1
      %v5453 = vld [vmem:[%s5452] sm:$0x1]
      %v5455 = vlaneseq
      %v5456 = vshrl.u32 %v5455, 7
      %v5457 = vsub.s32 0, %v5456
      %v5458 = vrot.slane %v5453, %v5457
      %v5460 = vadd.f32 %v5451, %v5458
      %v5461 = vadd.f32 %v3436, %v5460
      %s5462 = scalar_lea.vmem %s8, 1
      %v5463 = vld [vmem:[%s5462] sm:$0x1]
      %s5464 = scalar_lea.vmem %s9, 1
      %v5465 = vld [vmem:[%s5464] sm:$0x1]
      %5466 = vadd.xlane.f32.xlu0 %v5461
      %v5467 = vpop.xlane.xlu0 %5466
      %v5468 = vmul.f32 %v5467, %v645
      %v5469 = vsub.f32 %v5461, %v5468
      %v5470 = vmul.f32 %v5469, %v5469
      %5471 = vadd.xlane.f32.xlu0 %v5470
      %v5472 = vpop.xlane.xlu0 %5471
      %v5473 = vmul.f32 %v5472, %v645
      %v5474 = vadd.f32 %v5473, 1e-05
      %v5475 = vrsqrt.pop %v5474
      %v5476 = vmul.f32 %v5469, %v5475
      %v5478 = vlaneseq
      %v5479 = vshrl.u32 %v5478, 7
      %v5480 = vsub.s32 0, %v5479
      %v5481 = vrot.slane %v5463, %v5480
      %v5483 = vmul.f32 %v5476, %v5481
      %v5485 = vlaneseq
      %v5486 = vshrl.u32 %v5485, 7
      %v5487 = vsub.s32 0, %v5486
      %v5488 = vrot.slane %v5465, %v5487
      %v5490 = vadd.f32 %v5483, %v5488
      %v5491 = vpack.c.bf16 %v5490, %v5490
      %s5492 = scalar_lea.vmem %s10, 256
      %v5493 = vld [vmem:[%s5492] sm:$0xff]
      %v5494 = vld [vmem:[%s5492 + $0x8] sm:$0xff]
      %v5495 = vld [vmem:[%s5492 + $0x10] sm:$0xff]
      %v5496 = vld [vmem:[%s5492 + $0x18] sm:$0xff]
      %v5497 = vld [vmem:[%s5492 + $0x20] sm:$0xff]
      %v5498 = vld [vmem:[%s5492 + $0x28] sm:$0xff]
      %v5499 = vld [vmem:[%s5492 + $0x30] sm:$0xff]
      %v5500 = vld [vmem:[%s5492 + $0x38] sm:$0xff]
      %v5501 = vld [vmem:[%s5492 + $0x40] sm:$0xff]
      %v5502 = vld [vmem:[%s5492 + $0x48] sm:$0xff]
      %v5503 = vld [vmem:[%s5492 + $0x50] sm:$0xff]
      %v5504 = vld [vmem:[%s5492 + $0x58] sm:$0xff]
      %v5505 = vld [vmem:[%s5492 + $0x60] sm:$0xff]
      %v5506 = vld [vmem:[%s5492 + $0x68] sm:$0xff]
      %v5507 = vld [vmem:[%s5492 + $0x70] sm:$0xff]
      %v5508 = vld [vmem:[%s5492 + $0x78] sm:$0xff]
      %v5509 = vld [vmem:[%s5492 + $0x80] sm:$0xff]
      %v5510 = vld [vmem:[%s5492 + $0x88] sm:$0xff]
      %v5511 = vld [vmem:[%s5492 + $0x90] sm:$0xff]
      %v5512 = vld [vmem:[%s5492 + $0x98] sm:$0xff]
      %v5513 = vld [vmem:[%s5492 + $0xa0] sm:$0xff]
      %v5514 = vld [vmem:[%s5492 + $0xa8] sm:$0xff]
      %v5515 = vld [vmem:[%s5492 + $0xb0] sm:$0xff]
      %v5516 = vld [vmem:[%s5492 + $0xb8] sm:$0xff]
      %v5517 = vld [vmem:[%s5492 + $0xc0] sm:$0xff]
      %v5518 = vld [vmem:[%s5492 + $0xc8] sm:$0xff]
      %v5519 = vld [vmem:[%s5492 + $0xd0] sm:$0xff]
      %v5520 = vld [vmem:[%s5492 + $0xd8] sm:$0xff]
      %v5521 = vld [vmem:[%s5492 + $0xe0] sm:$0xff]
      %v5522 = vld [vmem:[%s5492 + $0xe8] sm:$0xff]
      %v5523 = vld [vmem:[%s5492 + $0xf0] sm:$0xff]
      %v5524 = vld [vmem:[%s5492 + $0xf8] sm:$0xff]
      %s5525 = scalar_lea.vmem %s11, 4
      %v5526 = vld [vmem:[%s5525] sm:$0xf]
      %v5528 = vlaneseq
      %v5529 = vshrl.u32 %v5528, 7
      %v5530 = vsub.s32 0, %v5529
      %v5531 = vrot.slane %v5526, %v5530
      %v5532 = vlaneseq
      %v5533 = vshrl.u32 %v5532, 7
      %v5534 = vsub.s32 1, %v5533
      %v5535 = vrot.slane %v5526, %v5534
      %v5536 = vlaneseq
      %v5537 = vshrl.u32 %v5536, 7
      %v5538 = vsub.s32 2, %v5537
      %v5539 = vrot.slane %v5526, %v5538
      %v5540 = vlaneseq
      %v5541 = vshrl.u32 %v5540, 7
      %v5542 = vsub.s32 3, %v5541
      %v5543 = vrot.slane %v5526, %v5542
      %v5580 = vunpack.c.l.b16 %v5493
      %v5581 = vunpack.c.h.b16 %v5493
      %v5582 = vunpack.c.l.b16 %v5494
      %v5583 = vunpack.c.h.b16 %v5494
      %v5584 = vunpack.c.l.b16 %v5495
      %v5585 = vunpack.c.h.b16 %v5495
      %v5586 = vunpack.c.l.b16 %v5496
      %v5587 = vunpack.c.h.b16 %v5496
      %v5588 = vunpack.c.l.b16 %v5497
      %v5589 = vunpack.c.h.b16 %v5497
      %v5590 = vunpack.c.l.b16 %v5498
      %v5591 = vunpack.c.h.b16 %v5498
      %v5592 = vunpack.c.l.b16 %v5499
      %v5593 = vunpack.c.h.b16 %v5499
      %v5594 = vunpack.c.l.b16 %v5500
      %v5595 = vunpack.c.h.b16 %v5500
      %v5596 = vunpack.c.l.b16 %v5501
      %v5597 = vunpack.c.h.b16 %v5501
      %v5598 = vunpack.c.l.b16 %v5502
      %v5599 = vunpack.c.h.b16 %v5502
      %v5600 = vunpack.c.l.b16 %v5503
      %v5601 = vunpack.c.h.b16 %v5503
      %v5602 = vunpack.c.l.b16 %v5504
      %v5603 = vunpack.c.h.b16 %v5504
      %v5604 = vunpack.c.l.b16 %v5505
      %v5605 = vunpack.c.h.b16 %v5505
      %v5606 = vunpack.c.l.b16 %v5506
      %v5607 = vunpack.c.h.b16 %v5506
      %v5608 = vunpack.c.l.b16 %v5507
      %v5609 = vunpack.c.h.b16 %v5507
      %v5610 = vunpack.c.l.b16 %v5508
      %v5611 = vunpack.c.h.b16 %v5508
      %v5612 = vunpack.c.l.b16 %v5509
      %v5613 = vunpack.c.h.b16 %v5509
      %v5614 = vunpack.c.l.b16 %v5510
      %v5615 = vunpack.c.h.b16 %v5510
      %v5616 = vunpack.c.l.b16 %v5511
      %v5617 = vunpack.c.h.b16 %v5511
      %v5618 = vunpack.c.l.b16 %v5512
      %v5619 = vunpack.c.h.b16 %v5512
      %v5620 = vunpack.c.l.b16 %v5513
      %v5621 = vunpack.c.h.b16 %v5513
      %v5622 = vunpack.c.l.b16 %v5514
      %v5623 = vunpack.c.h.b16 %v5514
      %v5624 = vunpack.c.l.b16 %v5515
      %v5625 = vunpack.c.h.b16 %v5515
      %v5626 = vunpack.c.l.b16 %v5516
      %v5627 = vunpack.c.h.b16 %v5516
      %v5628 = vunpack.c.l.b16 %v5517
      %v5629 = vunpack.c.h.b16 %v5517
      %v5630 = vunpack.c.l.b16 %v5518
      %v5631 = vunpack.c.h.b16 %v5518
      %v5632 = vunpack.c.l.b16 %v5519
      %v5633 = vunpack.c.h.b16 %v5519
      %v5634 = vunpack.c.l.b16 %v5520
      %v5635 = vunpack.c.h.b16 %v5520
      %v5636 = vunpack.c.l.b16 %v5521
      %v5637 = vunpack.c.h.b16 %v5521
      %v5638 = vunpack.c.l.b16 %v5522
      %v5639 = vunpack.c.h.b16 %v5522
      %v5640 = vunpack.c.l.b16 %v5523
      %v5641 = vunpack.c.h.b16 %v5523
      %v5642 = vunpack.c.l.b16 %v5524
      %v5643 = vunpack.c.h.b16 %v5524
      %v5644 = vpack.c.b16 %v5584, %v5580
      %v5645 = vpack.c.b16 %v5585, %v5581
      %v5646 = vpack.c.b16 %v5586, %v5582
      %v5647 = vpack.c.b16 %v5587, %v5583
      %v5648 = vpack.c.b16 %v5592, %v5588
      %v5649 = vpack.c.b16 %v5593, %v5589
      %v5650 = vpack.c.b16 %v5594, %v5590
      %v5651 = vpack.c.b16 %v5595, %v5591
      %v5652 = vpack.c.b16 %v5600, %v5596
      %v5653 = vpack.c.b16 %v5601, %v5597
      %v5654 = vpack.c.b16 %v5602, %v5598
      %v5655 = vpack.c.b16 %v5603, %v5599
      %v5656 = vpack.c.b16 %v5608, %v5604
      %v5657 = vpack.c.b16 %v5609, %v5605
      %v5658 = vpack.c.b16 %v5610, %v5606
      %v5659 = vpack.c.b16 %v5611, %v5607
      %v5660 = vpack.c.b16 %v5616, %v5612
      %v5661 = vpack.c.b16 %v5617, %v5613
      %v5662 = vpack.c.b16 %v5618, %v5614
      %v5663 = vpack.c.b16 %v5619, %v5615
      %v5664 = vpack.c.b16 %v5624, %v5620
      %v5665 = vpack.c.b16 %v5625, %v5621
      %v5666 = vpack.c.b16 %v5626, %v5622
      %v5667 = vpack.c.b16 %v5627, %v5623
      %v5668 = vpack.c.b16 %v5632, %v5628
      %v5669 = vpack.c.b16 %v5633, %v5629
      %v5670 = vpack.c.b16 %v5634, %v5630
      %v5671 = vpack.c.b16 %v5635, %v5631
      %v5672 = vpack.c.b16 %v5640, %v5636
      %v5673 = vpack.c.b16 %v5641, %v5637
      %v5674 = vpack.c.b16 %v5642, %v5638
      %v5675 = vpack.c.b16 %v5643, %v5639
      %5708 = vmatprep.subr.bf16.mxu0 %v5673
      %5709 = vmatpush1.bf16.msra.mxu0 %v5672
      %5710 = vmatprep.subr.bf16.mxu0 %v5669
      %5711 = vmatpush1.bf16.msra.mxu0 %v5668
      %5712 = vmatprep.subr.bf16.mxu0 %v5665
      %5713 = vmatpush1.bf16.msra.mxu0 %v5664
      %5714 = vmatprep.subr.bf16.mxu0 %v5661
      %5715 = vmatpush1.bf16.msra.mxu0 %v5660
      %5716 = vmatprep.subr.bf16.mxu0 %v5657
      %5717 = vmatpush1.bf16.msra.mxu0 %v5656
      %5718 = vmatprep.subr.bf16.mxu0 %v5653
      %5719 = vmatpush1.bf16.msra.mxu0 %v5652
      %5720 = vmatprep.subr.bf16.mxu0 %v5649
      %5721 = vmatpush1.bf16.msra.mxu0 %v5648
      %5722 = vmatprep.subr.bf16.mxu0 %v5645
      %5723 = vmatpush1.bf16.msra.mxu0 %v5644
      %5724 = vmatprep.subr.bf16.mxu0 0
      %5725 = vmatpush2.bf16.msra.mxu0 0
      %5726 = vmatprep.subr.bf16.mxu0 0
      %5727 = vmatpush2.bf16.msra.mxu0 0
      %5728 = vmatprep.subr.bf16.mxu0 0
      %5729 = vmatpush2.bf16.msra.mxu0 0
      %5730 = vmatprep.subr.bf16.mxu0 0
      %5731 = vmatpush2.bf16.msra.mxu0 0
      %5732 = vmatprep.subr.bf16.mxu0 0
      %5733 = vmatpush2.bf16.msra.mxu0 0
      %5734 = vmatprep.subr.bf16.mxu0 0
      %5735 = vmatpush2.bf16.msra.mxu0 0
      %5736 = vmatprep.subr.bf16.mxu0 0
      %5737 = vmatpush2.bf16.msra.mxu0 0
      %5738 = vmatprep.subr.bf16.mxu0 0
      %5739 = vmatpush2.bf16.msra.mxu0 0
      %5740 = vmatprep.mubr.bf16.mxu0 0
      %5741 = vmatmul.mubr.bf16.gmra.mxu0 %v5491
      %v5742 = vpop.f32.mrf.mxu0
      %v5743 = vadd.f32 %v5531, %v5742
      %v5744 = vpop.f32.mrf.mxu0
      %v5745 = vadd.f32 %v5535, %v5744
      %v5746 = vpop.f32.mrf.mxu0
      %v5747 = vpop.f32.mrf.mxu0
      %5748 = vdwg.mxu0
      %5749 = vmatprep.subr.bf16.mxu0 %v5675
      %5750 = vmatpush1.bf16.msra.mxu0 %v5674
      %5751 = vmatprep.subr.bf16.mxu0 %v5671
      %5752 = vmatpush1.bf16.msra.mxu0 %v5670
      %5753 = vmatprep.subr.bf16.mxu0 %v5667
      %5754 = vmatpush1.bf16.msra.mxu0 %v5666
      %5755 = vmatprep.subr.bf16.mxu0 %v5663
      %5756 = vmatpush1.bf16.msra.mxu0 %v5662
      %5757 = vmatprep.subr.bf16.mxu0 %v5659
      %5758 = vmatpush1.bf16.msra.mxu0 %v5658
      %5759 = vmatprep.subr.bf16.mxu0 %v5655
      %5760 = vmatpush1.bf16.msra.mxu0 %v5654
      %5761 = vmatprep.subr.bf16.mxu0 %v5651
      %5762 = vmatpush1.bf16.msra.mxu0 %v5650
      %5763 = vmatprep.subr.bf16.mxu0 %v5647
      %5764 = vmatpush1.bf16.msra.mxu0 %v5646
      %5765 = vmatprep.subr.bf16.mxu0 0
      %5766 = vmatpush2.bf16.msra.mxu0 0
      %5767 = vmatprep.subr.bf16.mxu0 0
      %5768 = vmatpush2.bf16.msra.mxu0 0
      %5769 = vmatprep.subr.bf16.mxu0 0
      %5770 = vmatpush2.bf16.msra.mxu0 0
      %5771 = vmatprep.subr.bf16.mxu0 0
      %5772 = vmatpush2.bf16.msra.mxu0 0
      %5773 = vmatprep.subr.bf16.mxu0 0
      %5774 = vmatpush2.bf16.msra.mxu0 0
      %5775 = vmatprep.subr.bf16.mxu0 0
      %5776 = vmatpush2.bf16.msra.mxu0 0
      %5777 = vmatprep.subr.bf16.mxu0 0
      %5778 = vmatpush2.bf16.msra.mxu0 0
      %5779 = vmatprep.subr.bf16.mxu0 0
      %5780 = vmatpush2.bf16.msra.mxu0 0
      %5781 = vmatprep.mubr.bf16.mxu0 0
      %5782 = vmatmul.mubr.bf16.gmra.mxu0 %v5491
      %v5783 = vpop.f32.mrf.mxu0
      %v5784 = vadd.f32 %v5539, %v5783
      %v5785 = vpop.f32.mrf.mxu0
      %v5786 = vadd.f32 %v5543, %v5785
      %v5787 = vpop.f32.mrf.mxu0
      %v5788 = vpop.f32.mrf.mxu0
      %5789 = vdwg.mxu0
      %v5790 = vmul.f32 %v5743, 0.5
      %v5791 = vmul.f32 %v5745, 0.5
      %v5792 = vmul.f32 %v5784, 0.5
      %v5793 = vmul.f32 %v5786, 0.5
      %v5794 = vmul.f32 %v5743, 0.044715
      %v5795 = vmul.f32 %v5745, 0.044715
      %v5796 = vmul.f32 %v5784, 0.044715
      %v5797 = vmul.f32 %v5786, 0.044715
      %v5798 = vmul.f32 %v5794, %v5743
      %v5799 = vmul.f32 %v5795, %v5745
      %v5800 = vmul.f32 %v5796, %v5784
      %v5801 = vmul.f32 %v5797, %v5786
      %v5802 = vmul.f32 %v5798, %v5743
      %v5803 = vmul.f32 %v5799, %v5745
      %v5804 = vmul.f32 %v5800, %v5784
      %v5805 = vmul.f32 %v5801, %v5786
      %v5806 = vadd.f32 %v5743, %v5802
      %v5807 = vadd.f32 %v5745, %v5803
      %v5808 = vadd.f32 %v5784, %v5804
      %v5809 = vadd.f32 %v5786, %v5805
      %v5810 = vmul.f32 %v5806, 0.7978846
      %v5811 = vmul.f32 %v5807, 0.7978846
      %v5812 = vmul.f32 %v5808, 0.7978846
      %v5813 = vmul.f32 %v5809, 0.7978846
      %v5814 = vtanh.pop %v5810
      %v5815 = vtanh.pop %v5811
      %v5816 = vtanh.pop %v5812
      %v5817 = vtanh.pop %v5813
      %v5818 = vadd.f32 %v5814, 1.0
      %v5819 = vadd.f32 %v5815, 1.0
      %v5820 = vadd.f32 %v5816, 1.0
      %v5821 = vadd.f32 %v5817, 1.0
      %v5822 = vmul.f32 %v5790, %v5818
      %v5823 = vmul.f32 %v5791, %v5819
      %v5824 = vmul.f32 %v5792, %v5820
      %v5825 = vmul.f32 %v5793, %v5821
      %v5826 = vpack.c.bf16 %v5822, %v5822
      %v5827 = vpack.c.bf16 %v5823, %v5823
      %v5828 = vpack.c.bf16 %v5824, %v5824
      %v5829 = vpack.c.bf16 %v5825, %v5825
      %s5830 = scalar_lea.vmem %s12, 256
      %v5831 = vld [vmem:[%s5830] sm:$0xf]
      %v5832 = vld [vmem:[%s5830 + $0x4] sm:$0xf]
      %v5833 = vld [vmem:[%s5830 + $0x8] sm:$0xf]
      %v5834 = vld [vmem:[%s5830 + $0xc] sm:$0xf]
      %v5835 = vld [vmem:[%s5830 + $0x10] sm:$0xf]
      %v5836 = vld [vmem:[%s5830 + $0x14] sm:$0xf]
      %v5837 = vld [vmem:[%s5830 + $0x18] sm:$0xf]
      %v5838 = vld [vmem:[%s5830 + $0x1c] sm:$0xf]
      %v5839 = vld [vmem:[%s5830 + $0x20] sm:$0xf]
      %v5840 = vld [vmem:[%s5830 + $0x24] sm:$0xf]
      %v5841 = vld [vmem:[%s5830 + $0x28] sm:$0xf]
      %v5842 = vld [vmem:[%s5830 + $0x2c] sm:$0xf]
      %v5843 = vld [vmem:[%s5830 + $0x30] sm:$0xf]
      %v5844 = vld [vmem:[%s5830 + $0x34] sm:$0xf]
      %v5845 = vld [vmem:[%s5830 + $0x38] sm:$0xf]
      %v5846 = vld [vmem:[%s5830 + $0x3c] sm:$0xf]
      %v5847 = vld [vmem:[%s5830 + $0x40] sm:$0xf]
      %v5848 = vld [vmem:[%s5830 + $0x44] sm:$0xf]
      %v5849 = vld [vmem:[%s5830 + $0x48] sm:$0xf]
      %v5850 = vld [vmem:[%s5830 + $0x4c] sm:$0xf]
      %v5851 = vld [vmem:[%s5830 + $0x50] sm:$0xf]
      %v5852 = vld [vmem:[%s5830 + $0x54] sm:$0xf]
      %v5853 = vld [vmem:[%s5830 + $0x58] sm:$0xf]
      %v5854 = vld [vmem:[%s5830 + $0x5c] sm:$0xf]
      %v5855 = vld [vmem:[%s5830 + $0x60] sm:$0xf]
      %v5856 = vld [vmem:[%s5830 + $0x64] sm:$0xf]
      %v5857 = vld [vmem:[%s5830 + $0x68] sm:$0xf]
      %v5858 = vld [vmem:[%s5830 + $0x6c] sm:$0xf]
      %v5859 = vld [vmem:[%s5830 + $0x70] sm:$0xf]
      %v5860 = vld [vmem:[%s5830 + $0x74] sm:$0xf]
      %v5861 = vld [vmem:[%s5830 + $0x78] sm:$0xf]
      %v5862 = vld [vmem:[%s5830 + $0x7c] sm:$0xf]
      %v5863 = vld [vmem:[%s5830 + $0x80] sm:$0xf]
      %v5864 = vld [vmem:[%s5830 + $0x84] sm:$0xf]
      %v5865 = vld [vmem:[%s5830 + $0x88] sm:$0xf]
      %v5866 = vld [vmem:[%s5830 + $0x8c] sm:$0xf]
      %v5867 = vld [vmem:[%s5830 + $0x90] sm:$0xf]
      %v5868 = vld [vmem:[%s5830 + $0x94] sm:$0xf]
      %v5869 = vld [vmem:[%s5830 + $0x98] sm:$0xf]
      %v5870 = vld [vmem:[%s5830 + $0x9c] sm:$0xf]
      %v5871 = vld [vmem:[%s5830 + $0xa0] sm:$0xf]
      %v5872 = vld [vmem:[%s5830 + $0xa4] sm:$0xf]
      %v5873 = vld [vmem:[%s5830 + $0xa8] sm:$0xf]
      %v5874 = vld [vmem:[%s5830 + $0xac] sm:$0xf]
      %v5875 = vld [vmem:[%s5830 + $0xb0] sm:$0xf]
      %v5876 = vld [vmem:[%s5830 + $0xb4] sm:$0xf]
      %v5877 = vld [vmem:[%s5830 + $0xb8] sm:$0xf]
      %v5878 = vld [vmem:[%s5830 + $0xbc] sm:$0xf]
      %v5879 = vld [vmem:[%s5830 + $0xc0] sm:$0xf]
      %v5880 = vld [vmem:[%s5830 + $0xc4] sm:$0xf]
      %v5881 = vld [vmem:[%s5830 + $0xc8] sm:$0xf]
      %v5882 = vld [vmem:[%s5830 + $0xcc] sm:$0xf]
      %v5883 = vld [vmem:[%s5830 + $0xd0] sm:$0xf]
      %v5884 = vld [vmem:[%s5830 + $0xd4] sm:$0xf]
      %v5885 = vld [vmem:[%s5830 + $0xd8] sm:$0xf]
      %v5886 = vld [vmem:[%s5830 + $0xdc] sm:$0xf]
      %v5887 = vld [vmem:[%s5830 + $0xe0] sm:$0xf]
      %v5888 = vld [vmem:[%s5830 + $0xe4] sm:$0xf]
      %v5889 = vld [vmem:[%s5830 + $0xe8] sm:$0xf]
      %v5890 = vld [vmem:[%s5830 + $0xec] sm:$0xf]
      %v5891 = vld [vmem:[%s5830 + $0xf0] sm:$0xf]
      %v5892 = vld [vmem:[%s5830 + $0xf4] sm:$0xf]
      %v5893 = vld [vmem:[%s5830 + $0xf8] sm:$0xf]
      %v5894 = vld [vmem:[%s5830 + $0xfc] sm:$0xf]
      %s5895 = scalar_lea.vmem %s13, 1
      %v5896 = vld [vmem:[%s5895] sm:$0x1]
      %v5898 = vlaneseq
      %v5899 = vshrl.u32 %v5898, 7
      %v5900 = vsub.s32 0, %v5899
      %v5901 = vrot.slane %v5896, %v5900
      %v5967 = vunpack.c.l.b16 %v5831
      %v5968 = vunpack.c.l.b16 %v5832
      %v5969 = vunpack.c.l.b16 %v5833
      %v5970 = vunpack.c.l.b16 %v5834
      %v5971 = vunpack.c.l.b16 %v5835
      %v5972 = vunpack.c.l.b16 %v5836
      %v5973 = vunpack.c.l.b16 %v5837
      %v5974 = vunpack.c.l.b16 %v5838
      %v5975 = vunpack.c.l.b16 %v5839
      %v5976 = vunpack.c.l.b16 %v5840
      %v5977 = vunpack.c.l.b16 %v5841
      %v5978 = vunpack.c.l.b16 %v5842
      %v5979 = vunpack.c.l.b16 %v5843
      %v5980 = vunpack.c.l.b16 %v5844
      %v5981 = vunpack.c.l.b16 %v5845
      %v5982 = vunpack.c.l.b16 %v5846
      %v5983 = vunpack.c.l.b16 %v5847
      %v5984 = vunpack.c.l.b16 %v5848
      %v5985 = vunpack.c.l.b16 %v5849
      %v5986 = vunpack.c.l.b16 %v5850
      %v5987 = vunpack.c.l.b16 %v5851
      %v5988 = vunpack.c.l.b16 %v5852
      %v5989 = vunpack.c.l.b16 %v5853
      %v5990 = vunpack.c.l.b16 %v5854
      %v5991 = vunpack.c.l.b16 %v5855
      %v5992 = vunpack.c.l.b16 %v5856
      %v5993 = vunpack.c.l.b16 %v5857
      %v5994 = vunpack.c.l.b16 %v5858
      %v5995 = vunpack.c.l.b16 %v5859
      %v5996 = vunpack.c.l.b16 %v5860
      %v5997 = vunpack.c.l.b16 %v5861
      %v5998 = vunpack.c.l.b16 %v5862
      %v5999 = vunpack.c.l.b16 %v5863
      %v6000 = vunpack.c.l.b16 %v5864
      %v6001 = vunpack.c.l.b16 %v5865
      %v6002 = vunpack.c.l.b16 %v5866
      %v6003 = vunpack.c.l.b16 %v5867
      %v6004 = vunpack.c.l.b16 %v5868
      %v6005 = vunpack.c.l.b16 %v5869
      %v6006 = vunpack.c.l.b16 %v5870
      %v6007 = vunpack.c.l.b16 %v5871
      %v6008 = vunpack.c.l.b16 %v5872
      %v6009 = vunpack.c.l.b16 %v5873
      %v6010 = vunpack.c.l.b16 %v5874
      %v6011 = vunpack.c.l.b16 %v5875
      %v6012 = vunpack.c.l.b16 %v5876
      %v6013 = vunpack.c.l.b16 %v5877
      %v6014 = vunpack.c.l.b16 %v5878
      %v6015 = vunpack.c.l.b16 %v5879
      %v6016 = vunpack.c.l.b16 %v5880
      %v6017 = vunpack.c.l.b16 %v5881
      %v6018 = vunpack.c.l.b16 %v5882
      %v6019 = vunpack.c.l.b16 %v5883
      %v6020 = vunpack.c.l.b16 %v5884
      %v6021 = vunpack.c.l.b16 %v5885
      %v6022 = vunpack.c.l.b16 %v5886
      %v6023 = vunpack.c.l.b16 %v5887
      %v6024 = vunpack.c.l.b16 %v5888
      %v6025 = vunpack.c.l.b16 %v5889
      %v6026 = vunpack.c.l.b16 %v5890
      %v6027 = vunpack.c.l.b16 %v5891
      %v6028 = vunpack.c.l.b16 %v5892
      %v6029 = vunpack.c.l.b16 %v5893
      %v6030 = vunpack.c.l.b16 %v5894
      %v6031 = vpack.c.b16 %v5968, %v5967
      %v6032 = vpack.c.b16 %v5970, %v5969
      %v6033 = vpack.c.b16 %v5972, %v5971
      %v6034 = vpack.c.b16 %v5974, %v5973
      %v6035 = vpack.c.b16 %v5976, %v5975
      %v6036 = vpack.c.b16 %v5978, %v5977
      %v6037 = vpack.c.b16 %v5980, %v5979
      %v6038 = vpack.c.b16 %v5982, %v5981
      %v6039 = vpack.c.b16 %v5984, %v5983
      %v6040 = vpack.c.b16 %v5986, %v5985
      %v6041 = vpack.c.b16 %v5988, %v5987
      %v6042 = vpack.c.b16 %v5990, %v5989
      %v6043 = vpack.c.b16 %v5992, %v5991
      %v6044 = vpack.c.b16 %v5994, %v5993
      %v6045 = vpack.c.b16 %v5996, %v5995
      %v6046 = vpack.c.b16 %v5998, %v5997
      %v6047 = vpack.c.b16 %v6000, %v5999
      %v6048 = vpack.c.b16 %v6002, %v6001
      %v6049 = vpack.c.b16 %v6004, %v6003
      %v6050 = vpack.c.b16 %v6006, %v6005
      %v6051 = vpack.c.b16 %v6008, %v6007
      %v6052 = vpack.c.b16 %v6010, %v6009
      %v6053 = vpack.c.b16 %v6012, %v6011
      %v6054 = vpack.c.b16 %v6014, %v6013
      %v6055 = vpack.c.b16 %v6016, %v6015
      %v6056 = vpack.c.b16 %v6018, %v6017
      %v6057 = vpack.c.b16 %v6020, %v6019
      %v6058 = vpack.c.b16 %v6022, %v6021
      %v6059 = vpack.c.b16 %v6024, %v6023
      %v6060 = vpack.c.b16 %v6026, %v6025
      %v6061 = vpack.c.b16 %v6028, %v6027
      %v6062 = vpack.c.b16 %v6030, %v6029
      %6095 = vmatprep.subr.bf16.mxu0 0
      %6096 = vmatpush1.bf16.msra.mxu0 %v6038
      %6097 = vmatprep.subr.bf16.mxu0 0
      %6098 = vmatpush1.bf16.msra.mxu0 %v6037
      %6099 = vmatprep.subr.bf16.mxu0 0
      %6100 = vmatpush1.bf16.msra.mxu0 %v6036
      %6101 = vmatprep.subr.bf16.mxu0 0
      %6102 = vmatpush1.bf16.msra.mxu0 %v6035
      %6103 = vmatprep.subr.bf16.mxu0 0
      %6104 = vmatpush1.bf16.msra.mxu0 %v6034
      %6105 = vmatprep.subr.bf16.mxu0 0
      %6106 = vmatpush1.bf16.msra.mxu0 %v6033
      %6107 = vmatprep.subr.bf16.mxu0 0
      %6108 = vmatpush1.bf16.msra.mxu0 %v6032
      %6109 = vmatprep.subr.bf16.mxu0 0
      %6110 = vmatpush1.bf16.msra.mxu0 %v6031
      %6111 = vmatprep.subr.bf16.mxu0 0
      %6112 = vmatpush2.bf16.msra.mxu0 %v6046
      %6113 = vmatprep.subr.bf16.mxu0 0
      %6114 = vmatpush2.bf16.msra.mxu0 %v6045
      %6115 = vmatprep.subr.bf16.mxu0 0
      %6116 = vmatpush2.bf16.msra.mxu0 %v6044
      %6117 = vmatprep.subr.bf16.mxu0 0
      %6118 = vmatpush2.bf16.msra.mxu0 %v6043
      %6119 = vmatprep.subr.bf16.mxu0 0
      %6120 = vmatpush2.bf16.msra.mxu0 %v6042
      %6121 = vmatprep.subr.bf16.mxu0 0
      %6122 = vmatpush2.bf16.msra.mxu0 %v6041
      %6123 = vmatprep.subr.bf16.mxu0 0
      %6124 = vmatpush2.bf16.msra.mxu0 %v6040
      %6125 = vmatprep.subr.bf16.mxu0 0
      %6126 = vmatpush2.bf16.msra.mxu0 %v6039
      %6127 = vmatprep.mubr.bf16.mxu0 %v5827
      %6128 = vmatmul.mubr.bf16.gmra.mxu0 %v5826
      %v6129 = vpop.f32.mrf.mxu0
      %v6130 = vadd.f32 %v5901, %v6129
      %v6131 = vpop.f32.mrf.mxu0
      %v6132 = vpop.f32.mrf.mxu0
      %v6133 = vpop.f32.mrf.mxu0
      %6134 = vdwg.mxu0
      %6135 = vmatprep.subr.bf16.mxu0 0
      %6136 = vmatpush1.bf16.msra.mxu0 %v6054
      %6137 = vmatprep.subr.bf16.mxu0 0
      %6138 = vmatpush1.bf16.msra.mxu0 %v6053
      %6139 = vmatprep.subr.bf16.mxu0 0
      %6140 = vmatpush1.bf16.msra.mxu0 %v6052
      %6141 = vmatprep.subr.bf16.mxu0 0
      %6142 = vmatpush1.bf16.msra.mxu0 %v6051
      %6143 = vmatprep.subr.bf16.mxu0 0
      %6144 = vmatpush1.bf16.msra.mxu0 %v6050
      %6145 = vmatprep.subr.bf16.mxu0 0
      %6146 = vmatpush1.bf16.msra.mxu0 %v6049
      %6147 = vmatprep.subr.bf16.mxu0 0
      %6148 = vmatpush1.bf16.msra.mxu0 %v6048
      %6149 = vmatprep.subr.bf16.mxu0 0
      %6150 = vmatpush1.bf16.msra.mxu0 %v6047
      %6151 = vmatprep.subr.bf16.mxu0 0
      %6152 = vmatpush2.bf16.msra.mxu0 %v6062
      %6153 = vmatprep.subr.bf16.mxu0 0
      %6154 = vmatpush2.bf16.msra.mxu0 %v6061
      %6155 = vmatprep.subr.bf16.mxu0 0
      %6156 = vmatpush2.bf16.msra.mxu0 %v6060
      %6157 = vmatprep.subr.bf16.mxu0 0
      %6158 = vmatpush2.bf16.msra.mxu0 %v6059
      %6159 = vmatprep.subr.bf16.mxu0 0
      %6160 = vmatpush2.bf16.msra.mxu0 %v6058
      %6161 = vmatprep.subr.bf16.mxu0 0
      %6162 = vmatpush2.bf16.msra.mxu0 %v6057
      %6163 = vmatprep.subr.bf16.mxu0 0
      %6164 = vmatpush2.bf16.msra.mxu0 %v6056
      %6165 = vmatprep.subr.bf16.mxu0 0
      %6166 = vmatpush2.bf16.msra.mxu0 %v6055
      %6167 = vmatprep.mubr.bf16.mxu0 %v5829
      %6168 = vmatmul.mubr.bf16.gmra.mxu0 %v5828
      %v6169 = vpop.f32.mrf.mxu0
      %v6170 = vadd.f32 %v6130, %v6169
      %v6171 = vpop.f32.mrf.mxu0
      %v6172 = vpop.f32.mrf.mxu0
      %v6173 = vpop.f32.mrf.mxu0
      %6174 = vdwg.mxu0
      %v6175 = vadd.f32 %v5490, %v6170
      %s6176 = scalar_lea.vmem %s14, 1
      %v6177 = vld [vmem:[%s6176] sm:$0x1]
      %s6178 = scalar_lea.vmem %s15, 1
      %v6179 = vld [vmem:[%s6178] sm:$0x1]
      %6180 = vadd.xlane.f32.xlu0 %v6175
      %v6181 = vpop.xlane.xlu0 %6180
      %v6182 = vmul.f32 %v6181, %v645
      %v6183 = vsub.f32 %v6175, %v6182
      %v6184 = vmul.f32 %v6183, %v6183
      %6185 = vadd.xlane.f32.xlu0 %v6184
      %v6186 = vpop.xlane.xlu0 %6185
      %v6187 = vmul.f32 %v6186, %v645
      %v6188 = vadd.f32 %v6187, 1e-05
      %v6189 = vrsqrt.pop %v6188
      %v6190 = vmul.f32 %v6183, %v6189
      %v6192 = vlaneseq
      %v6193 = vshrl.u32 %v6192, 7
      %v6194 = vsub.s32 0, %v6193
      %v6195 = vrot.slane %v6177, %v6194
      %v6197 = vmul.f32 %v6190, %v6195
      %v6199 = vlaneseq
      %v6200 = vshrl.u32 %v6199, 7
      %v6201 = vsub.s32 0, %v6200
      %v6202 = vrot.slane %v6179, %v6201
      %v6204 = vadd.f32 %v6197, %v6202
      %v6205 = vpack.c.bf16 %v6204, %v6204
      %v6206 = vld [vmem:[%s16] sm:$0xf]
      %v6207 = vld [vmem:[%s16 + $0x4] sm:$0xf]
      %v6208 = vld [vmem:[%s16 + $0x8] sm:$0xf]
      %v6209 = vld [vmem:[%s16 + $0xc] sm:$0xf]
      %v6210 = vld [vmem:[%s16 + $0x10] sm:$0xf]
      %v6211 = vld [vmem:[%s16 + $0x14] sm:$0xf]
      %v6212 = vld [vmem:[%s16 + $0x18] sm:$0xf]
      %v6213 = vld [vmem:[%s16 + $0x1c] sm:$0xf]
      %v6214 = vld [vmem:[%s16 + $0x20] sm:$0xf]
      %v6215 = vld [vmem:[%s16 + $0x24] sm:$0xf]
      %v6216 = vld [vmem:[%s16 + $0x28] sm:$0xf]
      %v6217 = vld [vmem:[%s16 + $0x2c] sm:$0xf]
      %v6218 = vld [vmem:[%s16 + $0x30] sm:$0xf]
      %v6219 = vld [vmem:[%s16 + $0x34] sm:$0xf]
      %v6220 = vld [vmem:[%s16 + $0x38] sm:$0xf]
      %v6221 = vld [vmem:[%s16 + $0x3c] sm:$0xf]
      %v6222 = vld [vmem:[%s17] sm:$0x1]
      %v6239 = vunpack.c.l.b16 %v6206
      %v6240 = vunpack.c.l.b16 %v6207
      %v6241 = vunpack.c.l.b16 %v6208
      %v6242 = vunpack.c.l.b16 %v6209
      %v6243 = vunpack.c.l.b16 %v6210
      %v6244 = vunpack.c.l.b16 %v6211
      %v6245 = vunpack.c.l.b16 %v6212
      %v6246 = vunpack.c.l.b16 %v6213
      %v6247 = vunpack.c.l.b16 %v6214
      %v6248 = vunpack.c.l.b16 %v6215
      %v6249 = vunpack.c.l.b16 %v6216
      %v6250 = vunpack.c.l.b16 %v6217
      %v6251 = vunpack.c.l.b16 %v6218
      %v6252 = vunpack.c.l.b16 %v6219
      %v6253 = vunpack.c.l.b16 %v6220
      %v6254 = vunpack.c.l.b16 %v6221
      %v6255 = vpack.c.b16 %v6240, %v6239
      %v6256 = vpack.c.b16 %v6242, %v6241
      %v6257 = vpack.c.b16 %v6244, %v6243
      %v6258 = vpack.c.b16 %v6246, %v6245
      %v6259 = vpack.c.b16 %v6248, %v6247
      %v6260 = vpack.c.b16 %v6250, %v6249
      %v6261 = vpack.c.b16 %v6252, %v6251
      %v6262 = vpack.c.b16 %v6254, %v6253
      %6271 = vmatprep.subr.bf16.mxu0 0
      %6272 = vmatpush1.bf16.msra.mxu0 %v6262
      %6273 = vmatprep.subr.bf16.mxu0 0
      %6274 = vmatpush1.bf16.msra.mxu0 %v6261
      %6275 = vmatprep.subr.bf16.mxu0 0
      %6276 = vmatpush1.bf16.msra.mxu0 %v6260
      %6277 = vmatprep.subr.bf16.mxu0 0
      %6278 = vmatpush1.bf16.msra.mxu0 %v6259
      %6279 = vmatprep.subr.bf16.mxu0 0
      %6280 = vmatpush1.bf16.msra.mxu0 %v6258
      %6281 = vmatprep.subr.bf16.mxu0 0
      %6282 = vmatpush1.bf16.msra.mxu0 %v6257
      %6283 = vmatprep.subr.bf16.mxu0 0
      %6284 = vmatpush1.bf16.msra.mxu0 %v6256
      %6285 = vmatprep.subr.bf16.mxu0 0
      %6286 = vmatpush1.bf16.msra.mxu0 %v6255
      %6287 = vmatprep.subr.bf16.mxu0 0
      %6288 = vmatpush2.bf16.msra.mxu0 0
      %6289 = vmatprep.subr.bf16.mxu0 0
      %6290 = vmatpush2.bf16.msra.mxu0 0
      %6291 = vmatprep.subr.bf16.mxu0 0
      %6292 = vmatpush2.bf16.msra.mxu0 0
      %6293 = vmatprep.subr.bf16.mxu0 0
      %6294 = vmatpush2.bf16.msra.mxu0 0
      %6295 = vmatprep.subr.bf16.mxu0 0
      %6296 = vmatpush2.bf16.msra.mxu0 0
      %6297 = vmatprep.subr.bf16.mxu0 0
      %6298 = vmatpush2.bf16.msra.mxu0 0
      %6299 = vmatprep.subr.bf16.mxu0 0
      %6300 = vmatpush2.bf16.msra.mxu0 0
      %6301 = vmatprep.subr.bf16.mxu0 0
      %6302 = vmatpush2.bf16.msra.mxu0 0
      %6303 = vmatprep.mubr.bf16.mxu0 0
      %6304 = vmatmul.mubr.bf16.gmra.mxu0 %v6205
      %v6305 = vpop.f32.mrf.mxu0
      %v6306 = vadd.f32 %v6222, %v6305
      %v6307 = vpop.f32.mrf.mxu0
      %v6308 = vpop.f32.mrf.mxu0
      %v6309 = vpop.f32.mrf.mxu0
      %6310 = vdwg.mxu0
      %v6311 = vtanh.pop %v6306
      %v6312 = vld [vmem:[%s18] sm:$0x1]
      %v6313 = vmul.f32 %v6311, %v6312
      %vm6314 = vcmask 1040384
      %v6315 = vsel %vm6314, %v6313, 0.0
      %6316 = vadd.xlane.f32.xlu0 %v6315
      %v6317 = vpop.xlane.xlu0 %6316
      %v6318 = vld [vmem:[#allocation2] sm:$0x1]
      %v6319 = vadd.f32 %v6317, %v6318
      %vm6320 = vcmask 0
      %6321 = vst.msk [vmem:[%s638] sm:$0x1] %vm6320, %v6319
      %p6322 = scmp.lt.s32.totalorder %s33, 1
      %s6323 = scalar_select %p6322, %s33, 1
      %s6324 = scalar_lea.vmem %s20, %s6323
      // Predicated region
      $region101: #{roberta_regressor_forward.1} parent=99 // pred_check
        %p6325 = pneg %p481
      $region102: #{roberta_regressor_forward.1} parent=99 // pred_check_branch
        %6327 = sbr.rel (%p6325) target = $region104
      $region103: #{roberta_regressor_forward.1} parent=99 // pred_region
        _
      $region104: #{roberta_regressor_forward.1} parent=99 // pred_fallthru
        _
    $region100: #{roberta_regressor_forward.1} parent=5 // pred_fallthru
      _
    %p6328 = scmp.le.s32.totalorder 2, %s28
    // Predicated region
    $region105: #{roberta_regressor_forward.1} parent=5 // pred_check
      %p6329 = pneg %p6328
    $region106: #{roberta_regressor_forward.1} parent=5 // pred_check_branch
      %6331 = sbr.rel (%p6329) target = $region108
    $region107: #{roberta_regressor_forward.1} parent=5 // pred_region
      %s6332 = ssub.s32 %s28, 2
      // Predicated region
      $region109: #{roberta_regressor_forward.1} parent=107 // pred_check
        %p6333 = pneg %p487
      $region110: #{roberta_regressor_forward.1} parent=107 // pred_check_branch
        %6335 = sbr.rel (%p6333) target = $region112
      $region111: #{roberta_regressor_forward.1} parent=107 // pred_region
        %p6336 = scmp.lt.s32.totalorder %s34, 1
        %s6337 = scalar_select %p6336, %s34, 1
        %s6338 = scalar_lea.vmem %s20, %s6337
      $region112: #{roberta_regressor_forward.1} parent=107 // pred_fallthru
        _
    $region108: #{roberta_regressor_forward.1} parent=5 // pred_fallthru
      _
  $region6: #{roberta_regressor_forward.1} parent=0 // loop_footer
    %s32 = sadd.s32 1, %s28
  $region7: #{roberta_regressor_forward.1} parent=0 // loop_footer_branch
    %27 = sbr.rel target = $region3
  $region8: #{roberta_regressor_forward.1} parent=0 // loop_exit
    _

</llo_original>
